<compile_context>
chip_gen: v7x
topology: tpu7x:2x2x1
jax: 0.10.0
libtpu: 0.0.40
codegen_flags: <defaults>
</compile_context>

<pallas_src>
import jax
import jax.numpy as jnp
from jax import lax
from jax.experimental import pallas as pl
from jax.experimental.pallas import tpu as pltpu


def _round_up(a, b):
    return (a + b - 1) // b * b


def _vmem_limit_bytes():
    # Generation-aware VMEM budget: ~3/4 of per-core physical VMEM
    # (~96 MiB on v5e/v6e's 128 MiB, ~48 MiB on v7x's 64 MiB).
    try:
        cap = getattr(pltpu.get_tpu_info(), "vmem_capacity_bytes", None)
        if cap:
            return min(int(cap) * 3 // 4, 100 * 1024 * 1024)
    except Exception:
        pass
    return 48 * 1024 * 1024


# ----------------------------------------------------------------------------
# Fused UNetBlock kernel factory
# ----------------------------------------------------------------------------
def _make_unet_block_kernel(TH, H, W, Wc1, Wc2, Cin, C1, C2, Cu, upsample):
    rows1 = (TH + 2) * Wc1          # conv1 rows incl. the 1-px halo conv2 needs
    rows2 = TH * Wc2

    def kernel(x_ref, w1_ref, sb1_ref, w2_ref, sb2_ref, *rest):
        if upsample:
            wu_ref, bu_ref, out_ref, col1_ref, h1_ref, col2_ref = rest
        else:
            out_ref, col1_ref, h1_ref, col2_ref = rest

        i = pl.program_id(1)
        row0 = i * TH                     # tile start row (padded output coords)
        if TH % 8 == 0:
            row0 = pl.multiple_of(row0, 8)

        # ---- conv1 + BN + ReLU: slab-write im2col -> single MXU matmul ------
        for k in range(9):
            ky, kx = divmod(k, 3)
            col1_ref[:, :, k * Cin:(k + 1) * Cin] = (
                x_ref[0, pl.ds(row0 + ky, TH + 2), pl.ds(kx, Wc1), :])
        c1 = col1_ref[...].reshape(rows1, 9 * Cin)        # free: Wc1 % 8 == 0
        z1 = jnp.dot(c1, w1_ref[...], preferred_element_type=jnp.float32)
        y1 = jnp.maximum(z1 * sb1_ref[0:1, :] + sb1_ref[1:2, :], 0.0)
        y1 = y1.reshape(TH + 2, Wc1, C1)                  # free split

        # conv2 must see zero padding of conv1's *output*: zero every position
        # that lies outside the original image with one select (no edge stores).
        gr = lax.broadcasted_iota(jnp.int32, (TH + 2, Wc1, C1), 0) + row0
        gc = lax.broadcasted_iota(jnp.int32, (TH + 2, Wc1, C1), 1)
        keep = (gr >= 1) & (gr <= H) & (gc >= 1) & (gc <= W)
        h1_ref[...] = jnp.where(keep, y1, 0.0).astype(h1_ref.dtype)

        # ---- conv2 + BN + ReLU: slab-write im2col -> single MXU matmul ------
        for k in range(9):
            ky, kx = divmod(k, 3)
            col2_ref[:, :, k * C1:(k + 1) * C1] = (
                h1_ref[pl.ds(ky, TH), pl.ds(kx, Wc2), :])
        c2 = col2_ref[...].reshape(rows2, 9 * C1)          # free: Wc2 % 8 == 0
        z2 = jnp.dot(c2, w2_ref[...], preferred_element_type=jnp.float32)
        y2 = jnp.maximum(z2 * sb2_ref[0:1, :] + sb2_ref[1:2, :], 0.0)

        if upsample:
            # ConvTranspose2d(k=2, s=2): ONE fused matmul over all 4 taps;
            # pixel shuffle realized by the (.., H, 2, W, 2*Cu) store layout.
            # (For realistic Cu >= 64 the minor store dim 2*Cu >= 128 is
            #  already lane-dense; merging (W, 2*Cu) for tiny Cu would need an
            #  in-register lane relayout and is not done here.)
            h2 = y2.astype(jnp.bfloat16)
            yu = jnp.dot(h2, wu_ref[...], preferred_element_type=jnp.float32)
            yu = (yu + bu_ref[...]).reshape(TH, Wc2, 4 * Cu)   # free split
            ye = yu[:, :W, 0:2 * Cu]          # ky = 0 rows
            yo = yu[:, :W, 2 * Cu:4 * Cu]     # ky = 1 rows
            out_ref[0:1, :, 0:1, :, :] = (
                ye.reshape(1, TH, 1, W, 2 * Cu).astype(out_ref.dtype))
            out_ref[0:1, :, 1:2, :, :] = (
                yo.reshape(1, TH, 1, W, 2 * Cu).astype(out_ref.dtype))
        else:
            y2r = y2.reshape(TH, Wc2, C2)[:, :W, :]
            out_ref[...] = y2r.reshape(1, TH, W, C2).astype(out_ref.dtype)

    return kernel


# ----------------------------------------------------------------------------
# UNetBlock forward (NCHW in / NCHW out, like PyTorch)
# ----------------------------------------------------------------------------
def unet_block_forward(x_nchw, p, upsample=True, skip_nchw=None, row_tile=32,
                       eps=1e-5):
    N, Cin, H, W = x_nchw.shape
    C1 = p["w1"].shape[0]
    C2 = p["w2"].shape[0]

    # Largest row tile that divides H (keeps halo recompute low, grid >= N).
    TH = min(row_tile, H)
    while H % TH:
        TH -= 1
    n_tiles = H // TH

    # Compute widths padded to multiples of 8 so all kernel reshapes are free.
    Wc2 = _round_up(W, 8)            # conv2 / convT compute width
    Wc1 = _round_up(Wc2 + 2, 8)      # conv1 compute width (conv2 halo incl.)
    Wp = Wc1 + 2                     # padded-input width the kernel reads

    # NCHW -> NHWC, bf16, zero border (2-px top/left, enough on right/bottom).
    x = jnp.transpose(x_nchw, (0, 2, 3, 1)).astype(jnp.bfloat16)
    xpad = jnp.pad(x, ((0, 0), (2, 2), (2, Wp - W - 2), (0, 0)))

    # Fold conv bias + eval-mode BatchNorm into per-channel f32 scale/shift.
    def fold_bn(b, g, be, m, v):
        scale = (g / jnp.sqrt(v + eps)).astype(jnp.float32)
        shift = ((b - m) * scale + be).astype(jnp.float32)
        return jnp.stack([scale, shift], axis=0)

    sb1 = fold_bn(p["b1"], p["g1"], p["be1"], p["m1"], p["v1"])
    sb2 = fold_bn(p["b2"], p["g2"], p["be2"], p["m2"], p["v2"])
    # (Cout, Cin, 3, 3) -> im2col weight (9*Cin, Cout), tap index k = ky*3 + kx.
    w1c = jnp.transpose(p["w1"], (2, 3, 1, 0)).reshape(9 * Cin, C1)
    w1c = w1c.astype(jnp.bfloat16)
    w2c = jnp.transpose(p["w2"], (2, 3, 1, 0)).reshape(9 * C1, C2)
    w2c = w2c.astype(jnp.bfloat16)

    inputs = [xpad, w1c, sb1, w2c, sb2]
    # (pipeline_mode=pl.Buffered(1) on these constant-index specs would drop
    #  their redundant second buffer; omitted for broad compatibility.)
    in_specs = [
        pl.BlockSpec((1, H + 4, Wp, Cin), lambda n, i: (n, 0, 0, 0)),
        pl.BlockSpec((9 * Cin, C1), lambda n, i: (0, 0)),
        pl.BlockSpec((2, C1), lambda n, i: (0, 0)),
        pl.BlockSpec((9 * C1, C2), lambda n, i: (0, 0)),
        pl.BlockSpec((2, C2), lambda n, i: (0, 0)),
    ]

    if upsample:
        Cu = p["wu"].shape[1]
        # (C2, Cu, 2, 2) -> fused wuf[ci, ky*2*Cu + kx*Cu + co]
        wuf = jnp.transpose(p["wu"], (0, 2, 3, 1)).reshape(C2, 4 * Cu)
        wuf = wuf.astype(jnp.bfloat16)
        buf = jnp.tile(p["bu"].astype(jnp.float32), 4).reshape(1, 4 * Cu)
        inputs += [wuf, buf]
        in_specs += [
            pl.BlockSpec((C2, 4 * Cu), lambda n, i: (0, 0)),
            pl.BlockSpec((1, 4 * Cu), lambda n, i: (0, 0)),
        ]
        out_shape = jax.ShapeDtypeStruct((N, H, 2, W, 2 * Cu), jnp.bfloat16)
        out_spec = pl.BlockSpec((1, TH, 2, W, 2 * Cu),
                                lambda n, i: (n, i, 0, 0, 0))
    else:
        Cu = C2
        out_shape = jax.ShapeDtypeStruct((N, H, W, C2), jnp.bfloat16)
        out_spec = pl.BlockSpec((1, TH, W, C2), lambda n, i: (n, i, 0, 0))

    kernel = _make_unet_block_kernel(TH, H, W, Wc1, Wc2, Cin, C1, C2, Cu,
                                     upsample)

    y = pl.pallas_call(
        kernel,
        out_shape=out_shape,
        grid=(N, n_tiles),
        in_specs=in_specs,
        out_specs=out_spec,
        scratch_shapes=[
            pltpu.VMEM((TH + 2, Wc1, 9 * Cin), jnp.bfloat16),   # im2col conv1
            pltpu.VMEM((TH + 2, Wc1, C1), jnp.bfloat16),        # conv1 + halo
            pltpu.VMEM((TH, Wc2, 9 * C1), jnp.bfloat16),        # im2col conv2
        ],
        compiler_params=pltpu.CompilerParams(
            dimension_semantics=("parallel", "parallel"),
            vmem_limit_bytes=_vmem_limit_bytes()),
    )(*inputs)

    if upsample:
        # Free reshape (merges adjacent dims): (N,H,2,W,2*Cu) -> (N,2H,2W,Cu).
        y = y.reshape(N, 2 * H, 2 * W, Cu)
    # Epilogue: transpose in bf16, cast to f32 last; skip is already NCHW so it
    # is never transposed — concat happens directly in NCHW.
    y_nchw = jnp.transpose(y, (0, 3, 1, 2)).astype(jnp.float32)
    if skip_nchw is not None:
        y_nchw = jnp.concatenate([y_nchw, skip_nchw.astype(jnp.float32)],
                                 axis=1)                # torch.cat(dim=1)
    return y_nchw


# ----------------------------------------------------------------------------
# Pure-JAX reference (independent of the kernel) for a correctness check.
# It mirrors the kernel's bf16 rounding of MXU inputs / stored activations.
# ----------------------------------------------------------------------------
def _ref_forward(x_nchw, p, upsample, skip_nchw, eps=1e-5):
    f32 = jnp.float32

    def b16(t):
        return t.astype(jnp.bfloat16).astype(f32)

    x = b16(jnp.transpose(x_nchw, (0, 2, 3, 1)))

    def cbr(x, w, b, g, be, m, v):
        wh = jnp.transpose(b16(w), (2, 3, 1, 0))
        z = jax.lax.conv_general_dilated(
            x, wh, (1, 1), ((1, 1), (1, 1)),
            dimension_numbers=("NHWC", "HWIO", "NHWC")) + b
        z = (z - m) / jnp.sqrt(v + eps) * g + be
        return b16(jnp.maximum(z, 0.0))

    x = cbr(x, p["w1"], p["b1"], p["g1"], p["be1"], p["m1"], p["v1"])
    x = cbr(x, p["w2"], p["b2"], p["g2"], p["be2"], p["m2"], p["v2"])
    if upsample:
        N, H, W, _ = x.shape
        Cu = p["wu"].shape[1]
        y = jnp.einsum("nijc,cokl->nikjlo", x, b16(p["wu"]))
        x = b16(y.reshape(N, 2 * H, 2 * W, Cu) + p["bu"])
    if skip_nchw is not None:
        skip = jnp.transpose(skip_nchw, (0, 2, 3, 1)).astype(f32)
        x = jnp.concatenate([x, skip], axis=-1)
    return jnp.transpose(x, (0, 3, 1, 2))


if __name__ == "__main__":
    N, Cin, Cout, H, W = 2, 4, 8, 16, 16
    key = jax.random.PRNGKey(0)
    keys = jax.random.split(key, 16)

    def nrm(k, shape, s=0.1):
        return jax.random.normal(k, shape, jnp.float32) * s

    # Deterministic synthetic parameters (shapes follow the PyTorch module).
    params = dict(
        w1=nrm(keys[0], (Cout, Cin, 3, 3)), b1=nrm(keys[1], (Cout,)),
        g1=1.0 + nrm(keys[2], (Cout,)),     be1=nrm(keys[3], (Cout,)),
        m1=nrm(keys[4], (Cout,)),
        v1=jax.random.uniform(keys[5], (Cout,), jnp.float32, 0.5, 1.5),
        w2=nrm(keys[6], (Cout, Cout, 3, 3)), b2=nrm(keys[7], (Cout,)),
        g2=1.0 + nrm(keys[8], (Cout,)),      be2=nrm(keys[9], (Cout,)),
        m2=nrm(keys[10], (Cout,)),
        v2=jax.random.uniform(keys[11], (Cout,), jnp.float32, 0.5, 1.5),
        wu=nrm(keys[12], (Cout, Cout, 2, 2)), bu=nrm(keys[13], (Cout,)),
    )

    x = jax.random.normal(keys[14], (N, Cin, H, W), jnp.float32)        # NCHW
    skip = jax.random.normal(keys[15], (N, Cin, 2 * H, 2 * W), jnp.float32)

    # Path 1: upsample + skip, row_tile=8 -> 2 row tiles (exercises halos/mask).
    out = jax.block_until_ready(
        unet_block_forward(x, params, upsample=True, skip_nchw=skip, row_tile=8))
    ref = _ref_forward(x, params, True, skip)
    assert out.shape == (N, Cout + Cin, 2 * H, 2 * W), out.shape
    err = float(jnp.max(jnp.abs(out - ref)))
    assert err < 5e-3, f"upsample+skip path max|err|={err}"

    # Path 2: upsample, no skip, default row tile (single tile per image).
    out2 = jax.block_until_ready(
        unet_block_forward(x, params, upsample=True, skip_nchw=None))
    ref2 = _ref_forward(x, params, True, None)
    assert out2.shape == (N, Cout, 2 * H, 2 * W), out2.shape
    err2 = float(jnp.max(jnp.abs(out2 - ref2)))
    assert err2 < 5e-3, f"upsample path max|err|={err2}"

    # Path 3: no upsample, no skip.
    out3 = jax.block_until_ready(
        unet_block_forward(x, params, upsample=False, skip_nchw=None, row_tile=8))
    ref3 = _ref_forward(x, params, False, None)
    assert out3.shape == (N, Cout, H, W), out3.shape
    err3 = float(jnp.max(jnp.abs(out3 - ref3)))
    assert err3 < 5e-3, f"plain path max|err|={err3}"

    print("KERNEL_OK")
</pallas_src>

<mosaic_0001>
module attributes {stable_mosaic.version = 11 : i64} {
  func.func @kernel(%arg0: i32, %arg1: i32, %arg2: memref<1x20x26x4xbf16, #tpu.memory_space<vmem>>, %arg3: memref<36x8xbf16, #tpu.memory_space<vmem>>, %arg4: memref<2x8xf32, #tpu.memory_space<vmem>>, %arg5: memref<72x8xbf16, #tpu.memory_space<vmem>>, %arg6: memref<2x8xf32, #tpu.memory_space<vmem>>, %arg7: memref<8x32xbf16, #tpu.memory_space<vmem>>, %arg8: memref<1x32xf32, #tpu.memory_space<vmem>>, %arg9: memref<1x8x2x16x16xbf16, #tpu.memory_space<vmem>>, %arg10: memref<10x24x36xbf16, #tpu.memory_space<vmem>>, %arg11: memref<10x24x8xbf16, #tpu.memory_space<vmem>>, %arg12: memref<8x16x72xbf16, #tpu.memory_space<vmem>>) attributes {dimension_semantics = [#tpu.dimension_semantics<parallel>, #tpu.dimension_semantics<parallel>], iteration_bounds = array<i64: 2, 2>, scalar_prefetch = 0 : i64, scratch_operands = 3 : i64, tpu.core_type = #tpu.core_type<tc>, window_params = [{transform_indices = @transform_0, window_bounds = array<i64: 1, 20, 26, 4>}, {pipeline_mode = #tpu.pipeline_mode<synchronous>, transform_indices = @transform_1, window_bounds = array<i64: 36, 8>}, {pipeline_mode = #tpu.pipeline_mode<synchronous>, transform_indices = @transform_2, window_bounds = array<i64: 2, 8>}, {pipeline_mode = #tpu.pipeline_mode<synchronous>, transform_indices = @transform_3, window_bounds = array<i64: 72, 8>}, {pipeline_mode = #tpu.pipeline_mode<synchronous>, transform_indices = @transform_4, window_bounds = array<i64: 2, 8>}, {pipeline_mode = #tpu.pipeline_mode<synchronous>, transform_indices = @transform_5, window_bounds = array<i64: 8, 32>}, {pipeline_mode = #tpu.pipeline_mode<synchronous>, transform_indices = @transform_6, window_bounds = array<i64: 1, 32>}, {transform_indices = @transform_7, window_bounds = array<i64: 1, 8, 2, 16, 16>}]} {
    %c8_i32 = arith.constant 8 : i32
    %0 = arith.muli %arg1, %c8_i32 : i32
    %1 = tpu.assume_multiple %0, 8 : i32
    %c0_i32 = arith.constant 0 : i32
    %2 = arith.addi %1, %c0_i32 : i32
    %c0 = arith.constant 0 : index
    %3 = arith.index_cast %2 : i32 to index
    %c0_0 = arith.constant 0 : index
    %c0_1 = arith.constant 0 : index
    %4 = vector.load %arg2[%c0, %3, %c0_0, %c0_1] : memref<1x20x26x4xbf16, #tpu.memory_space<vmem>>, vector<1x10x24x4xbf16>
    %5 = vector.shape_cast %4 : vector<1x10x24x4xbf16> to vector<10x24x4xbf16>
    %c0_2 = arith.constant 0 : index
    %c0_3 = arith.constant 0 : index
    %c0_4 = arith.constant 0 : index
    %6 = vector.load %arg10[%c0_2, %c0_3, %c0_4] : memref<10x24x36xbf16, #tpu.memory_space<vmem>>, vector<10x24x4xbf16>
    tpu.vector_store %arg10[%c0_2, %c0_3, %c0_4], %5 {strides = array<i32>} : memref<10x24x36xbf16, #tpu.memory_space<vmem>>, vector<10x24x4xbf16>,
    %c0_i32_5 = arith.constant 0 : i32
    %7 = arith.addi %1, %c0_i32_5 : i32
    %c0_6 = arith.constant 0 : index
    %8 = arith.index_cast %7 : i32 to index
    %c1 = arith.constant 1 : index
    %c0_7 = arith.constant 0 : index
    %9 = vector.load %arg2[%c0_6, %8, %c1, %c0_7] : memref<1x20x26x4xbf16, #tpu.memory_space<vmem>>, vector<1x10x24x4xbf16>
    %10 = vector.shape_cast %9 : vector<1x10x24x4xbf16> to vector<10x24x4xbf16>
    %c0_8 = arith.constant 0 : index
    %c0_9 = arith.constant 0 : index
    %c4 = arith.constant 4 : index
    %11 = vector.load %arg10[%c0_8, %c0_9, %c4] : memref<10x24x36xbf16, #tpu.memory_space<vmem>>, vector<10x24x4xbf16>
    tpu.vector_store %arg10[%c0_8, %c0_9, %c4], %10 {strides = array<i32>} : memref<10x24x36xbf16, #tpu.memory_space<vmem>>, vector<10x24x4xbf16>,
    %c0_i32_10 = arith.constant 0 : i32
    %12 = arith.addi %1, %c0_i32_10 : i32
    %c0_11 = arith.constant 0 : index
    %13 = arith.index_cast %12 : i32 to index
    %c2 = arith.constant 2 : index
    %c0_12 = arith.constant 0 : index
    %14 = vector.load %arg2[%c0_11, %13, %c2, %c0_12] : memref<1x20x26x4xbf16, #tpu.memory_space<vmem>>, vector<1x10x24x4xbf16>
    %15 = vector.shape_cast %14 : vector<1x10x24x4xbf16> to vector<10x24x4xbf16>
    %c0_13 = arith.constant 0 : index
    %c0_14 = arith.constant 0 : index
    %c8 = arith.constant 8 : index
    %16 = vector.load %arg10[%c0_13, %c0_14, %c8] : memref<10x24x36xbf16, #tpu.memory_space<vmem>>, vector<10x24x4xbf16>
    tpu.vector_store %arg10[%c0_13, %c0_14, %c8], %15 {strides = array<i32>} : memref<10x24x36xbf16, #tpu.memory_space<vmem>>, vector<10x24x4xbf16>,
    %c1_i32 = arith.constant 1 : i32
    %17 = arith.addi %1, %c1_i32 : i32
    %c0_15 = arith.constant 0 : index
    %18 = arith.index_cast %17 : i32 to index
    %c0_16 = arith.constant 0 : index
    %c0_17 = arith.constant 0 : index
    %19 = vector.load %arg2[%c0_15, %18, %c0_16, %c0_17] : memref<1x20x26x4xbf16, #tpu.memory_space<vmem>>, vector<1x10x24x4xbf16>
    %20 = vector.shape_cast %19 : vector<1x10x24x4xbf16> to vector<10x24x4xbf16>
    %c0_18 = arith.constant 0 : index
    %c0_19 = arith.constant 0 : index
    %c12 = arith.constant 12 : index
    %21 = vector.load %arg10[%c0_18, %c0_19, %c12] : memref<10x24x36xbf16, #tpu.memory_space<vmem>>, vector<10x24x4xbf16>
    tpu.vector_store %arg10[%c0_18, %c0_19, %c12], %20 {strides = array<i32>} : memref<10x24x36xbf16, #tpu.memory_space<vmem>>, vector<10x24x4xbf16>,
    %c1_i32_20 = arith.constant 1 : i32
    %22 = arith.addi %1, %c1_i32_20 : i32
    %c0_21 = arith.constant 0 : index
    %23 = arith.index_cast %22 : i32 to index
    %c1_22 = arith.constant 1 : index
    %c0_23 = arith.constant 0 : index
    %24 = vector.load %arg2[%c0_21, %23, %c1_22, %c0_23] : memref<1x20x26x4xbf16, #tpu.memory_space<vmem>>, vector<1x10x24x4xbf16>
    %25 = vector.shape_cast %24 : vector<1x10x24x4xbf16> to vector<10x24x4xbf16>
    %c0_24 = arith.constant 0 : index
    %c0_25 = arith.constant 0 : index
    %c16 = arith.constant 16 : index
    %26 = vector.load %arg10[%c0_24, %c0_25, %c16] : memref<10x24x36xbf16, #tpu.memory_space<vmem>>, vector<10x24x4xbf16>
    tpu.vector_store %arg10[%c0_24, %c0_25, %c16], %25 {strides = array<i32>} : memref<10x24x36xbf16, #tpu.memory_space<vmem>>, vector<10x24x4xbf16>,
    %c1_i32_26 = arith.constant 1 : i32
    %27 = arith.addi %1, %c1_i32_26 : i32
    %c0_27 = arith.constant 0 : index
    %28 = arith.index_cast %27 : i32 to index
    %c2_28 = arith.constant 2 : index
    %c0_29 = arith.constant 0 : index
    %29 = vector.load %arg2[%c0_27, %28, %c2_28, %c0_29] : memref<1x20x26x4xbf16, #tpu.memory_space<vmem>>, vector<1x10x24x4xbf16>
    %30 = vector.shape_cast %29 : vector<1x10x24x4xbf16> to vector<10x24x4xbf16>
    %c0_30 = arith.constant 0 : index
    %c0_31 = arith.constant 0 : index
    %c20 = arith.constant 20 : index
    %31 = vector.load %arg10[%c0_30, %c0_31, %c20] : memref<10x24x36xbf16, #tpu.memory_space<vmem>>, vector<10x24x4xbf16>
    tpu.vector_store %arg10[%c0_30, %c0_31, %c20], %30 {strides = array<i32>} : memref<10x24x36xbf16, #tpu.memory_space<vmem>>, vector<10x24x4xbf16>,
    %c2_i32 = arith.constant 2 : i32
    %32 = arith.addi %1, %c2_i32 : i32
    %c0_32 = arith.constant 0 : index
    %33 = arith.index_cast %32 : i32 to index
    %c0_33 = arith.constant 0 : index
    %c0_34 = arith.constant 0 : index
    %34 = vector.load %arg2[%c0_32, %33, %c0_33, %c0_34] : memref<1x20x26x4xbf16, #tpu.memory_space<vmem>>, vector<1x10x24x4xbf16>
    %35 = vector.shape_cast %34 : vector<1x10x24x4xbf16> to vector<10x24x4xbf16>
    %c0_35 = arith.constant 0 : index
    %c0_36 = arith.constant 0 : index
    %c24 = arith.constant 24 : index
    %36 = vector.load %arg10[%c0_35, %c0_36, %c24] : memref<10x24x36xbf16, #tpu.memory_space<vmem>>, vector<10x24x4xbf16>
    tpu.vector_store %arg10[%c0_35, %c0_36, %c24], %35 {strides = array<i32>} : memref<10x24x36xbf16, #tpu.memory_space<vmem>>, vector<10x24x4xbf16>,
    %c2_i32_37 = arith.constant 2 : i32
    %37 = arith.addi %1, %c2_i32_37 : i32
    %c0_38 = arith.constant 0 : index
    %38 = arith.index_cast %37 : i32 to index
    %c1_39 = arith.constant 1 : index
    %c0_40 = arith.constant 0 : index
    %39 = vector.load %arg2[%c0_38, %38, %c1_39, %c0_40] : memref<1x20x26x4xbf16, #tpu.memory_space<vmem>>, vector<1x10x24x4xbf16>
    %40 = vector.shape_cast %39 : vector<1x10x24x4xbf16> to vector<10x24x4xbf16>
    %c0_41 = arith.constant 0 : index
    %c0_42 = arith.constant 0 : index
    %c28 = arith.constant 28 : index
    %41 = vector.load %arg10[%c0_41, %c0_42, %c28] : memref<10x24x36xbf16, #tpu.memory_space<vmem>>, vector<10x24x4xbf16>
    tpu.vector_store %arg10[%c0_41, %c0_42, %c28], %40 {strides = array<i32>} : memref<10x24x36xbf16, #tpu.memory_space<vmem>>, vector<10x24x4xbf16>,
    %c2_i32_43 = arith.constant 2 : i32
    %42 = arith.addi %1, %c2_i32_43 : i32
    %c0_44 = arith.constant 0 : index
    %43 = arith.index_cast %42 : i32 to index
    %c2_45 = arith.constant 2 : index
    %c0_46 = arith.constant 0 : index
    %44 = vector.load %arg2[%c0_44, %43, %c2_45, %c0_46] : memref<1x20x26x4xbf16, #tpu.memory_space<vmem>>, vector<1x10x24x4xbf16>
    %45 = vector.shape_cast %44 : vector<1x10x24x4xbf16> to vector<10x24x4xbf16>
    %c0_47 = arith.constant 0 : index
    %c0_48 = arith.constant 0 : index
    %c32 = arith.constant 32 : index
    %46 = vector.load %arg10[%c0_47, %c0_48, %c32] : memref<10x24x36xbf16, #tpu.memory_space<vmem>>, vector<10x24x4xbf16>
    tpu.vector_store %arg10[%c0_47, %c0_48, %c32], %45 {strides = array<i32>} : memref<10x24x36xbf16, #tpu.memory_space<vmem>>, vector<10x24x4xbf16>,
    %c0_49 = arith.constant 0 : index
    %c0_50 = arith.constant 0 : index
    %c0_51 = arith.constant 0 : index
    %47 = vector.load %arg10[%c0_49, %c0_50, %c0_51] : memref<10x24x36xbf16, #tpu.memory_space<vmem>>, vector<10x24x36xbf16>
    %48 = vector.shape_cast %47 : vector<10x24x36xbf16> to vector<240x36xbf16>
    %c0_52 = arith.constant 0 : index
    %c0_53 = arith.constant 0 : index
    %49 = vector.load %arg3[%c0_52, %c0_53] : memref<36x8xbf16, #tpu.memory_space<vmem>>, vector<36x8xbf16>
    %cst = arith.constant dense<0.000000e+00> : vector<240x8xf32>
    %50 = tpu.matmul %48, %49, %cst {dimension_numbers = #tpu.dot_dimension_numbers<[1], [0], [0], [1], [0, 0, 1, 1], [], []>} : vector<240x36xbf16>, vector<36x8xbf16>, vector<240x8xf32> -> vector<240x8xf32>
    %c0_54 = arith.constant 0 : index
    %c0_55 = arith.constant 0 : index
    %51 = vector.load %arg4[%c0_54, %c0_55] : memref<2x8xf32, #tpu.memory_space<vmem>>, vector<1x8xf32>
    %52 = vector.broadcast %51 : vector<1x8xf32> to vector<240x8xf32>
    %53 = arith.mulf %50, %52 : vector<240x8xf32>
    %c1_56 = arith.constant 1 : index
    %c0_57 = arith.constant 0 : index
    %54 = vector.load %arg4[%c1_56, %c0_57] : memref<2x8xf32, #tpu.memory_space<vmem>>, vector<1x8xf32>
    %55 = vector.broadcast %54 : vector<1x8xf32> to vector<240x8xf32>
    %56 = arith.addf %53, %55 : vector<240x8xf32>
    %cst_58 = arith.constant 0.000000e+00 : f32
    %57 = vector.broadcast %cst_58 : f32 to vector<240x8xf32>
    %58 = arith.maximumf %56, %57 : vector<240x8xf32>
    %59 = vector.shape_cast %58 : vector<240x8xf32> to vector<10x24x8xf32>
    %60 = tpu.iota {dimensions = array<i32: 0>} : vector<10x24x8xi32>
    %61 = vector.broadcast %1 : i32 to vector<10x24x8xi32>
    %62 = arith.addi %60, %61 : vector<10x24x8xi32>
    %63 = tpu.iota {dimensions = array<i32: 1>} : vector<10x24x8xi32>
    %c1_i32_59 = arith.constant 1 : i32
    %64 = vector.broadcast %c1_i32_59 : i32 to vector<10x24x8xi32>
    %65 = arith.cmpi sge, %62, %64 : vector<10x24x8xi32>
    %c16_i32 = arith.constant 16 : i32
    %66 = vector.broadcast %c16_i32 : i32 to vector<10x24x8xi32>
    %67 = arith.cmpi sle, %62, %66 : vector<10x24x8xi32>
    %68 = arith.andi %65, %67 : vector<10x24x8xi1>
    %c1_i32_60 = arith.constant 1 : i32
    %69 = vector.broadcast %c1_i32_60 : i32 to vector<10x24x8xi32>
    %70 = arith.cmpi sge, %63, %69 : vector<10x24x8xi32>
    %71 = arith.andi %68, %70 : vector<10x24x8xi1>
    %c16_i32_61 = arith.constant 16 : i32
    %72 = vector.broadcast %c16_i32_61 : i32 to vector<10x24x8xi32>
    %73 = arith.cmpi sle, %63, %72 : vector<10x24x8xi32>
    %74 = arith.andi %71, %73 : vector<10x24x8xi1>
    %cst_62 = arith.constant 0.000000e+00 : f32
    %75 = vector.broadcast %cst_62 : f32 to vector<10x24x8xf32>
    %76 = arith.select %74, %59, %75 : vector<10x24x8xi1>, vector<10x24x8xf32>
    %77 = arith.truncf %76 : vector<10x24x8xf32> to vector<10x24x8xbf16>
    %c0_63 = arith.constant 0 : index
    %c0_64 = arith.constant 0 : index
    %c0_65 = arith.constant 0 : index
    %78 = vector.load %arg11[%c0_63, %c0_64, %c0_65] : memref<10x24x8xbf16, #tpu.memory_space<vmem>>, vector<10x24x8xbf16>
    tpu.vector_store %arg11[%c0_63, %c0_64, %c0_65], %77 {strides = array<i32>} : memref<10x24x8xbf16, #tpu.memory_space<vmem>>, vector<10x24x8xbf16>,
    %c0_66 = arith.constant 0 : index
    %c0_67 = arith.constant 0 : index
    %c0_68 = arith.constant 0 : index
    %79 = vector.load %arg11[%c0_66, %c0_67, %c0_68] : memref<10x24x8xbf16, #tpu.memory_space<vmem>>, vector<8x16x8xbf16>
    %c0_69 = arith.constant 0 : index
    %c0_70 = arith.constant 0 : index
    %c0_71 = arith.constant 0 : index
    %80 = vector.load %arg12[%c0_69, %c0_70, %c0_71] : memref<8x16x72xbf16, #tpu.memory_space<vmem>>, vector<8x16x8xbf16>
    tpu.vector_store %arg12[%c0_69, %c0_70, %c0_71], %79 {strides = array<i32>} : memref<8x16x72xbf16, #tpu.memory_space<vmem>>, vector<8x16x8xbf16>,
    %c0_72 = arith.constant 0 : index
    %c1_73 = arith.constant 1 : index
    %c0_74 = arith.constant 0 : index
    %81 = vector.load %arg11[%c0_72, %c1_73, %c0_74] : memref<10x24x8xbf16, #tpu.memory_space<vmem>>, vector<8x16x8xbf16>
    %c0_75 = arith.constant 0 : index
    %c0_76 = arith.constant 0 : index
    %c8_77 = arith.constant 8 : index
    %82 = vector.load %arg12[%c0_75, %c0_76, %c8_77] : memref<8x16x72xbf16, #tpu.memory_space<vmem>>, vector<8x16x8xbf16>
    tpu.vector_store %arg12[%c0_75, %c0_76, %c8_77], %81 {strides = array<i32>} : memref<8x16x72xbf16, #tpu.memory_space<vmem>>, vector<8x16x8xbf16>,
    %c0_78 = arith.constant 0 : index
    %c2_79 = arith.constant 2 : index
    %c0_80 = arith.constant 0 : index
    %83 = vector.load %arg11[%c0_78, %c2_79, %c0_80] : memref<10x24x8xbf16, #tpu.memory_space<vmem>>, vector<8x16x8xbf16>
    %c0_81 = arith.constant 0 : index
    %c0_82 = arith.constant 0 : index
    %c16_83 = arith.constant 16 : index
    %84 = vector.load %arg12[%c0_81, %c0_82, %c16_83] : memref<8x16x72xbf16, #tpu.memory_space<vmem>>, vector<8x16x8xbf16>
    tpu.vector_store %arg12[%c0_81, %c0_82, %c16_83], %83 {strides = array<i32>} : memref<8x16x72xbf16, #tpu.memory_space<vmem>>, vector<8x16x8xbf16>,
    %c1_84 = arith.constant 1 : index
    %c0_85 = arith.constant 0 : index
    %c0_86 = arith.constant 0 : index
    %85 = vector.load %arg11[%c1_84, %c0_85, %c0_86] : memref<10x24x8xbf16, #tpu.memory_space<vmem>>, vector<8x16x8xbf16>
    %c0_87 = arith.constant 0 : index
    %c0_88 = arith.constant 0 : index
    %c24_89 = arith.constant 24 : index
    %86 = vector.load %arg12[%c0_87, %c0_88, %c24_89] : memref<8x16x72xbf16, #tpu.memory_space<vmem>>, vector<8x16x8xbf16>
    tpu.vector_store %arg12[%c0_87, %c0_88, %c24_89], %85 {strides = array<i32>} : memref<8x16x72xbf16, #tpu.memory_space<vmem>>, vector<8x16x8xbf16>,
    %c1_90 = arith.constant 1 : index
    %c1_91 = arith.constant 1 : index
    %c0_92 = arith.constant 0 : index
    %87 = vector.load %arg11[%c1_90, %c1_91, %c0_92] : memref<10x24x8xbf16, #tpu.memory_space<vmem>>, vector<8x16x8xbf16>
    %c0_93 = arith.constant 0 : index
    %c0_94 = arith.constant 0 : index
    %c32_95 = arith.constant 32 : index
    %88 = vector.load %arg12[%c0_93, %c0_94, %c32_95] : memref<8x16x72xbf16, #tpu.memory_space<vmem>>, vector<8x16x8xbf16>
    tpu.vector_store %arg12[%c0_93, %c0_94, %c32_95], %87 {strides = array<i32>} : memref<8x16x72xbf16, #tpu.memory_space<vmem>>, vector<8x16x8xbf16>,
    %c1_96 = arith.constant 1 : index
    %c2_97 = arith.constant 2 : index
    %c0_98 = arith.constant 0 : index
    %89 = vector.load %arg11[%c1_96, %c2_97, %c0_98] : memref<10x24x8xbf16, #tpu.memory_space<vmem>>, vector<8x16x8xbf16>
    %c0_99 = arith.constant 0 : index
    %c0_100 = arith.constant 0 : index
    %c40 = arith.constant 40 : index
    %90 = vector.load %arg12[%c0_99, %c0_100, %c40] : memref<8x16x72xbf16, #tpu.memory_space<vmem>>, vector<8x16x8xbf16>
    tpu.vector_store %arg12[%c0_99, %c0_100, %c40], %89 {strides = array<i32>} : memref<8x16x72xbf16, #tpu.memory_space<vmem>>, vector<8x16x8xbf16>,
    %c2_101 = arith.constant 2 : index
    %c0_102 = arith.constant 0 : index
    %c0_103 = arith.constant 0 : index
    %91 = vector.load %arg11[%c2_101, %c0_102, %c0_103] : memref<10x24x8xbf16, #tpu.memory_space<vmem>>, vector<8x16x8xbf16>
    %c0_104 = arith.constant 0 : index
    %c0_105 = arith.constant 0 : index
    %c48 = arith.constant 48 : index
    %92 = vector.load %arg12[%c0_104, %c0_105, %c48] : memref<8x16x72xbf16, #tpu.memory_space<vmem>>, vector<8x16x8xbf16>
    tpu.vector_store %arg12[%c0_104, %c0_105, %c48], %91 {strides = array<i32>} : memref<8x16x72xbf16, #tpu.memory_space<vmem>>, vector<8x16x8xbf16>,
    %c2_106 = arith.constant 2 : index
    %c1_107 = arith.constant 1 : index
    %c0_108 = arith.constant 0 : index
    %93 = vector.load %arg11[%c2_106, %c1_107, %c0_108] : memref<10x24x8xbf16, #tpu.memory_space<vmem>>, vector<8x16x8xbf16>
    %c0_109 = arith.constant 0 : index
    %c0_110 = arith.constant 0 : index
    %c56 = arith.constant 56 : index
    %94 = vector.load %arg12[%c0_109, %c0_110, %c56] : memref<8x16x72xbf16, #tpu.memory_space<vmem>>, vector<8x16x8xbf16>
    tpu.vector_store %arg12[%c0_109, %c0_110, %c56], %93 {strides = array<i32>} : memref<8x16x72xbf16, #tpu.memory_space<vmem>>, vector<8x16x8xbf16>,
    %c2_111 = arith.constant 2 : index
    %c2_112 = arith.constant 2 : index
    %c0_113 = arith.constant 0 : index
    %95 = vector.load %arg11[%c2_111, %c2_112, %c0_113] : memref<10x24x8xbf16, #tpu.memory_space<vmem>>, vector<8x16x8xbf16>
    %c0_114 = arith.constant 0 : index
    %c0_115 = arith.constant 0 : index
    %c64 = arith.constant 64 : index
    %96 = vector.load %arg12[%c0_114, %c0_115, %c64] : memref<8x16x72xbf16, #tpu.memory_space<vmem>>, vector<8x16x8xbf16>
    tpu.vector_store %arg12[%c0_114, %c0_115, %c64], %95 {strides = array<i32>} : memref<8x16x72xbf16, #tpu.memory_space<vmem>>, vector<8x16x8xbf16>,
    %c0_116 = arith.constant 0 : index
    %c0_117 = arith.constant 0 : index
    %c0_118 = arith.constant 0 : index
    %97 = vector.load %arg12[%c0_116, %c0_117, %c0_118] : memref<8x16x72xbf16, #tpu.memory_space<vmem>>, vector<8x16x72xbf16>
    %98 = vector.shape_cast %97 : vector<8x16x72xbf16> to vector<128x72xbf16>
    %c0_119 = arith.constant 0 : index
    %c0_120 = arith.constant 0 : index
    %99 = vector.load %arg5[%c0_119, %c0_120] : memref<72x8xbf16, #tpu.memory_space<vmem>>, vector<72x8xbf16>
    %cst_121 = arith.constant dense<0.000000e+00> : vector<128x8xf32>
    %100 = tpu.matmul %98, %99, %cst_121 {dimension_numbers = #tpu.dot_dimension_numbers<[1], [0], [0], [1], [0, 0, 1, 1], [], []>} : vector<128x72xbf16>, vector<72x8xbf16>, vector<128x8xf32> -> vector<128x8xf32>
    %c0_122 = arith.constant 0 : index
    %c0_123 = arith.constant 0 : index
    %101 = vector.load %arg6[%c0_122, %c0_123] : memref<2x8xf32, #tpu.memory_space<vmem>>, vector<1x8xf32>
    %102 = vector.broadcast %101 : vector<1x8xf32> to vector<128x8xf32>
    %103 = arith.mulf %100, %102 : vector<128x8xf32>
    %c1_124 = arith.constant 1 : index
    %c0_125 = arith.constant 0 : index
    %104 = vector.load %arg6[%c1_124, %c0_125] : memref<2x8xf32, #tpu.memory_space<vmem>>, vector<1x8xf32>
    %105 = vector.broadcast %104 : vector<1x8xf32> to vector<128x8xf32>
    %106 = arith.addf %103, %105 : vector<128x8xf32>
    %cst_126 = arith.constant 0.000000e+00 : f32
    %107 = vector.broadcast %cst_126 : f32 to vector<128x8xf32>
    %108 = arith.maximumf %106, %107 : vector<128x8xf32>
    %109 = arith.truncf %108 : vector<128x8xf32> to vector<128x8xbf16>
    %c0_127 = arith.constant 0 : index
    %c0_128 = arith.constant 0 : index
    %110 = vector.load %arg7[%c0_127, %c0_128] : memref<8x32xbf16, #tpu.memory_space<vmem>>, vector<8x32xbf16>
    %cst_129 = arith.constant dense<0.000000e+00> : vector<128x32xf32>
    %111 = tpu.matmul %109, %110, %cst_129 {dimension_numbers = #tpu.dot_dimension_numbers<[1], [0], [0], [1], [0, 0, 1, 1], [], []>} : vector<128x8xbf16>, vector<8x32xbf16>, vector<128x32xf32> -> vector<128x32xf32>
    %c0_130 = arith.constant 0 : index
    %c0_131 = arith.constant 0 : index
    %112 = vector.load %arg8[%c0_130, %c0_131] : memref<1x32xf32, #tpu.memory_space<vmem>>, vector<1x32xf32>
    %113 = vector.broadcast %112 : vector<1x32xf32> to vector<128x32xf32>
    %114 = arith.addf %111, %113 : vector<128x32xf32>
    %115 = vector.shape_cast %114 : vector<128x32xf32> to vector<8x16x32xf32>
    %116 = vector.extract_strided_slice %115 {offsets = [0, 0, 0], sizes = [8, 16, 16], strides = [1, 1, 1]} : vector<8x16x32xf32> to vector<8x16x16xf32>
    %117 = vector.extract_strided_slice %115 {offsets = [0, 0, 16], sizes = [8, 16, 16], strides = [1, 1, 1]} : vector<8x16x32xf32> to vector<8x16x16xf32>
    %118 = vector.shape_cast %116 : vector<8x16x16xf32> to vector<1x8x1x16x16xf32>
    %119 = arith.truncf %118 : vector<1x8x1x16x16xf32> to vector<1x8x1x16x16xbf16>
    %c0_132 = arith.constant 0 : index
    %c0_133 = arith.constant 0 : index
    %c0_134 = arith.constant 0 : index
    %c0_135 = arith.constant 0 : index
    %c0_136 = arith.constant 0 : index
    %120 = vector.load %arg9[%c0_132, %c0_133, %c0_134, %c0_135, %c0_136] : memref<1x8x2x16x16xbf16, #tpu.memory_space<vmem>>, vector<1x8x1x16x16xbf16>
    tpu.vector_store %arg9[%c0_132, %c0_133, %c0_134, %c0_135, %c0_136], %119 {strides = array<i32>} : memref<1x8x2x16x16xbf16, #tpu.memory_space<vmem>>, vector<1x8x1x16x16xbf16>,
    %121 = vector.shape_cast %117 : vector<8x16x16xf32> to vector<1x8x1x16x16xf32>
    %122 = arith.truncf %121 : vector<1x8x1x16x16xf32> to vector<1x8x1x16x16xbf16>
    %c0_137 = arith.constant 0 : index
    %c0_138 = arith.constant 0 : index
    %c1_139 = arith.constant 1 : index
    %c0_140 = arith.constant 0 : index
    %c0_141 = arith.constant 0 : index
    %123 = vector.load %arg9[%c0_137, %c0_138, %c1_139, %c0_140, %c0_141] : memref<1x8x2x16x16xbf16, #tpu.memory_space<vmem>>, vector<1x8x1x16x16xbf16>
    tpu.vector_store %arg9[%c0_137, %c0_138, %c1_139, %c0_140, %c0_141], %122 {strides = array<i32>} : memref<1x8x2x16x16xbf16, #tpu.memory_space<vmem>>, vector<1x8x1x16x16xbf16>,
    return
  }
  func.func @transform_0(%arg0: i32, %arg1: i32) -> (i32, i32, i32, i32) {
    %c0_i32 = arith.constant 0 : i32
    %c0_i32_0 = arith.constant 0 : i32
    %c0_i32_1 = arith.constant 0 : i32
    %c0_i32_2 = arith.constant 0 : i32
    return %arg0, %c0_i32, %c0_i32_0, %c0_i32_1 : i32, i32, i32, i32
  }
  func.func @transform_1(%arg0: i32, %arg1: i32) -> (i32, i32) {
    %c0_i32 = arith.constant 0 : i32
    %c0_i32_0 = arith.constant 0 : i32
    %c0_i32_1 = arith.constant 0 : i32
    return %c0_i32, %c0_i32_0 : i32, i32
  }
  func.func @transform_2(%arg0: i32, %arg1: i32) -> (i32, i32) {
    %c0_i32 = arith.constant 0 : i32
    %c0_i32_0 = arith.constant 0 : i32
    %c0_i32_1 = arith.constant 0 : i32
    return %c0_i32, %c0_i32_0 : i32, i32
  }
  func.func @transform_3(%arg0: i32, %arg1: i32) -> (i32, i32) {
    %c0_i32 = arith.constant 0 : i32
    %c0_i32_0 = arith.constant 0 : i32
    %c0_i32_1 = arith.constant 0 : i32
    return %c0_i32, %c0_i32_0 : i32, i32
  }
  func.func @transform_4(%arg0: i32, %arg1: i32) -> (i32, i32) {
    %c0_i32 = arith.constant 0 : i32
    %c0_i32_0 = arith.constant 0 : i32
    %c0_i32_1 = arith.constant 0 : i32
    return %c0_i32, %c0_i32_0 : i32, i32
  }
  func.func @transform_5(%arg0: i32, %arg1: i32) -> (i32, i32) {
    %c0_i32 = arith.constant 0 : i32
    %c0_i32_0 = arith.constant 0 : i32
    %c0_i32_1 = arith.constant 0 : i32
    return %c0_i32, %c0_i32_0 : i32, i32
  }
  func.func @transform_6(%arg0: i32, %arg1: i32) -> (i32, i32) {
    %c0_i32 = arith.constant 0 : i32
    %c0_i32_0 = arith.constant 0 : i32
    %c0_i32_1 = arith.constant 0 : i32
    return %c0_i32, %c0_i32_0 : i32, i32
  }
  func.func @transform_7(%arg0: i32, %arg1: i32) -> (i32, i32, i32, i32, i32) {
    %c0_i32 = arith.constant 0 : i32
    %c0_i32_0 = arith.constant 0 : i32
    %c0_i32_1 = arith.constant 0 : i32
    %c0_i32_2 = arith.constant 0 : i32
    return %arg0, %arg1, %c0_i32, %c0_i32_0, %c0_i32_1 : i32, i32, i32, i32, i32
  }
}

</mosaic_0001>

<llo_original>
// kernel: tpu_custom_call.1
$region0: #{tpu_custom_call.1}
  #allocation0 [shape = 'u32[]', space=smem, size = 0x4, offset = 0x4, fixed_abs, tag = 'smem constant byte address 0x4 - core index']
  #allocation1 [shape = 'u32[144,128]{1,0:T(1,128)}', space=vmem, size = 0x12000, scoped, tag = 'internal scratch']
  #allocation2 [shape = 'bf16[10,24,36]{2,1,0:T(8,128)(2,1)}', space=vmem, size = 0xf000, scoped, tag = 'scratch operand']
  #allocation3 [shape = 'bf16[10,24,8]{2,1,0:T(8,128)(2,1)}', space=vmem, size = 0xf000, scoped, tag = 'scratch operand']
  #allocation4 [shape = 'bf16[8,16,72]{2,1,0:T(16,128)(2,1)}', space=vmem, size = 0x8000, scoped, tag = 'scratch operand']
  %s0 = inlined_call_operand.vmem [shape: bf16[2,20,26,4], index: 0, kind: input, shape index: {}]
  %s1 = inlined_call_operand.vmem [shape: bf16[36,8], index: 1, kind: input, shape index: {}]
  %s2 = inlined_call_operand.vmem [shape: f32[2,8], index: 2, kind: input, shape index: {}]
  %s3 = inlined_call_operand.vmem [shape: bf16[72,8], index: 3, kind: input, shape index: {}]
  %s4 = inlined_call_operand.vmem [shape: f32[2,8], index: 4, kind: input, shape index: {}]
  %s5 = inlined_call_operand.vmem [shape: bf16[8,32], index: 5, kind: input, shape index: {}]
  %s6 = inlined_call_operand.vmem [shape: f32[1,32], index: 6, kind: input, shape index: {}]
  %s7 = inlined_call_operand.hbm [shape: bf16[2,16,2,16,16], index: 7, kind: output, shape index: {}]
  %s8 = sld [smem:[#allocation0]]
  $region61: #{tpu_custom_call.1} parent=0
    _
  %s10 = ssub.s32 1, %s8
  %s11 = scalar_select 0, %s10, %s8
  $region1: #{tpu_custom_call.1} parent=0
    #allocation5 [shape = 'u8[131072]{0}', space=vmem, size = 0x20000, scoped, tag = 'output window, operand 0']
    #allocation6 [shape = 's32[2]{0}', space=sflag, size = 0x8, scoped, tag = 'scoped memory for tpu_custom_call.1']
    %12 = vsyncpa [#allocation6], 0
    %s13 = scalar_lea.sflag [#allocation6], 1
    %14 = vsyncpa %s13, 0
    loop: start=0, step=1, limit=6
    $region2: #{tpu_custom_call.1} parent=1 // loop_pre_header
      _
    $region3: #{tpu_custom_call.1} parent=1 // loop_header
      %s16 = sphi 0, %s20
      %p17 = scmp.ge.s32.totalorder %s16, 6
      %s23 = sphi 0, %s35
      %s24 = sphi 0, %s31
      %s25 = sphi 0, %s23
      %s26 = sphi 0, %s24
      %s27 = sphi 0, %s25
      %s28 = sphi 0, %s26
      %s38 = sphi 0, %s40
      %s41 = sphi 0, %s38
      %s42 = sphi 0, %s41
      %s58 = sphi 0, %s42
      %s62 = sphi 0, %s62
      %s64 = sphi 0, %s62
      %s65 = sphi 0, %s64
      %s79 = sphi 0, %s65
      %s83 = sphi 0, %s83
      %s85 = sphi 0, %s83
      %s86 = sphi 0, %s85
      %s100 = sphi 0, %s86
      %s104 = sphi 0, %s104
      %s106 = sphi 0, %s104
      %s107 = sphi 0, %s106
      %s121 = sphi 0, %s107
      %s125 = sphi 0, %s125
      %s127 = sphi 0, %s125
      %s128 = sphi 0, %s127
      %s142 = sphi 0, %s128
      %s146 = sphi 0, %s146
      %s148 = sphi 0, %s146
      %s149 = sphi 0, %s148
      %s163 = sphi 0, %s149
      %s167 = sphi 0, %s167
      %s169 = sphi 0, %s167
      %s170 = sphi 0, %s169
      %s184 = sphi 0, %s170
      %s192 = sphi 0, %s194
      %s195 = sphi 0, %s192
      %s196 = sphi 0, %s195
      %s212 = sphi 0, %s196
    $region4: #{tpu_custom_call.1} parent=1 // loop_header_branch
      %19 = sbr.rel (%p17) target = $region8
    $region5: #{tpu_custom_call.1} parent=1 // loop_body
      %s21 = ssub.s32 %s16, 1
      %s22 = ssub.s32 %s16, 2
      %s29 = sadd.s32 1, %s24
      %p30 = scmp.ge.s32.totalorder %s29, 2
      %s31 = scalar_select %p30, 0, %s29
      %s32 = sadd.s32 1, %s23
      %s33 = scalar_select %p30, %s32, %s23
      %p34 = scmp.ge.s32.totalorder %s33, 2
      %s35 = scalar_select %p34, 0, %s33
      %s36 = ssub.s32 %s23, %s35
      %p37 = scmp.eq.s32.totalorder %s36, 0
      %s39 = sadd.s32 %s38, 1
      %s40 = scalar_select %p37, %s38, %s39
      %p43 = pneg %p37
      %p44 = scmp.eq.s32.totalorder %s16, 3
      %p45 = por %p43, %p44
      %p46 = scmp.ne.s32.totalorder %s38, %s41
      %p47 = scmp.eq.s32.totalorder %s16, 0
      %p48 = por %p46, %p47
      %p49 = scmp.ne.s32.totalorder %s38, %s41
      %p50 = scmp.eq.s32.totalorder %s21, 3
      %p51 = por %p49, %p50
      %p52 = scmp.ne.s32.totalorder %s41, %s42
      %p53 = scmp.eq.s32.totalorder %s21, 0
      %p54 = por %p52, %p53
      %p55 = scmp.ne.s32.totalorder %s41, %s42
      %p56 = scmp.eq.s32.totalorder %s22, 3
      %p57 = por %p55, %p56
      %p59 = scmp.ne.s32.totalorder %s42, %s58
      %p60 = scmp.eq.s32.totalorder %s22, 0
      %p61 = por %p59, %p60
      %s63 = sadd.s32 %s62, 1
      %p66 = scmp.eq.s32.totalorder %s16, 3
      %p67 = scmp.ne.s32.totalorder %s62, %s64
      %p68 = scmp.eq.s32.totalorder %s16, 0
      %p69 = por %p67, %p68
      %p70 = scmp.ne.s32.totalorder %s62, %s64
      %p71 = scmp.eq.s32.totalorder %s21, 3
      %p72 = por %p70, %p71
      %p73 = scmp.ne.s32.totalorder %s64, %s65
      %p74 = scmp.eq.s32.totalorder %s21, 0
      %p75 = por %p73, %p74
      %p76 = scmp.ne.s32.totalorder %s64, %s65
      %p77 = scmp.eq.s32.totalorder %s22, 3
      %p78 = por %p76, %p77
      %p80 = scmp.ne.s32.totalorder %s65, %s79
      %p81 = scmp.eq.s32.totalorder %s22, 0
      %p82 = por %p80, %p81
      %s84 = sadd.s32 %s83, 1
      %p87 = scmp.eq.s32.totalorder %s16, 3
      %p88 = scmp.ne.s32.totalorder %s83, %s85
      %p89 = scmp.eq.s32.totalorder %s16, 0
      %p90 = por %p88, %p89
      %p91 = scmp.ne.s32.totalorder %s83, %s85
      %p92 = scmp.eq.s32.totalorder %s21, 3
      %p93 = por %p91, %p92
      %p94 = scmp.ne.s32.totalorder %s85, %s86
      %p95 = scmp.eq.s32.totalorder %s21, 0
      %p96 = por %p94, %p95
      %p97 = scmp.ne.s32.totalorder %s85, %s86
      %p98 = scmp.eq.s32.totalorder %s22, 3
      %p99 = por %p97, %p98
      %p101 = scmp.ne.s32.totalorder %s86, %s100
      %p102 = scmp.eq.s32.totalorder %s22, 0
      %p103 = por %p101, %p102
      %s105 = sadd.s32 %s104, 1
      %p108 = scmp.eq.s32.totalorder %s16, 3
      %p109 = scmp.ne.s32.totalorder %s104, %s106
      %p110 = scmp.eq.s32.totalorder %s16, 0
      %p111 = por %p109, %p110
      %p112 = scmp.ne.s32.totalorder %s104, %s106
      %p113 = scmp.eq.s32.totalorder %s21, 3
      %p114 = por %p112, %p113
      %p115 = scmp.ne.s32.totalorder %s106, %s107
      %p116 = scmp.eq.s32.totalorder %s21, 0
      %p117 = por %p115, %p116
      %p118 = scmp.ne.s32.totalorder %s106, %s107
      %p119 = scmp.eq.s32.totalorder %s22, 3
      %p120 = por %p118, %p119
      %p122 = scmp.ne.s32.totalorder %s107, %s121
      %p123 = scmp.eq.s32.totalorder %s22, 0
      %p124 = por %p122, %p123
      %s126 = sadd.s32 %s125, 1
      %p129 = scmp.eq.s32.totalorder %s16, 3
      %p130 = scmp.ne.s32.totalorder %s125, %s127
      %p131 = scmp.eq.s32.totalorder %s16, 0
      %p132 = por %p130, %p131
      %p133 = scmp.ne.s32.totalorder %s125, %s127
      %p134 = scmp.eq.s32.totalorder %s21, 3
      %p135 = por %p133, %p134
      %p136 = scmp.ne.s32.totalorder %s127, %s128
      %p137 = scmp.eq.s32.totalorder %s21, 0
      %p138 = por %p136, %p137
      %p139 = scmp.ne.s32.totalorder %s127, %s128
      %p140 = scmp.eq.s32.totalorder %s22, 3
      %p141 = por %p139, %p140
      %p143 = scmp.ne.s32.totalorder %s128, %s142
      %p144 = scmp.eq.s32.totalorder %s22, 0
      %p145 = por %p143, %p144
      %s147 = sadd.s32 %s146, 1
      %p150 = scmp.eq.s32.totalorder %s16, 3
      %p151 = scmp.ne.s32.totalorder %s146, %s148
      %p152 = scmp.eq.s32.totalorder %s16, 0
      %p153 = por %p151, %p152
      %p154 = scmp.ne.s32.totalorder %s146, %s148
      %p155 = scmp.eq.s32.totalorder %s21, 3
      %p156 = por %p154, %p155
      %p157 = scmp.ne.s32.totalorder %s148, %s149
      %p158 = scmp.eq.s32.totalorder %s21, 0
      %p159 = por %p157, %p158
      %p160 = scmp.ne.s32.totalorder %s148, %s149
      %p161 = scmp.eq.s32.totalorder %s22, 3
      %p162 = por %p160, %p161
      %p164 = scmp.ne.s32.totalorder %s149, %s163
      %p165 = scmp.eq.s32.totalorder %s22, 0
      %p166 = por %p164, %p165
      %s168 = sadd.s32 %s167, 1
      %p171 = scmp.eq.s32.totalorder %s16, 3
      %p172 = scmp.ne.s32.totalorder %s167, %s169
      %p173 = scmp.eq.s32.totalorder %s16, 0
      %p174 = por %p172, %p173
      %p175 = scmp.ne.s32.totalorder %s167, %s169
      %p176 = scmp.eq.s32.totalorder %s21, 3
      %p177 = por %p175, %p176
      %p178 = scmp.ne.s32.totalorder %s169, %s170
      %p179 = scmp.eq.s32.totalorder %s21, 0
      %p180 = por %p178, %p179
      %p181 = scmp.ne.s32.totalorder %s169, %s170
      %p182 = scmp.eq.s32.totalorder %s22, 3
      %p183 = por %p181, %p182
      %p185 = scmp.ne.s32.totalorder %s170, %s184
      %p186 = scmp.eq.s32.totalorder %s22, 0
      %p187 = por %p185, %p186
      %s188 = ssub.s32 %s23, %s35
      %s189 = ssub.s32 %s24, %s31
      %s190 = sor.u32 %s188, %s189
      %p191 = scmp.eq.s32.totalorder %s190, 0
      %s193 = sadd.s32 %s192, 1
      %s194 = scalar_select %p191, %s192, %s193
      %p197 = pneg %p191
      %p198 = scmp.eq.s32.totalorder %s16, 3
      %p199 = por %p197, %p198
      %p200 = scmp.ne.s32.totalorder %s192, %s195
      %p201 = scmp.eq.s32.totalorder %s16, 0
      %p202 = por %p200, %p201
      %p203 = scmp.ne.s32.totalorder %s192, %s195
      %p204 = scmp.eq.s32.totalorder %s21, 3
      %p205 = por %p203, %p204
      %p206 = scmp.ne.s32.totalorder %s195, %s196
      %p207 = scmp.eq.s32.totalorder %s21, 0
      %p208 = por %p206, %p207
      %p209 = scmp.ne.s32.totalorder %s195, %s196
      %p210 = scmp.eq.s32.totalorder %s22, 3
      %p211 = por %p209, %p210
      %p213 = scmp.ne.s32.totalorder %s196, %s212
      %p214 = scmp.eq.s32.totalorder %s22, 0
      %p215 = por %p213, %p214
      %p216 = scmp.le.s32.totalorder 1, %s16
      %p217 = scmp.lt.s32.totalorder %s16, 5
      %p218 = pnand %p216, %p217
      %p219 = pneg %p218
      // Predicated region
      $region9: #{tpu_custom_call.1} parent=5 // pred_check
        _
      $region10: #{tpu_custom_call.1} parent=5 // pred_check_branch
        %221 = sbr.rel (%p218) target = $region12
      $region11: #{tpu_custom_call.1} parent=5 // pred_region
        %s222 = ssub.s32 %s16, 1
        // Predicated region
        $region13: #{tpu_custom_call.1} parent=11 // pred_check
          %p223 = pneg %p75
        $region14: #{tpu_custom_call.1} parent=11 // pred_check_branch
          %225 = sbr.rel (%p223) target = $region16
        $region15: #{tpu_custom_call.1} parent=11 // pred_region
          _
        $region16: #{tpu_custom_call.1} parent=11 // pred_fallthru
          _
        // Predicated region
        $region17: #{tpu_custom_call.1} parent=11 // pred_check
          %p226 = pneg %p96
        $region18: #{tpu_custom_call.1} parent=11 // pred_check_branch
          %228 = sbr.rel (%p226) target = $region20
        $region19: #{tpu_custom_call.1} parent=11 // pred_region
          _
        $region20: #{tpu_custom_call.1} parent=11 // pred_fallthru
          _
        // Predicated region
        $region21: #{tpu_custom_call.1} parent=11 // pred_check
          %p229 = pneg %p117
        $region22: #{tpu_custom_call.1} parent=11 // pred_check_branch
          %231 = sbr.rel (%p229) target = $region24
        $region23: #{tpu_custom_call.1} parent=11 // pred_region
          _
        $region24: #{tpu_custom_call.1} parent=11 // pred_fallthru
          _
        // Predicated region
        $region25: #{tpu_custom_call.1} parent=11 // pred_check
          %p232 = pneg %p138
        $region26: #{tpu_custom_call.1} parent=11 // pred_check_branch
          %234 = sbr.rel (%p232) target = $region28
        $region27: #{tpu_custom_call.1} parent=11 // pred_region
          _
        $region28: #{tpu_custom_call.1} parent=11 // pred_fallthru
          _
        // Predicated region
        $region29: #{tpu_custom_call.1} parent=11 // pred_check
          %p235 = pneg %p159
        $region30: #{tpu_custom_call.1} parent=11 // pred_check_branch
          %237 = sbr.rel (%p235) target = $region32
        $region31: #{tpu_custom_call.1} parent=11 // pred_region
          _
        $region32: #{tpu_custom_call.1} parent=11 // pred_fallthru
          _
        // Predicated region
        $region33: #{tpu_custom_call.1} parent=11 // pred_check
          %p238 = pneg %p180
        $region34: #{tpu_custom_call.1} parent=11 // pred_check_branch
          %240 = sbr.rel (%p238) target = $region36
        $region35: #{tpu_custom_call.1} parent=11 // pred_region
          _
        $region36: #{tpu_custom_call.1} parent=11 // pred_fallthru
          _
      $region12: #{tpu_custom_call.1} parent=5 // pred_fallthru
        _
      %p241 = scmp.lt.s32.totalorder %s16, 4
      // Predicated region
      $region37: #{tpu_custom_call.1} parent=5 // pred_check
        %p242 = pneg %p241
      $region38: #{tpu_custom_call.1} parent=5 // pred_check_branch
        %244 = sbr.rel (%p242) target = $region40
      $region39: #{tpu_custom_call.1} parent=5 // pred_region
        // Predicated region
        $region41: #{tpu_custom_call.1} parent=39 // pred_check
          %p245 = pneg %p48
        $region42: #{tpu_custom_call.1} parent=39 // pred_check_branch
          %247 = sbr.rel (%p245) target = $region44
        $region43: #{tpu_custom_call.1} parent=39 // pred_region
          %p248 = scmp.lt.s32.totalorder %s23, 1
          %s249 = scalar_select %p248, %s23, 1
          %s250 = smul.addr %s249, 80
          %s251 = smul.addr %s250, 4
          %s252 = scalar_lea.vmem %s0, %s251
        $region44: #{tpu_custom_call.1} parent=39 // pred_fallthru
          _
      $region40: #{tpu_custom_call.1} parent=5 // pred_fallthru
        _
      %p253 = scmp.le.s32.totalorder 1, %s16
      %p254 = scmp.lt.s32.totalorder %s16, 5
      %p255 = pnand %p253, %p254
      %p256 = pneg %p255
      // Predicated region
      $region45: #{tpu_custom_call.1} parent=5 // pred_check
        _
      $region46: #{tpu_custom_call.1} parent=5 // pred_check_branch
        %258 = sbr.rel (%p255) target = $region48
      $region47: #{tpu_custom_call.1} parent=5 // pred_region
        %s259 = ssub.s32 %s16, 1
        %p260 = scmp.lt.s32.totalorder %s25, 1
        %s261 = scalar_select %p260, %s25, 1
        %s262 = smul.addr %s261, 80
        %s263 = smul.addr %s262, 4
        %s264 = scalar_lea.vmem %s0, %s263
        %p265 = pneg %p54
        %p266 = pneg %p51
        %p267 = pneg %p75
        %p268 = pneg %p72
        %p269 = pneg %p96
        %p270 = pneg %p93
        %p271 = pneg %p117
        %p272 = pneg %p114
        %p273 = pneg %p138
        %p274 = pneg %p135
        %p275 = pneg %p159
        %p276 = pneg %p156
        %p277 = pneg %p180
        %p278 = pneg %p177
        %p279 = pneg %p208
        %p280 = pneg %p205
        %s281 = sand.u32 %s195, 1
        %s282 = scalar_lea.sflag [#allocation6], %s281
        %s283 = sand.u32 %s195, 1
        %s284 = smul.addr %s283, 128
        %s285 = scalar_lea.vmem [#allocation5], %s284
        %p286 = scmp.lt.s32.totalorder %s25, 1
        %s287 = scalar_select %p286, %s25, 1
        %s288 = smul.addr %s287, 80
        %s289 = smul.addr %s288, 4
        %s290 = scalar_lea.vmem %s0, %s289
        %s291 = smul.u32 8, %s26
        %s293 = smul.u32 %s26, 8
        %s294 = smul.u32 %s293, 4
        %s295 = smul.addr %s294, 4
        %s296 = scalar_lea.vmem %s290, %s295
        %v297 = vld [vmem:[%s296] sm:$0xf]
        %v298 = vld [vmem:[%s296 + $0x4] sm:$0xf]
        %v299 = vld [vmem:[%s296 + $0x8] sm:$0xf]
        %v300 = vld [vmem:[%s296 + $0x10] sm:$0xf]
        %v301 = vld [vmem:[%s296 + $0x14] sm:$0xf]
        %v302 = vld [vmem:[%s296 + $0x18] sm:$0xf]
        %v303 = vld [vmem:[%s296 + $0x20] sm:$0xf]
        %v304 = vld [vmem:[%s296 + $0x24] sm:$0xf]
        %v305 = vld [vmem:[%s296 + $0x28] sm:$0xf]
        %v306 = vld [vmem:[%s296 + $0x30] sm:$0xf]
        %v307 = vld [vmem:[%s296 + $0x34] sm:$0xf]
        %v308 = vld [vmem:[%s296 + $0x38] sm:$0xf]
        %v309 = vld [vmem:[%s296 + $0x40] sm:$0xf]
        %v310 = vld [vmem:[%s296 + $0x44] sm:$0xf]
        %v311 = vld [vmem:[%s296 + $0x48] sm:$0xf]
        %v312 = vld [vmem:[%s296 + $0x50] sm:$0xf]
        %v313 = vld [vmem:[%s296 + $0x54] sm:$0xf]
        %v314 = vld [vmem:[%s296 + $0x58] sm:$0xf]
        %v315 = vld [vmem:[%s296 + $0x60] sm:$0xf]
        %v316 = vld [vmem:[%s296 + $0x64] sm:$0xf]
        %v317 = vld [vmem:[%s296 + $0x68] sm:$0xf]
        %v318 = vld [vmem:[%s296 + $0x70] sm:$0xf]
        %v319 = vld [vmem:[%s296 + $0x74] sm:$0xf]
        %v320 = vld [vmem:[%s296 + $0x78] sm:$0xf]
        %v321 = vld [vmem:[%s296 + $0x80] sm:$0xf]
        %v322 = vld [vmem:[%s296 + $0x84] sm:$0xf]
        %v323 = vld [vmem:[%s296 + $0x88] sm:$0xf]
        %v324 = vld [vmem:[%s296 + $0x90] sm:$0xf]
        %v325 = vld [vmem:[%s296 + $0x94] sm:$0xf]
        %v326 = vld [vmem:[%s296 + $0x98] sm:$0xf]
        %vm327 = vcmask 27648
        %328 = vst.msk [vmem:[#allocation2] sm:$0xf] %vm327, %v297
        %329 = vst.msk [vmem:[#allocation2 + $0x4] sm:$0xf] %vm327, %v298
        %330 = vst.msk [vmem:[#allocation2 + $0x8] sm:$0xf] %vm327, %v299
        %331 = vst.msk [vmem:[#allocation2 + $0xc] sm:$0xf] %vm327, %v300
        %332 = vst.msk [vmem:[#allocation2 + $0x10] sm:$0xf] %vm327, %v301
        %333 = vst.msk [vmem:[#allocation2 + $0x14] sm:$0xf] %vm327, %v302
        %334 = vst.msk [vmem:[#allocation2 + $0x18] sm:$0xf] %vm327, %v303
        %335 = vst.msk [vmem:[#allocation2 + $0x1c] sm:$0xf] %vm327, %v304
        %336 = vst.msk [vmem:[#allocation2 + $0x20] sm:$0xf] %vm327, %v305
        %337 = vst.msk [vmem:[#allocation2 + $0x24] sm:$0xf] %vm327, %v306
        %338 = vst.msk [vmem:[#allocation2 + $0x28] sm:$0xf] %vm327, %v307
        %339 = vst.msk [vmem:[#allocation2 + $0x2c] sm:$0xf] %vm327, %v308
        %340 = vst.msk [vmem:[#allocation2 + $0x30] sm:$0xf] %vm327, %v309
        %341 = vst.msk [vmem:[#allocation2 + $0x34] sm:$0xf] %vm327, %v310
        %342 = vst.msk [vmem:[#allocation2 + $0x38] sm:$0xf] %vm327, %v311
        %343 = vst.msk [vmem:[#allocation2 + $0x3c] sm:$0xf] %vm327, %v312
        %344 = vst.msk [vmem:[#allocation2 + $0x40] sm:$0xf] %vm327, %v313
        %345 = vst.msk [vmem:[#allocation2 + $0x44] sm:$0xf] %vm327, %v314
        %346 = vst.msk [vmem:[#allocation2 + $0x48] sm:$0xf] %vm327, %v315
        %347 = vst.msk [vmem:[#allocation2 + $0x4c] sm:$0xf] %vm327, %v316
        %348 = vst.msk [vmem:[#allocation2 + $0x50] sm:$0xf] %vm327, %v317
        %349 = vst.msk [vmem:[#allocation2 + $0x54] sm:$0xf] %vm327, %v318
        %350 = vst.msk [vmem:[#allocation2 + $0x58] sm:$0xf] %vm327, %v319
        %351 = vst.msk [vmem:[#allocation2 + $0x5c] sm:$0xf] %vm327, %v320
        %352 = vst.msk [vmem:[#allocation2 + $0x60] sm:$0xf] %vm327, %v321
        %353 = vst.msk [vmem:[#allocation2 + $0x64] sm:$0xf] %vm327, %v322
        %354 = vst.msk [vmem:[#allocation2 + $0x68] sm:$0xf] %vm327, %v323
        %355 = vst.msk [vmem:[#allocation2 + $0x6c] sm:$0xf] %vm327, %v324
        %356 = vst.msk [vmem:[#allocation2 + $0x70] sm:$0xf] %vm327, %v325
        %357 = vst.msk [vmem:[#allocation2 + $0x74] sm:$0xf] %vm327, %v326
        %v358 = vld [vmem:[%s296] sm:$0xf]
        %v359 = vld [vmem:[%s296 + $0x4] sm:$0xf]
        %v360 = vld [vmem:[%s296 + $0x8] sm:$0xf]
        %v361 = vld [vmem:[%s296 + $0xc] sm:$0x1]
        %v362 = vld [vmem:[%s296 + $0x10] sm:$0xf]
        %v363 = vld [vmem:[%s296 + $0x14] sm:$0xf]
        %v364 = vld [vmem:[%s296 + $0x18] sm:$0xf]
        %v365 = vld [vmem:[%s296 + $0x1c] sm:$0x1]
        %v366 = vld [vmem:[%s296 + $0x20] sm:$0xf]
        %v367 = vld [vmem:[%s296 + $0x24] sm:$0xf]
        %v368 = vld [vmem:[%s296 + $0x28] sm:$0xf]
        %v369 = vld [vmem:[%s296 + $0x2c] sm:$0x1]
        %v370 = vld [vmem:[%s296 + $0x30] sm:$0xf]
        %v371 = vld [vmem:[%s296 + $0x34] sm:$0xf]
        %v372 = vld [vmem:[%s296 + $0x38] sm:$0xf]
        %v373 = vld [vmem:[%s296 + $0x3c] sm:$0x1]
        %v374 = vld [vmem:[%s296 + $0x40] sm:$0xf]
        %v375 = vld [vmem:[%s296 + $0x44] sm:$0xf]
        %v376 = vld [vmem:[%s296 + $0x48] sm:$0xf]
        %v377 = vld [vmem:[%s296 + $0x4c] sm:$0x1]
        %v378 = vld [vmem:[%s296 + $0x50] sm:$0xf]
        %v379 = vld [vmem:[%s296 + $0x54] sm:$0xf]
        %v380 = vld [vmem:[%s296 + $0x58] sm:$0xf]
        %v381 = vld [vmem:[%s296 + $0x5c] sm:$0x1]
        %v382 = vld [vmem:[%s296 + $0x60] sm:$0xf]
        %v383 = vld [vmem:[%s296 + $0x64] sm:$0xf]
        %v384 = vld [vmem:[%s296 + $0x68] sm:$0xf]
        %v385 = vld [vmem:[%s296 + $0x6c] sm:$0x1]
        %v386 = vld [vmem:[%s296 + $0x70] sm:$0xf]
        %v387 = vld [vmem:[%s296 + $0x74] sm:$0xf]
        %v388 = vld [vmem:[%s296 + $0x78] sm:$0xf]
        %v389 = vld [vmem:[%s296 + $0x7c] sm:$0x1]
        %v390 = vld [vmem:[%s296 + $0x80] sm:$0xf]
        %v391 = vld [vmem:[%s296 + $0x84] sm:$0xf]
        %v392 = vld [vmem:[%s296 + $0x88] sm:$0xf]
        %v393 = vld [vmem:[%s296 + $0x8c] sm:$0x1]
        %v394 = vld [vmem:[%s296 + $0x90] sm:$0xf]
        %v395 = vld [vmem:[%s296 + $0x94] sm:$0xf]
        %v396 = vld [vmem:[%s296 + $0x98] sm:$0xf]
        %v397 = vld [vmem:[%s296 + $0x9c] sm:$0x1]
        %vm398 = vsmask.f32 3328
        %vm399 = vsmask.f32 7440
        %vm400 = vmor %vm398, %vm399
        %v402 = vshrl.u32 %v358, 16
        %v404 = vrot.slane %v402, 4
        %v405 = vshll.u32 %v358, 16
        %v407 = vrot.slane %v405, 5
        %v408 = vor.u32 %v404, %v407
        %v409 = vrot.slane %v408, 4
        %v411 = vshll.u32 %v359, 16
        %v413 = vrot.slane %v411, 5
        %v414 = vsel %vm400, %v409, %v413
        %v415 = vshrl.u32 %v359, 16
        %v417 = vrot.slane %v415, 4
        %v418 = vor.u32 %v417, %v413
        %v419 = vrot.slane %v418, 4
        %v421 = vshll.u32 %v360, 16
        %v423 = vrot.slane %v421, 5
        %v424 = vsel %vm400, %v419, %v423
        %v425 = vshrl.u32 %v360, 16
        %v427 = vrot.slane %v425, 4
        %v428 = vor.u32 %v427, %v423
        %v429 = vrot.slane %v428, 4
        %v431 = vshll.u32 %v361, 16
        %v433 = vrot.slane %v431, 5
        %v434 = vsel %vm400, %v429, %v433
        %v436 = vshrl.u32 %v362, 16
        %v438 = vrot.slane %v436, 4
        %v439 = vshll.u32 %v362, 16
        %v441 = vrot.slane %v439, 5
        %v442 = vor.u32 %v438, %v441
        %v443 = vrot.slane %v442, 4
        %v445 = vshll.u32 %v363, 16
        %v447 = vrot.slane %v445, 5
        %v448 = vsel %vm400, %v443, %v447
        %v449 = vshrl.u32 %v363, 16
        %v451 = vrot.slane %v449, 4
        %v452 = vor.u32 %v451, %v447
        %v453 = vrot.slane %v452, 4
        %v455 = vshll.u32 %v364, 16
        %v457 = vrot.slane %v455, 5
        %v458 = vsel %vm400, %v453, %v457
        %v459 = vshrl.u32 %v364, 16
        %v461 = vrot.slane %v459, 4
        %v462 = vor.u32 %v461, %v457
        %v463 = vrot.slane %v462, 4
        %v465 = vshll.u32 %v365, 16
        %v467 = vrot.slane %v465, 5
        %v468 = vsel %vm400, %v463, %v467
        %v470 = vshrl.u32 %v366, 16
        %v472 = vrot.slane %v470, 4
        %v473 = vshll.u32 %v366, 16
        %v475 = vrot.slane %v473, 5
        %v476 = vor.u32 %v472, %v475
        %v477 = vrot.slane %v476, 4
        %v479 = vshll.u32 %v367, 16
        %v481 = vrot.slane %v479, 5
        %v482 = vsel %vm400, %v477, %v481
        %v483 = vshrl.u32 %v367, 16
        %v485 = vrot.slane %v483, 4
        %v486 = vor.u32 %v485, %v481
        %v487 = vrot.slane %v486, 4
        %v489 = vshll.u32 %v368, 16
        %v491 = vrot.slane %v489, 5
        %v492 = vsel %vm400, %v487, %v491
        %v493 = vshrl.u32 %v368, 16
        %v495 = vrot.slane %v493, 4
        %v496 = vor.u32 %v495, %v491
        %v497 = vrot.slane %v496, 4
        %v499 = vshll.u32 %v369, 16
        %v501 = vrot.slane %v499, 5
        %v502 = vsel %vm400, %v497, %v501
        %v504 = vshrl.u32 %v370, 16
        %v506 = vrot.slane %v504, 4
        %v507 = vshll.u32 %v370, 16
        %v509 = vrot.slane %v507, 5
        %v510 = vor.u32 %v506, %v509
        %v511 = vrot.slane %v510, 4
        %v513 = vshll.u32 %v371, 16
        %v515 = vrot.slane %v513, 5
        %v516 = vsel %vm400, %v511, %v515
        %v517 = vshrl.u32 %v371, 16
        %v519 = vrot.slane %v517, 4
        %v520 = vor.u32 %v519, %v515
        %v521 = vrot.slane %v520, 4
        %v523 = vshll.u32 %v372, 16
        %v525 = vrot.slane %v523, 5
        %v526 = vsel %vm400, %v521, %v525
        %v527 = vshrl.u32 %v372, 16
        %v529 = vrot.slane %v527, 4
        %v530 = vor.u32 %v529, %v525
        %v531 = vrot.slane %v530, 4
        %v533 = vshll.u32 %v373, 16
        %v535 = vrot.slane %v533, 5
        %v536 = vsel %vm400, %v531, %v535
        %v538 = vshrl.u32 %v374, 16
        %v540 = vrot.slane %v538, 4
        %v541 = vshll.u32 %v374, 16
        %v543 = vrot.slane %v541, 5
        %v544 = vor.u32 %v540, %v543
        %v545 = vrot.slane %v544, 4
        %v547 = vshll.u32 %v375, 16
        %v549 = vrot.slane %v547, 5
        %v550 = vsel %vm400, %v545, %v549
        %v551 = vshrl.u32 %v375, 16
        %v553 = vrot.slane %v551, 4
        %v554 = vor.u32 %v553, %v549
        %v555 = vrot.slane %v554, 4
        %v557 = vshll.u32 %v376, 16
        %v559 = vrot.slane %v557, 5
        %v560 = vsel %vm400, %v555, %v559
        %v561 = vshrl.u32 %v376, 16
        %v563 = vrot.slane %v561, 4
        %v564 = vor.u32 %v563, %v559
        %v565 = vrot.slane %v564, 4
        %v567 = vshll.u32 %v377, 16
        %v569 = vrot.slane %v567, 5
        %v570 = vsel %vm400, %v565, %v569
        %v572 = vshrl.u32 %v378, 16
        %v574 = vrot.slane %v572, 4
        %v575 = vshll.u32 %v378, 16
        %v577 = vrot.slane %v575, 5
        %v578 = vor.u32 %v574, %v577
        %v579 = vrot.slane %v578, 4
        %v581 = vshll.u32 %v379, 16
        %v583 = vrot.slane %v581, 5
        %v584 = vsel %vm400, %v579, %v583
        %v585 = vshrl.u32 %v379, 16
        %v587 = vrot.slane %v585, 4
        %v588 = vor.u32 %v587, %v583
        %v589 = vrot.slane %v588, 4
        %v591 = vshll.u32 %v380, 16
        %v593 = vrot.slane %v591, 5
        %v594 = vsel %vm400, %v589, %v593
        %v595 = vshrl.u32 %v380, 16
        %v597 = vrot.slane %v595, 4
        %v598 = vor.u32 %v597, %v593
        %v599 = vrot.slane %v598, 4
        %v601 = vshll.u32 %v381, 16
        %v603 = vrot.slane %v601, 5
        %v604 = vsel %vm400, %v599, %v603
        %v606 = vshrl.u32 %v382, 16
        %v608 = vrot.slane %v606, 4
        %v609 = vshll.u32 %v382, 16
        %v611 = vrot.slane %v609, 5
        %v612 = vor.u32 %v608, %v611
        %v613 = vrot.slane %v612, 4
        %v615 = vshll.u32 %v383, 16
        %v617 = vrot.slane %v615, 5
        %v618 = vsel %vm400, %v613, %v617
        %v619 = vshrl.u32 %v383, 16
        %v621 = vrot.slane %v619, 4
        %v622 = vor.u32 %v621, %v617
        %v623 = vrot.slane %v622, 4
        %v625 = vshll.u32 %v384, 16
        %v627 = vrot.slane %v625, 5
        %v628 = vsel %vm400, %v623, %v627
        %v629 = vshrl.u32 %v384, 16
        %v631 = vrot.slane %v629, 4
        %v632 = vor.u32 %v631, %v627
        %v633 = vrot.slane %v632, 4
        %v635 = vshll.u32 %v385, 16
        %v637 = vrot.slane %v635, 5
        %v638 = vsel %vm400, %v633, %v637
        %v640 = vshrl.u32 %v386, 16
        %v642 = vrot.slane %v640, 4
        %v643 = vshll.u32 %v386, 16
        %v645 = vrot.slane %v643, 5
        %v646 = vor.u32 %v642, %v645
        %v647 = vrot.slane %v646, 4
        %v649 = vshll.u32 %v387, 16
        %v651 = vrot.slane %v649, 5
        %v652 = vsel %vm400, %v647, %v651
        %v653 = vshrl.u32 %v387, 16
        %v655 = vrot.slane %v653, 4
        %v656 = vor.u32 %v655, %v651
        %v657 = vrot.slane %v656, 4
        %v659 = vshll.u32 %v388, 16
        %v661 = vrot.slane %v659, 5
        %v662 = vsel %vm400, %v657, %v661
        %v663 = vshrl.u32 %v388, 16
        %v665 = vrot.slane %v663, 4
        %v666 = vor.u32 %v665, %v661
        %v667 = vrot.slane %v666, 4
        %v669 = vshll.u32 %v389, 16
        %v671 = vrot.slane %v669, 5
        %v672 = vsel %vm400, %v667, %v671
        %v674 = vshrl.u32 %v390, 16
        %v676 = vrot.slane %v674, 4
        %v677 = vshll.u32 %v390, 16
        %v679 = vrot.slane %v677, 5
        %v680 = vor.u32 %v676, %v679
        %v681 = vrot.slane %v680, 4
        %v683 = vshll.u32 %v391, 16
        %v685 = vrot.slane %v683, 5
        %v686 = vsel %vm400, %v681, %v685
        %v687 = vshrl.u32 %v391, 16
        %v689 = vrot.slane %v687, 4
        %v690 = vor.u32 %v689, %v685
        %v691 = vrot.slane %v690, 4
        %v693 = vshll.u32 %v392, 16
        %v695 = vrot.slane %v693, 5
        %v696 = vsel %vm400, %v691, %v695
        %v697 = vshrl.u32 %v392, 16
        %v699 = vrot.slane %v697, 4
        %v700 = vor.u32 %v699, %v695
        %v701 = vrot.slane %v700, 4
        %v703 = vshll.u32 %v393, 16
        %v705 = vrot.slane %v703, 5
        %v706 = vsel %vm400, %v701, %v705
        %v708 = vshrl.u32 %v394, 16
        %v710 = vrot.slane %v708, 4
        %v711 = vshll.u32 %v394, 16
        %v713 = vrot.slane %v711, 5
        %v714 = vor.u32 %v710, %v713
        %v715 = vrot.slane %v714, 4
        %v717 = vshll.u32 %v395, 16
        %v719 = vrot.slane %v717, 5
        %v720 = vsel %vm400, %v715, %v719
        %v721 = vshrl.u32 %v395, 16
        %v723 = vrot.slane %v721, 4
        %v724 = vor.u32 %v723, %v719
        %v725 = vrot.slane %v724, 4
        %v727 = vshll.u32 %v396, 16
        %v729 = vrot.slane %v727, 5
        %v730 = vsel %vm400, %v725, %v729
        %v731 = vshrl.u32 %v396, 16
        %v733 = vrot.slane %v731, 4
        %v734 = vor.u32 %v733, %v729
        %v735 = vrot.slane %v734, 4
        %v737 = vshll.u32 %v397, 16
        %v739 = vrot.slane %v737, 5
        %v740 = vsel %vm400, %v735, %v739
        %741 = vrot.lane.b32.xlu0 %v414, 4
        %v742 = vpop.permute.xlu0 %741
        %743 = vrot.lane.b32.xlu0 %v424, 4
        %v744 = vpop.permute.xlu0 %743
        %745 = vrot.lane.b32.xlu0 %v434, 4
        %v746 = vpop.permute.xlu0 %745
        %747 = vrot.lane.b32.xlu0 %v448, 4
        %v748 = vpop.permute.xlu0 %747
        %749 = vrot.lane.b32.xlu0 %v458, 4
        %v750 = vpop.permute.xlu0 %749
        %751 = vrot.lane.b32.xlu0 %v468, 4
        %v752 = vpop.permute.xlu0 %751
        %753 = vrot.lane.b32.xlu0 %v482, 4
        %v754 = vpop.permute.xlu0 %753
        %755 = vrot.lane.b32.xlu0 %v492, 4
        %v756 = vpop.permute.xlu0 %755
        %757 = vrot.lane.b32.xlu0 %v502, 4
        %v758 = vpop.permute.xlu0 %757
        %759 = vrot.lane.b32.xlu0 %v516, 4
        %v760 = vpop.permute.xlu0 %759
        %761 = vrot.lane.b32.xlu0 %v526, 4
        %v762 = vpop.permute.xlu0 %761
        %763 = vrot.lane.b32.xlu0 %v536, 4
        %v764 = vpop.permute.xlu0 %763
        %765 = vrot.lane.b32.xlu0 %v550, 4
        %v766 = vpop.permute.xlu0 %765
        %767 = vrot.lane.b32.xlu0 %v560, 4
        %v768 = vpop.permute.xlu0 %767
        %769 = vrot.lane.b32.xlu0 %v570, 4
        %v770 = vpop.permute.xlu0 %769
        %771 = vrot.lane.b32.xlu0 %v584, 4
        %v772 = vpop.permute.xlu0 %771
        %773 = vrot.lane.b32.xlu0 %v594, 4
        %v774 = vpop.permute.xlu0 %773
        %775 = vrot.lane.b32.xlu0 %v604, 4
        %v776 = vpop.permute.xlu0 %775
        %777 = vrot.lane.b32.xlu0 %v618, 4
        %v778 = vpop.permute.xlu0 %777
        %779 = vrot.lane.b32.xlu0 %v628, 4
        %v780 = vpop.permute.xlu0 %779
        %781 = vrot.lane.b32.xlu0 %v638, 4
        %v782 = vpop.permute.xlu0 %781
        %783 = vrot.lane.b32.xlu0 %v652, 4
        %v784 = vpop.permute.xlu0 %783
        %785 = vrot.lane.b32.xlu0 %v662, 4
        %v786 = vpop.permute.xlu0 %785
        %787 = vrot.lane.b32.xlu0 %v672, 4
        %v788 = vpop.permute.xlu0 %787
        %789 = vrot.lane.b32.xlu0 %v686, 4
        %v790 = vpop.permute.xlu0 %789
        %791 = vrot.lane.b32.xlu0 %v696, 4
        %v792 = vpop.permute.xlu0 %791
        %793 = vrot.lane.b32.xlu0 %v706, 4
        %v794 = vpop.permute.xlu0 %793
        %795 = vrot.lane.b32.xlu0 %v720, 4
        %v796 = vpop.permute.xlu0 %795
        %797 = vrot.lane.b32.xlu0 %v730, 4
        %v798 = vpop.permute.xlu0 %797
        %799 = vrot.lane.b32.xlu0 %v740, 4
        %v800 = vpop.permute.xlu0 %799
        %vm831 = vcmask 60448
        %832 = vst.msk [vmem:[#allocation2] sm:$0xf] %vm831, %v742
        %833 = vst.msk [vmem:[#allocation2 + $0x4] sm:$0xf] %vm831, %v744
        %834 = vst.msk [vmem:[#allocation2 + $0x8] sm:$0xf] %vm831, %v746
        %835 = vst.msk [vmem:[#allocation2 + $0xc] sm:$0xf] %vm831, %v748
        %836 = vst.msk [vmem:[#allocation2 + $0x10] sm:$0xf] %vm831, %v750
        %837 = vst.msk [vmem:[#allocation2 + $0x14] sm:$0xf] %vm831, %v752
        %838 = vst.msk [vmem:[#allocation2 + $0x18] sm:$0xf] %vm831, %v754
        %839 = vst.msk [vmem:[#allocation2 + $0x1c] sm:$0xf] %vm831, %v756
        %840 = vst.msk [vmem:[#allocation2 + $0x20] sm:$0xf] %vm831, %v758
        %841 = vst.msk [vmem:[#allocation2 + $0x24] sm:$0xf] %vm831, %v760
        %842 = vst.msk [vmem:[#allocation2 + $0x28] sm:$0xf] %vm831, %v762
        %843 = vst.msk [vmem:[#allocation2 + $0x2c] sm:$0xf] %vm831, %v764
        %844 = vst.msk [vmem:[#allocation2 + $0x30] sm:$0xf] %vm831, %v766
        %845 = vst.msk [vmem:[#allocation2 + $0x34] sm:$0xf] %vm831, %v768
        %846 = vst.msk [vmem:[#allocation2 + $0x38] sm:$0xf] %vm831, %v770
        %847 = vst.msk [vmem:[#allocation2 + $0x3c] sm:$0xf] %vm831, %v772
        %848 = vst.msk [vmem:[#allocation2 + $0x40] sm:$0xf] %vm831, %v774
        %849 = vst.msk [vmem:[#allocation2 + $0x44] sm:$0xf] %vm831, %v776
        %850 = vst.msk [vmem:[#allocation2 + $0x48] sm:$0xf] %vm831, %v778
        %851 = vst.msk [vmem:[#allocation2 + $0x4c] sm:$0xf] %vm831, %v780
        %852 = vst.msk [vmem:[#allocation2 + $0x50] sm:$0xf] %vm831, %v782
        %853 = vst.msk [vmem:[#allocation2 + $0x54] sm:$0xf] %vm831, %v784
        %854 = vst.msk [vmem:[#allocation2 + $0x58] sm:$0xf] %vm831, %v786
        %855 = vst.msk [vmem:[#allocation2 + $0x5c] sm:$0xf] %vm831, %v788
        %856 = vst.msk [vmem:[#allocation2 + $0x60] sm:$0xf] %vm831, %v790
        %857 = vst.msk [vmem:[#allocation2 + $0x64] sm:$0xf] %vm831, %v792
        %858 = vst.msk [vmem:[#allocation2 + $0x68] sm:$0xf] %vm831, %v794
        %859 = vst.msk [vmem:[#allocation2 + $0x6c] sm:$0xf] %vm831, %v796
        %860 = vst.msk [vmem:[#allocation2 + $0x70] sm:$0xf] %vm831, %v798
        %861 = vst.msk [vmem:[#allocation2 + $0x74] sm:$0xf] %vm831, %v800
        %v862 = vld [vmem:[%s296] sm:$0xe]
        %v863 = vld [vmem:[%s296 + $0x4] sm:$0xf]
        %v864 = vld [vmem:[%s296 + $0x8] sm:$0xf]
        %v865 = vld [vmem:[%s296 + $0xc] sm:$0x1]
        %v866 = vld [vmem:[%s296 + $0x10] sm:$0xe]
        %v867 = vld [vmem:[%s296 + $0x14] sm:$0xf]
        %v868 = vld [vmem:[%s296 + $0x18] sm:$0xf]
        %v869 = vld [vmem:[%s296 + $0x1c] sm:$0x1]
        %v870 = vld [vmem:[%s296 + $0x20] sm:$0xe]
        %v871 = vld [vmem:[%s296 + $0x24] sm:$0xf]
        %v872 = vld [vmem:[%s296 + $0x28] sm:$0xf]
        %v873 = vld [vmem:[%s296 + $0x2c] sm:$0x1]
        %v874 = vld [vmem:[%s296 + $0x30] sm:$0xe]
        %v875 = vld [vmem:[%s296 + $0x34] sm:$0xf]
        %v876 = vld [vmem:[%s296 + $0x38] sm:$0xf]
        %v877 = vld [vmem:[%s296 + $0x3c] sm:$0x1]
        %v878 = vld [vmem:[%s296 + $0x40] sm:$0xe]
        %v879 = vld [vmem:[%s296 + $0x44] sm:$0xf]
        %v880 = vld [vmem:[%s296 + $0x48] sm:$0xf]
        %v881 = vld [vmem:[%s296 + $0x4c] sm:$0x1]
        %v882 = vld [vmem:[%s296 + $0x50] sm:$0xe]
        %v883 = vld [vmem:[%s296 + $0x54] sm:$0xf]
        %v884 = vld [vmem:[%s296 + $0x58] sm:$0xf]
        %v885 = vld [vmem:[%s296 + $0x5c] sm:$0x1]
        %v886 = vld [vmem:[%s296 + $0x60] sm:$0xe]
        %v887 = vld [vmem:[%s296 + $0x64] sm:$0xf]
        %v888 = vld [vmem:[%s296 + $0x68] sm:$0xf]
        %v889 = vld [vmem:[%s296 + $0x6c] sm:$0x1]
        %v890 = vld [vmem:[%s296 + $0x70] sm:$0xe]
        %v891 = vld [vmem:[%s296 + $0x74] sm:$0xf]
        %v892 = vld [vmem:[%s296 + $0x78] sm:$0xf]
        %v893 = vld [vmem:[%s296 + $0x7c] sm:$0x1]
        %v894 = vld [vmem:[%s296 + $0x80] sm:$0xe]
        %v895 = vld [vmem:[%s296 + $0x84] sm:$0xf]
        %v896 = vld [vmem:[%s296 + $0x88] sm:$0xf]
        %v897 = vld [vmem:[%s296 + $0x8c] sm:$0x1]
        %v898 = vld [vmem:[%s296 + $0x90] sm:$0xe]
        %v899 = vld [vmem:[%s296 + $0x94] sm:$0xf]
        %v900 = vld [vmem:[%s296 + $0x98] sm:$0xf]
        %v901 = vld [vmem:[%s296 + $0x9c] sm:$0x1]
        %vm942 = vcmask 1042432
        %vm943 = vcmask 1046532
        %vm944 = vmor %vm942, %vm943
        %v945 = vrot.slane %v862, 5
        %v946 = vrot.slane %v945, 4
        %v947 = vrot.slane %v863, 5
        %v948 = vsel %vm944, %v946, %v947
        %v949 = vrot.slane %v947, 4
        %v950 = vrot.slane %v864, 5
        %v951 = vsel %vm944, %v949, %v950
        %v952 = vrot.slane %v950, 4
        %v953 = vrot.slane %v865, 5
        %v954 = vsel %vm944, %v952, %v953
        %v955 = vrot.slane %v866, 5
        %v956 = vrot.slane %v955, 4
        %v957 = vrot.slane %v867, 5
        %v958 = vsel %vm944, %v956, %v957
        %v959 = vrot.slane %v957, 4
        %v960 = vrot.slane %v868, 5
        %v961 = vsel %vm944, %v959, %v960
        %v962 = vrot.slane %v960, 4
        %v963 = vrot.slane %v869, 5
        %v964 = vsel %vm944, %v962, %v963
        %v965 = vrot.slane %v870, 5
        %v966 = vrot.slane %v965, 4
        %v967 = vrot.slane %v871, 5
        %v968 = vsel %vm944, %v966, %v967
        %v969 = vrot.slane %v967, 4
        %v970 = vrot.slane %v872, 5
        %v971 = vsel %vm944, %v969, %v970
        %v972 = vrot.slane %v970, 4
        %v973 = vrot.slane %v873, 5
        %v974 = vsel %vm944, %v972, %v973
        %v975 = vrot.slane %v874, 5
        %v976 = vrot.slane %v975, 4
        %v977 = vrot.slane %v875, 5
        %v978 = vsel %vm944, %v976, %v977
        %v979 = vrot.slane %v977, 4
        %v980 = vrot.slane %v876, 5
        %v981 = vsel %vm944, %v979, %v980
        %v982 = vrot.slane %v980, 4
        %v983 = vrot.slane %v877, 5
        %v984 = vsel %vm944, %v982, %v983
        %v985 = vrot.slane %v878, 5
        %v986 = vrot.slane %v985, 4
        %v987 = vrot.slane %v879, 5
        %v988 = vsel %vm944, %v986, %v987
        %v989 = vrot.slane %v987, 4
        %v990 = vrot.slane %v880, 5
        %v991 = vsel %vm944, %v989, %v990
        %v992 = vrot.slane %v990, 4
        %v993 = vrot.slane %v881, 5
        %v994 = vsel %vm944, %v992, %v993
        %v995 = vrot.slane %v882, 5
        %v996 = vrot.slane %v995, 4
        %v997 = vrot.slane %v883, 5
        %v998 = vsel %vm944, %v996, %v997
        %v999 = vrot.slane %v997, 4
        %v1000 = vrot.slane %v884, 5
        %v1001 = vsel %vm944, %v999, %v1000
        %v1002 = vrot.slane %v1000, 4
        %v1003 = vrot.slane %v885, 5
        %v1004 = vsel %vm944, %v1002, %v1003
        %v1005 = vrot.slane %v886, 5
        %v1006 = vrot.slane %v1005, 4
        %v1007 = vrot.slane %v887, 5
        %v1008 = vsel %vm944, %v1006, %v1007
        %v1009 = vrot.slane %v1007, 4
        %v1010 = vrot.slane %v888, 5
        %v1011 = vsel %vm944, %v1009, %v1010
        %v1012 = vrot.slane %v1010, 4
        %v1013 = vrot.slane %v889, 5
        %v1014 = vsel %vm944, %v1012, %v1013
        %v1015 = vrot.slane %v890, 5
        %v1016 = vrot.slane %v1015, 4
        %v1017 = vrot.slane %v891, 5
        %v1018 = vsel %vm944, %v1016, %v1017
        %v1019 = vrot.slane %v1017, 4
        %v1020 = vrot.slane %v892, 5
        %v1021 = vsel %vm944, %v1019, %v1020
        %v1022 = vrot.slane %v1020, 4
        %v1023 = vrot.slane %v893, 5
        %v1024 = vsel %vm944, %v1022, %v1023
        %v1025 = vrot.slane %v894, 5
        %v1026 = vrot.slane %v1025, 4
        %v1027 = vrot.slane %v895, 5
        %v1028 = vsel %vm944, %v1026, %v1027
        %v1029 = vrot.slane %v1027, 4
        %v1030 = vrot.slane %v896, 5
        %v1031 = vsel %vm944, %v1029, %v1030
        %v1032 = vrot.slane %v1030, 4
        %v1033 = vrot.slane %v897, 5
        %v1034 = vsel %vm944, %v1032, %v1033
        %v1035 = vrot.slane %v898, 5
        %v1036 = vrot.slane %v1035, 4
        %v1037 = vrot.slane %v899, 5
        %v1038 = vsel %vm944, %v1036, %v1037
        %v1039 = vrot.slane %v1037, 4
        %v1040 = vrot.slane %v900, 5
        %v1041 = vsel %vm944, %v1039, %v1040
        %v1042 = vrot.slane %v1040, 4
        %v1043 = vrot.slane %v901, 5
        %v1044 = vsel %vm944, %v1042, %v1043
        %1045 = vrot.lane.b32.xlu0 %v948, 8
        %v1046 = vpop.permute.xlu0 %1045
        %1047 = vrot.lane.b32.xlu0 %v951, 8
        %v1048 = vpop.permute.xlu0 %1047
        %1049 = vrot.lane.b32.xlu0 %v954, 8
        %v1050 = vpop.permute.xlu0 %1049
        %1051 = vrot.lane.b32.xlu0 %v958, 8
        %v1052 = vpop.permute.xlu0 %1051
        %1053 = vrot.lane.b32.xlu0 %v961, 8
        %v1054 = vpop.permute.xlu0 %1053
        %1055 = vrot.lane.b32.xlu0 %v964, 8
        %v1056 = vpop.permute.xlu0 %1055
        %1057 = vrot.lane.b32.xlu0 %v968, 8
        %v1058 = vpop.permute.xlu0 %1057
        %1059 = vrot.lane.b32.xlu0 %v971, 8
        %v1060 = vpop.permute.xlu0 %1059
        %1061 = vrot.lane.b32.xlu0 %v974, 8
        %v1062 = vpop.permute.xlu0 %1061
        %1063 = vrot.lane.b32.xlu0 %v978, 8
        %v1064 = vpop.permute.xlu0 %1063
        %1065 = vrot.lane.b32.xlu0 %v981, 8
        %v1066 = vpop.permute.xlu0 %1065
        %1067 = vrot.lane.b32.xlu0 %v984, 8
        %v1068 = vpop.permute.xlu0 %1067
        %1069 = vrot.lane.b32.xlu0 %v988, 8
        %v1070 = vpop.permute.xlu0 %1069
        %1071 = vrot.lane.b32.xlu0 %v991, 8
        %v1072 = vpop.permute.xlu0 %1071
        %1073 = vrot.lane.b32.xlu0 %v994, 8
        %v1074 = vpop.permute.xlu0 %1073
        %1075 = vrot.lane.b32.xlu0 %v998, 8
        %v1076 = vpop.permute.xlu0 %1075
        %1077 = vrot.lane.b32.xlu0 %v1001, 8
        %v1078 = vpop.permute.xlu0 %1077
        %1079 = vrot.lane.b32.xlu0 %v1004, 8
        %v1080 = vpop.permute.xlu0 %1079
        %1081 = vrot.lane.b32.xlu0 %v1008, 8
        %v1082 = vpop.permute.xlu0 %1081
        %1083 = vrot.lane.b32.xlu0 %v1011, 8
        %v1084 = vpop.permute.xlu0 %1083
        %1085 = vrot.lane.b32.xlu0 %v1014, 8
        %v1086 = vpop.permute.xlu0 %1085
        %1087 = vrot.lane.b32.xlu0 %v1018, 8
        %v1088 = vpop.permute.xlu0 %1087
        %1089 = vrot.lane.b32.xlu0 %v1021, 8
        %v1090 = vpop.permute.xlu0 %1089
        %1091 = vrot.lane.b32.xlu0 %v1024, 8
        %v1092 = vpop.permute.xlu0 %1091
        %1093 = vrot.lane.b32.xlu0 %v1028, 8
        %v1094 = vpop.permute.xlu0 %1093
        %1095 = vrot.lane.b32.xlu0 %v1031, 8
        %v1096 = vpop.permute.xlu0 %1095
        %1097 = vrot.lane.b32.xlu0 %v1034, 8
        %v1098 = vpop.permute.xlu0 %1097
        %1099 = vrot.lane.b32.xlu0 %v1038, 8
        %v1100 = vpop.permute.xlu0 %1099
        %1101 = vrot.lane.b32.xlu0 %v1041, 8
        %v1102 = vpop.permute.xlu0 %1101
        %1103 = vrot.lane.b32.xlu0 %v1044, 8
        %v1104 = vpop.permute.xlu0 %1103
        %vm1135 = vcmask 93248
        %1136 = vst.msk [vmem:[#allocation2] sm:$0xf] %vm1135, %v1046
        %1137 = vst.msk [vmem:[#allocation2 + $0x4] sm:$0xf] %vm1135, %v1048
        %1138 = vst.msk [vmem:[#allocation2 + $0x8] sm:$0xf] %vm1135, %v1050
        %1139 = vst.msk [vmem:[#allocation2 + $0xc] sm:$0xf] %vm1135, %v1052
        %1140 = vst.msk [vmem:[#allocation2 + $0x10] sm:$0xf] %vm1135, %v1054
        %1141 = vst.msk [vmem:[#allocation2 + $0x14] sm:$0xf] %vm1135, %v1056
        %1142 = vst.msk [vmem:[#allocation2 + $0x18] sm:$0xf] %vm1135, %v1058
        %1143 = vst.msk [vmem:[#allocation2 + $0x1c] sm:$0xf] %vm1135, %v1060
        %1144 = vst.msk [vmem:[#allocation2 + $0x20] sm:$0xf] %vm1135, %v1062
        %1145 = vst.msk [vmem:[#allocation2 + $0x24] sm:$0xf] %vm1135, %v1064
        %1146 = vst.msk [vmem:[#allocation2 + $0x28] sm:$0xf] %vm1135, %v1066
        %1147 = vst.msk [vmem:[#allocation2 + $0x2c] sm:$0xf] %vm1135, %v1068
        %1148 = vst.msk [vmem:[#allocation2 + $0x30] sm:$0xf] %vm1135, %v1070
        %1149 = vst.msk [vmem:[#allocation2 + $0x34] sm:$0xf] %vm1135, %v1072
        %1150 = vst.msk [vmem:[#allocation2 + $0x38] sm:$0xf] %vm1135, %v1074
        %1151 = vst.msk [vmem:[#allocation2 + $0x3c] sm:$0xf] %vm1135, %v1076
        %1152 = vst.msk [vmem:[#allocation2 + $0x40] sm:$0xf] %vm1135, %v1078
        %1153 = vst.msk [vmem:[#allocation2 + $0x44] sm:$0xf] %vm1135, %v1080
        %1154 = vst.msk [vmem:[#allocation2 + $0x48] sm:$0xf] %vm1135, %v1082
        %1155 = vst.msk [vmem:[#allocation2 + $0x4c] sm:$0xf] %vm1135, %v1084
        %1156 = vst.msk [vmem:[#allocation2 + $0x50] sm:$0xf] %vm1135, %v1086
        %1157 = vst.msk [vmem:[#allocation2 + $0x54] sm:$0xf] %vm1135, %v1088
        %1158 = vst.msk [vmem:[#allocation2 + $0x58] sm:$0xf] %vm1135, %v1090
        %1159 = vst.msk [vmem:[#allocation2 + $0x5c] sm:$0xf] %vm1135, %v1092
        %1160 = vst.msk [vmem:[#allocation2 + $0x60] sm:$0xf] %vm1135, %v1094
        %1161 = vst.msk [vmem:[#allocation2 + $0x64] sm:$0xf] %vm1135, %v1096
        %1162 = vst.msk [vmem:[#allocation2 + $0x68] sm:$0xf] %vm1135, %v1098
        %1163 = vst.msk [vmem:[#allocation2 + $0x6c] sm:$0xf] %vm1135, %v1100
        %1164 = vst.msk [vmem:[#allocation2 + $0x70] sm:$0xf] %vm1135, %v1102
        %1165 = vst.msk [vmem:[#allocation2 + $0x74] sm:$0xf] %vm1135, %v1104
        %s1166 = sadd.s32 %s293, 1
        %s1167 = smul.u32 %s1166, 4
        %s1168 = smul.addr %s1167, 4
        %s1169 = scalar_lea.vmem %s290, %s1168
        %v1170 = vld [vmem:[%s1169] sm:$0xf]
        %v1171 = vld [vmem:[%s1169 + $0x4] sm:$0xf]
        %v1172 = vld [vmem:[%s1169 + $0x8] sm:$0xf]
        %v1173 = vld [vmem:[%s1169 + $0x10] sm:$0xf]
        %v1174 = vld [vmem:[%s1169 + $0x14] sm:$0xf]
        %v1175 = vld [vmem:[%s1169 + $0x18] sm:$0xf]
        %v1176 = vld [vmem:[%s1169 + $0x20] sm:$0xf]
        %v1177 = vld [vmem:[%s1169 + $0x24] sm:$0xf]
        %v1178 = vld [vmem:[%s1169 + $0x28] sm:$0xf]
        %v1179 = vld [vmem:[%s1169 + $0x30] sm:$0xf]
        %v1180 = vld [vmem:[%s1169 + $0x34] sm:$0xf]
        %v1181 = vld [vmem:[%s1169 + $0x38] sm:$0xf]
        %v1182 = vld [vmem:[%s1169 + $0x40] sm:$0xf]
        %v1183 = vld [vmem:[%s1169 + $0x44] sm:$0xf]
        %v1184 = vld [vmem:[%s1169 + $0x48] sm:$0xf]
        %v1185 = vld [vmem:[%s1169 + $0x50] sm:$0xf]
        %v1186 = vld [vmem:[%s1169 + $0x54] sm:$0xf]
        %v1187 = vld [vmem:[%s1169 + $0x58] sm:$0xf]
        %v1188 = vld [vmem:[%s1169 + $0x60] sm:$0xf]
        %v1189 = vld [vmem:[%s1169 + $0x64] sm:$0xf]
        %v1190 = vld [vmem:[%s1169 + $0x68] sm:$0xf]
        %v1191 = vld [vmem:[%s1169 + $0x70] sm:$0xf]
        %v1192 = vld [vmem:[%s1169 + $0x74] sm:$0xf]
        %v1193 = vld [vmem:[%s1169 + $0x78] sm:$0xf]
        %v1194 = vld [vmem:[%s1169 + $0x80] sm:$0xf]
        %v1195 = vld [vmem:[%s1169 + $0x84] sm:$0xf]
        %v1196 = vld [vmem:[%s1169 + $0x88] sm:$0xf]
        %v1197 = vld [vmem:[%s1169 + $0x90] sm:$0xf]
        %v1198 = vld [vmem:[%s1169 + $0x94] sm:$0xf]
        %v1199 = vld [vmem:[%s1169 + $0x98] sm:$0xf]
        %1230 = vrot.lane.b32.xlu0 %v1170, 12
        %v1231 = vpop.permute.xlu0 %1230
        %1232 = vrot.lane.b32.xlu0 %v1171, 12
        %v1233 = vpop.permute.xlu0 %1232
        %1234 = vrot.lane.b32.xlu0 %v1172, 12
        %v1235 = vpop.permute.xlu0 %1234
        %1236 = vrot.lane.b32.xlu0 %v1173, 12
        %v1237 = vpop.permute.xlu0 %1236
        %1238 = vrot.lane.b32.xlu0 %v1174, 12
        %v1239 = vpop.permute.xlu0 %1238
        %1240 = vrot.lane.b32.xlu0 %v1175, 12
        %v1241 = vpop.permute.xlu0 %1240
        %1242 = vrot.lane.b32.xlu0 %v1176, 12
        %v1243 = vpop.permute.xlu0 %1242
        %1244 = vrot.lane.b32.xlu0 %v1177, 12
        %v1245 = vpop.permute.xlu0 %1244
        %1246 = vrot.lane.b32.xlu0 %v1178, 12
        %v1247 = vpop.permute.xlu0 %1246
        %1248 = vrot.lane.b32.xlu0 %v1179, 12
        %v1249 = vpop.permute.xlu0 %1248
        %1250 = vrot.lane.b32.xlu0 %v1180, 12
        %v1251 = vpop.permute.xlu0 %1250
        %1252 = vrot.lane.b32.xlu0 %v1181, 12
        %v1253 = vpop.permute.xlu0 %1252
        %1254 = vrot.lane.b32.xlu0 %v1182, 12
        %v1255 = vpop.permute.xlu0 %1254
        %1256 = vrot.lane.b32.xlu0 %v1183, 12
        %v1257 = vpop.permute.xlu0 %1256
        %1258 = vrot.lane.b32.xlu0 %v1184, 12
        %v1259 = vpop.permute.xlu0 %1258
        %1260 = vrot.lane.b32.xlu0 %v1185, 12
        %v1261 = vpop.permute.xlu0 %1260
        %1262 = vrot.lane.b32.xlu0 %v1186, 12
        %v1263 = vpop.permute.xlu0 %1262
        %1264 = vrot.lane.b32.xlu0 %v1187, 12
        %v1265 = vpop.permute.xlu0 %1264
        %1266 = vrot.lane.b32.xlu0 %v1188, 12
        %v1267 = vpop.permute.xlu0 %1266
        %1268 = vrot.lane.b32.xlu0 %v1189, 12
        %v1269 = vpop.permute.xlu0 %1268
        %1270 = vrot.lane.b32.xlu0 %v1190, 12
        %v1271 = vpop.permute.xlu0 %1270
        %1272 = vrot.lane.b32.xlu0 %v1191, 12
        %v1273 = vpop.permute.xlu0 %1272
        %1274 = vrot.lane.b32.xlu0 %v1192, 12
        %v1275 = vpop.permute.xlu0 %1274
        %1276 = vrot.lane.b32.xlu0 %v1193, 12
        %v1277 = vpop.permute.xlu0 %1276
        %1278 = vrot.lane.b32.xlu0 %v1194, 12
        %v1279 = vpop.permute.xlu0 %1278
        %1280 = vrot.lane.b32.xlu0 %v1195, 12
        %v1281 = vpop.permute.xlu0 %1280
        %1282 = vrot.lane.b32.xlu0 %v1196, 12
        %v1283 = vpop.permute.xlu0 %1282
        %1284 = vrot.lane.b32.xlu0 %v1197, 12
        %v1285 = vpop.permute.xlu0 %1284
        %1286 = vrot.lane.b32.xlu0 %v1198, 12
        %v1287 = vpop.permute.xlu0 %1286
        %1288 = vrot.lane.b32.xlu0 %v1199, 12
        %v1289 = vpop.permute.xlu0 %1288
        %vm1320 = vcmask 126048
        %1321 = vst.msk [vmem:[#allocation2] sm:$0xf] %vm1320, %v1231
        %1322 = vst.msk [vmem:[#allocation2 + $0x4] sm:$0xf] %vm1320, %v1233
        %1323 = vst.msk [vmem:[#allocation2 + $0x8] sm:$0xf] %vm1320, %v1235
        %1324 = vst.msk [vmem:[#allocation2 + $0xc] sm:$0xf] %vm1320, %v1237
        %1325 = vst.msk [vmem:[#allocation2 + $0x10] sm:$0xf] %vm1320, %v1239
        %1326 = vst.msk [vmem:[#allocation2 + $0x14] sm:$0xf] %vm1320, %v1241
        %1327 = vst.msk [vmem:[#allocation2 + $0x18] sm:$0xf] %vm1320, %v1243
        %1328 = vst.msk [vmem:[#allocation2 + $0x1c] sm:$0xf] %vm1320, %v1245
        %1329 = vst.msk [vmem:[#allocation2 + $0x20] sm:$0xf] %vm1320, %v1247
        %1330 = vst.msk [vmem:[#allocation2 + $0x24] sm:$0xf] %vm1320, %v1249
        %1331 = vst.msk [vmem:[#allocation2 + $0x28] sm:$0xf] %vm1320, %v1251
        %1332 = vst.msk [vmem:[#allocation2 + $0x2c] sm:$0xf] %vm1320, %v1253
        %1333 = vst.msk [vmem:[#allocation2 + $0x30] sm:$0xf] %vm1320, %v1255
        %1334 = vst.msk [vmem:[#allocation2 + $0x34] sm:$0xf] %vm1320, %v1257
        %1335 = vst.msk [vmem:[#allocation2 + $0x38] sm:$0xf] %vm1320, %v1259
        %1336 = vst.msk [vmem:[#allocation2 + $0x3c] sm:$0xf] %vm1320, %v1261
        %1337 = vst.msk [vmem:[#allocation2 + $0x40] sm:$0xf] %vm1320, %v1263
        %1338 = vst.msk [vmem:[#allocation2 + $0x44] sm:$0xf] %vm1320, %v1265
        %1339 = vst.msk [vmem:[#allocation2 + $0x48] sm:$0xf] %vm1320, %v1267
        %1340 = vst.msk [vmem:[#allocation2 + $0x4c] sm:$0xf] %vm1320, %v1269
        %1341 = vst.msk [vmem:[#allocation2 + $0x50] sm:$0xf] %vm1320, %v1271
        %1342 = vst.msk [vmem:[#allocation2 + $0x54] sm:$0xf] %vm1320, %v1273
        %1343 = vst.msk [vmem:[#allocation2 + $0x58] sm:$0xf] %vm1320, %v1275
        %1344 = vst.msk [vmem:[#allocation2 + $0x5c] sm:$0xf] %vm1320, %v1277
        %1345 = vst.msk [vmem:[#allocation2 + $0x60] sm:$0xf] %vm1320, %v1279
        %1346 = vst.msk [vmem:[#allocation2 + $0x64] sm:$0xf] %vm1320, %v1281
        %1347 = vst.msk [vmem:[#allocation2 + $0x68] sm:$0xf] %vm1320, %v1283
        %1348 = vst.msk [vmem:[#allocation2 + $0x6c] sm:$0xf] %vm1320, %v1285
        %1349 = vst.msk [vmem:[#allocation2 + $0x70] sm:$0xf] %vm1320, %v1287
        %1350 = vst.msk [vmem:[#allocation2 + $0x74] sm:$0xf] %vm1320, %v1289
        %v1351 = vld [vmem:[%s1169] sm:$0xf]
        %v1352 = vld [vmem:[%s1169 + $0x4] sm:$0xf]
        %v1353 = vld [vmem:[%s1169 + $0x8] sm:$0xf]
        %v1354 = vld [vmem:[%s1169 + $0xc] sm:$0x1]
        %v1355 = vld [vmem:[%s1169 + $0x10] sm:$0xf]
        %v1356 = vld [vmem:[%s1169 + $0x14] sm:$0xf]
        %v1357 = vld [vmem:[%s1169 + $0x18] sm:$0xf]
        %v1358 = vld [vmem:[%s1169 + $0x1c] sm:$0x1]
        %v1359 = vld [vmem:[%s1169 + $0x20] sm:$0xf]
        %v1360 = vld [vmem:[%s1169 + $0x24] sm:$0xf]
        %v1361 = vld [vmem:[%s1169 + $0x28] sm:$0xf]
        %v1362 = vld [vmem:[%s1169 + $0x2c] sm:$0x1]
        %v1363 = vld [vmem:[%s1169 + $0x30] sm:$0xf]
        %v1364 = vld [vmem:[%s1169 + $0x34] sm:$0xf]
        %v1365 = vld [vmem:[%s1169 + $0x38] sm:$0xf]
        %v1366 = vld [vmem:[%s1169 + $0x3c] sm:$0x1]
        %v1367 = vld [vmem:[%s1169 + $0x40] sm:$0xf]
        %v1368 = vld [vmem:[%s1169 + $0x44] sm:$0xf]
        %v1369 = vld [vmem:[%s1169 + $0x48] sm:$0xf]
        %v1370 = vld [vmem:[%s1169 + $0x4c] sm:$0x1]
        %v1371 = vld [vmem:[%s1169 + $0x50] sm:$0xf]
        %v1372 = vld [vmem:[%s1169 + $0x54] sm:$0xf]
        %v1373 = vld [vmem:[%s1169 + $0x58] sm:$0xf]
        %v1374 = vld [vmem:[%s1169 + $0x5c] sm:$0x1]
        %v1375 = vld [vmem:[%s1169 + $0x60] sm:$0xf]
        %v1376 = vld [vmem:[%s1169 + $0x64] sm:$0xf]
        %v1377 = vld [vmem:[%s1169 + $0x68] sm:$0xf]
        %v1378 = vld [vmem:[%s1169 + $0x6c] sm:$0x1]
        %v1379 = vld [vmem:[%s1169 + $0x70] sm:$0xf]
        %v1380 = vld [vmem:[%s1169 + $0x74] sm:$0xf]
        %v1381 = vld [vmem:[%s1169 + $0x78] sm:$0xf]
        %v1382 = vld [vmem:[%s1169 + $0x7c] sm:$0x1]
        %v1383 = vld [vmem:[%s1169 + $0x80] sm:$0xf]
        %v1384 = vld [vmem:[%s1169 + $0x84] sm:$0xf]
        %v1385 = vld [vmem:[%s1169 + $0x88] sm:$0xf]
        %v1386 = vld [vmem:[%s1169 + $0x8c] sm:$0x1]
        %v1387 = vld [vmem:[%s1169 + $0x90] sm:$0xf]
        %v1388 = vld [vmem:[%s1169 + $0x94] sm:$0xf]
        %v1389 = vld [vmem:[%s1169 + $0x98] sm:$0xf]
        %v1390 = vld [vmem:[%s1169 + $0x9c] sm:$0x1]
        %v1392 = vshrl.u32 %v1351, 16
        %v1394 = vrot.slane %v1392, 4
        %v1395 = vshll.u32 %v1351, 16
        %v1397 = vrot.slane %v1395, 5
        %v1398 = vor.u32 %v1394, %v1397
        %v1399 = vrot.slane %v1398, 4
        %v1401 = vshll.u32 %v1352, 16
        %v1403 = vrot.slane %v1401, 5
        %v1404 = vsel %vm400, %v1399, %v1403
        %v1405 = vshrl.u32 %v1352, 16
        %v1407 = vrot.slane %v1405, 4
        %v1408 = vor.u32 %v1407, %v1403
        %v1409 = vrot.slane %v1408, 4
        %v1411 = vshll.u32 %v1353, 16
        %v1413 = vrot.slane %v1411, 5
        %v1414 = vsel %vm400, %v1409, %v1413
        %v1415 = vshrl.u32 %v1353, 16
        %v1417 = vrot.slane %v1415, 4
        %v1418 = vor.u32 %v1417, %v1413
        %v1419 = vrot.slane %v1418, 4
        %v1421 = vshll.u32 %v1354, 16
        %v1423 = vrot.slane %v1421, 5
        %v1424 = vsel %vm400, %v1419, %v1423
        %v1426 = vshrl.u32 %v1355, 16
        %v1428 = vrot.slane %v1426, 4
        %v1429 = vshll.u32 %v1355, 16
        %v1431 = vrot.slane %v1429, 5
        %v1432 = vor.u32 %v1428, %v1431
        %v1433 = vrot.slane %v1432, 4
        %v1435 = vshll.u32 %v1356, 16
        %v1437 = vrot.slane %v1435, 5
        %v1438 = vsel %vm400, %v1433, %v1437
        %v1439 = vshrl.u32 %v1356, 16
        %v1441 = vrot.slane %v1439, 4
        %v1442 = vor.u32 %v1441, %v1437
        %v1443 = vrot.slane %v1442, 4
        %v1445 = vshll.u32 %v1357, 16
        %v1447 = vrot.slane %v1445, 5
        %v1448 = vsel %vm400, %v1443, %v1447
        %v1449 = vshrl.u32 %v1357, 16
        %v1451 = vrot.slane %v1449, 4
        %v1452 = vor.u32 %v1451, %v1447
        %v1453 = vrot.slane %v1452, 4
        %v1455 = vshll.u32 %v1358, 16
        %v1457 = vrot.slane %v1455, 5
        %v1458 = vsel %vm400, %v1453, %v1457
        %v1460 = vshrl.u32 %v1359, 16
        %v1462 = vrot.slane %v1460, 4
        %v1463 = vshll.u32 %v1359, 16
        %v1465 = vrot.slane %v1463, 5
        %v1466 = vor.u32 %v1462, %v1465
        %v1467 = vrot.slane %v1466, 4
        %v1469 = vshll.u32 %v1360, 16
        %v1471 = vrot.slane %v1469, 5
        %v1472 = vsel %vm400, %v1467, %v1471
        %v1473 = vshrl.u32 %v1360, 16
        %v1475 = vrot.slane %v1473, 4
        %v1476 = vor.u32 %v1475, %v1471
        %v1477 = vrot.slane %v1476, 4
        %v1479 = vshll.u32 %v1361, 16
        %v1481 = vrot.slane %v1479, 5
        %v1482 = vsel %vm400, %v1477, %v1481
        %v1483 = vshrl.u32 %v1361, 16
        %v1485 = vrot.slane %v1483, 4
        %v1486 = vor.u32 %v1485, %v1481
        %v1487 = vrot.slane %v1486, 4
        %v1489 = vshll.u32 %v1362, 16
        %v1491 = vrot.slane %v1489, 5
        %v1492 = vsel %vm400, %v1487, %v1491
        %v1494 = vshrl.u32 %v1363, 16
        %v1496 = vrot.slane %v1494, 4
        %v1497 = vshll.u32 %v1363, 16
        %v1499 = vrot.slane %v1497, 5
        %v1500 = vor.u32 %v1496, %v1499
        %v1501 = vrot.slane %v1500, 4
        %v1503 = vshll.u32 %v1364, 16
        %v1505 = vrot.slane %v1503, 5
        %v1506 = vsel %vm400, %v1501, %v1505
        %v1507 = vshrl.u32 %v1364, 16
        %v1509 = vrot.slane %v1507, 4
        %v1510 = vor.u32 %v1509, %v1505
        %v1511 = vrot.slane %v1510, 4
        %v1513 = vshll.u32 %v1365, 16
        %v1515 = vrot.slane %v1513, 5
        %v1516 = vsel %vm400, %v1511, %v1515
        %v1517 = vshrl.u32 %v1365, 16
        %v1519 = vrot.slane %v1517, 4
        %v1520 = vor.u32 %v1519, %v1515
        %v1521 = vrot.slane %v1520, 4
        %v1523 = vshll.u32 %v1366, 16
        %v1525 = vrot.slane %v1523, 5
        %v1526 = vsel %vm400, %v1521, %v1525
        %v1528 = vshrl.u32 %v1367, 16
        %v1530 = vrot.slane %v1528, 4
        %v1531 = vshll.u32 %v1367, 16
        %v1533 = vrot.slane %v1531, 5
        %v1534 = vor.u32 %v1530, %v1533
        %v1535 = vrot.slane %v1534, 4
        %v1537 = vshll.u32 %v1368, 16
        %v1539 = vrot.slane %v1537, 5
        %v1540 = vsel %vm400, %v1535, %v1539
        %v1541 = vshrl.u32 %v1368, 16
        %v1543 = vrot.slane %v1541, 4
        %v1544 = vor.u32 %v1543, %v1539
        %v1545 = vrot.slane %v1544, 4
        %v1547 = vshll.u32 %v1369, 16
        %v1549 = vrot.slane %v1547, 5
        %v1550 = vsel %vm400, %v1545, %v1549
        %v1551 = vshrl.u32 %v1369, 16
        %v1553 = vrot.slane %v1551, 4
        %v1554 = vor.u32 %v1553, %v1549
        %v1555 = vrot.slane %v1554, 4
        %v1557 = vshll.u32 %v1370, 16
        %v1559 = vrot.slane %v1557, 5
        %v1560 = vsel %vm400, %v1555, %v1559
        %v1562 = vshrl.u32 %v1371, 16
        %v1564 = vrot.slane %v1562, 4
        %v1565 = vshll.u32 %v1371, 16
        %v1567 = vrot.slane %v1565, 5
        %v1568 = vor.u32 %v1564, %v1567
        %v1569 = vrot.slane %v1568, 4
        %v1571 = vshll.u32 %v1372, 16
        %v1573 = vrot.slane %v1571, 5
        %v1574 = vsel %vm400, %v1569, %v1573
        %v1575 = vshrl.u32 %v1372, 16
        %v1577 = vrot.slane %v1575, 4
        %v1578 = vor.u32 %v1577, %v1573
        %v1579 = vrot.slane %v1578, 4
        %v1581 = vshll.u32 %v1373, 16
        %v1583 = vrot.slane %v1581, 5
        %v1584 = vsel %vm400, %v1579, %v1583
        %v1585 = vshrl.u32 %v1373, 16
        %v1587 = vrot.slane %v1585, 4
        %v1588 = vor.u32 %v1587, %v1583
        %v1589 = vrot.slane %v1588, 4
        %v1591 = vshll.u32 %v1374, 16
        %v1593 = vrot.slane %v1591, 5
        %v1594 = vsel %vm400, %v1589, %v1593
        %v1596 = vshrl.u32 %v1375, 16
        %v1598 = vrot.slane %v1596, 4
        %v1599 = vshll.u32 %v1375, 16
        %v1601 = vrot.slane %v1599, 5
        %v1602 = vor.u32 %v1598, %v1601
        %v1603 = vrot.slane %v1602, 4
        %v1605 = vshll.u32 %v1376, 16
        %v1607 = vrot.slane %v1605, 5
        %v1608 = vsel %vm400, %v1603, %v1607
        %v1609 = vshrl.u32 %v1376, 16
        %v1611 = vrot.slane %v1609, 4
        %v1612 = vor.u32 %v1611, %v1607
        %v1613 = vrot.slane %v1612, 4
        %v1615 = vshll.u32 %v1377, 16
        %v1617 = vrot.slane %v1615, 5
        %v1618 = vsel %vm400, %v1613, %v1617
        %v1619 = vshrl.u32 %v1377, 16
        %v1621 = vrot.slane %v1619, 4
        %v1622 = vor.u32 %v1621, %v1617
        %v1623 = vrot.slane %v1622, 4
        %v1625 = vshll.u32 %v1378, 16
        %v1627 = vrot.slane %v1625, 5
        %v1628 = vsel %vm400, %v1623, %v1627
        %v1630 = vshrl.u32 %v1379, 16
        %v1632 = vrot.slane %v1630, 4
        %v1633 = vshll.u32 %v1379, 16
        %v1635 = vrot.slane %v1633, 5
        %v1636 = vor.u32 %v1632, %v1635
        %v1637 = vrot.slane %v1636, 4
        %v1639 = vshll.u32 %v1380, 16
        %v1641 = vrot.slane %v1639, 5
        %v1642 = vsel %vm400, %v1637, %v1641
        %v1643 = vshrl.u32 %v1380, 16
        %v1645 = vrot.slane %v1643, 4
        %v1646 = vor.u32 %v1645, %v1641
        %v1647 = vrot.slane %v1646, 4
        %v1649 = vshll.u32 %v1381, 16
        %v1651 = vrot.slane %v1649, 5
        %v1652 = vsel %vm400, %v1647, %v1651
        %v1653 = vshrl.u32 %v1381, 16
        %v1655 = vrot.slane %v1653, 4
        %v1656 = vor.u32 %v1655, %v1651
        %v1657 = vrot.slane %v1656, 4
        %v1659 = vshll.u32 %v1382, 16
        %v1661 = vrot.slane %v1659, 5
        %v1662 = vsel %vm400, %v1657, %v1661
        %v1664 = vshrl.u32 %v1383, 16
        %v1666 = vrot.slane %v1664, 4
        %v1667 = vshll.u32 %v1383, 16
        %v1669 = vrot.slane %v1667, 5
        %v1670 = vor.u32 %v1666, %v1669
        %v1671 = vrot.slane %v1670, 4
        %v1673 = vshll.u32 %v1384, 16
        %v1675 = vrot.slane %v1673, 5
        %v1676 = vsel %vm400, %v1671, %v1675
        %v1677 = vshrl.u32 %v1384, 16
        %v1679 = vrot.slane %v1677, 4
        %v1680 = vor.u32 %v1679, %v1675
        %v1681 = vrot.slane %v1680, 4
        %v1683 = vshll.u32 %v1385, 16
        %v1685 = vrot.slane %v1683, 5
        %v1686 = vsel %vm400, %v1681, %v1685
        %v1687 = vshrl.u32 %v1385, 16
        %v1689 = vrot.slane %v1687, 4
        %v1690 = vor.u32 %v1689, %v1685
        %v1691 = vrot.slane %v1690, 4
        %v1693 = vshll.u32 %v1386, 16
        %v1695 = vrot.slane %v1693, 5
        %v1696 = vsel %vm400, %v1691, %v1695
        %v1698 = vshrl.u32 %v1387, 16
        %v1700 = vrot.slane %v1698, 4
        %v1701 = vshll.u32 %v1387, 16
        %v1703 = vrot.slane %v1701, 5
        %v1704 = vor.u32 %v1700, %v1703
        %v1705 = vrot.slane %v1704, 4
        %v1707 = vshll.u32 %v1388, 16
        %v1709 = vrot.slane %v1707, 5
        %v1710 = vsel %vm400, %v1705, %v1709
        %v1711 = vshrl.u32 %v1388, 16
        %v1713 = vrot.slane %v1711, 4
        %v1714 = vor.u32 %v1713, %v1709
        %v1715 = vrot.slane %v1714, 4
        %v1717 = vshll.u32 %v1389, 16
        %v1719 = vrot.slane %v1717, 5
        %v1720 = vsel %vm400, %v1715, %v1719
        %v1721 = vshrl.u32 %v1389, 16
        %v1723 = vrot.slane %v1721, 4
        %v1724 = vor.u32 %v1723, %v1719
        %v1725 = vrot.slane %v1724, 4
        %v1727 = vshll.u32 %v1390, 16
        %v1729 = vrot.slane %v1727, 5
        %v1730 = vsel %vm400, %v1725, %v1729
        %1731 = vrot.lane.b32.xlu0 %v1404, 16
        %v1732 = vpop.permute.xlu0 %1731
        %1733 = vrot.lane.b32.xlu0 %v1414, 16
        %v1734 = vpop.permute.xlu0 %1733
        %1735 = vrot.lane.b32.xlu0 %v1424, 16
        %v1736 = vpop.permute.xlu0 %1735
        %1737 = vrot.lane.b32.xlu0 %v1438, 16
        %v1738 = vpop.permute.xlu0 %1737
        %1739 = vrot.lane.b32.xlu0 %v1448, 16
        %v1740 = vpop.permute.xlu0 %1739
        %1741 = vrot.lane.b32.xlu0 %v1458, 16
        %v1742 = vpop.permute.xlu0 %1741
        %1743 = vrot.lane.b32.xlu0 %v1472, 16
        %v1744 = vpop.permute.xlu0 %1743
        %1745 = vrot.lane.b32.xlu0 %v1482, 16
        %v1746 = vpop.permute.xlu0 %1745
        %1747 = vrot.lane.b32.xlu0 %v1492, 16
        %v1748 = vpop.permute.xlu0 %1747
        %1749 = vrot.lane.b32.xlu0 %v1506, 16
        %v1750 = vpop.permute.xlu0 %1749
        %1751 = vrot.lane.b32.xlu0 %v1516, 16
        %v1752 = vpop.permute.xlu0 %1751
        %1753 = vrot.lane.b32.xlu0 %v1526, 16
        %v1754 = vpop.permute.xlu0 %1753
        %1755 = vrot.lane.b32.xlu0 %v1540, 16
        %v1756 = vpop.permute.xlu0 %1755
        %1757 = vrot.lane.b32.xlu0 %v1550, 16
        %v1758 = vpop.permute.xlu0 %1757
        %1759 = vrot.lane.b32.xlu0 %v1560, 16
        %v1760 = vpop.permute.xlu0 %1759
        %1761 = vrot.lane.b32.xlu0 %v1574, 16
        %v1762 = vpop.permute.xlu0 %1761
        %1763 = vrot.lane.b32.xlu0 %v1584, 16
        %v1764 = vpop.permute.xlu0 %1763
        %1765 = vrot.lane.b32.xlu0 %v1594, 16
        %v1766 = vpop.permute.xlu0 %1765
        %1767 = vrot.lane.b32.xlu0 %v1608, 16
        %v1768 = vpop.permute.xlu0 %1767
        %1769 = vrot.lane.b32.xlu0 %v1618, 16
        %v1770 = vpop.permute.xlu0 %1769
        %1771 = vrot.lane.b32.xlu0 %v1628, 16
        %v1772 = vpop.permute.xlu0 %1771
        %1773 = vrot.lane.b32.xlu0 %v1642, 16
        %v1774 = vpop.permute.xlu0 %1773
        %1775 = vrot.lane.b32.xlu0 %v1652, 16
        %v1776 = vpop.permute.xlu0 %1775
        %1777 = vrot.lane.b32.xlu0 %v1662, 16
        %v1778 = vpop.permute.xlu0 %1777
        %1779 = vrot.lane.b32.xlu0 %v1676, 16
        %v1780 = vpop.permute.xlu0 %1779
        %1781 = vrot.lane.b32.xlu0 %v1686, 16
        %v1782 = vpop.permute.xlu0 %1781
        %1783 = vrot.lane.b32.xlu0 %v1696, 16
        %v1784 = vpop.permute.xlu0 %1783
        %1785 = vrot.lane.b32.xlu0 %v1710, 16
        %v1786 = vpop.permute.xlu0 %1785
        %1787 = vrot.lane.b32.xlu0 %v1720, 16
        %v1788 = vpop.permute.xlu0 %1787
        %1789 = vrot.lane.b32.xlu0 %v1730, 16
        %v1790 = vpop.permute.xlu0 %1789
        %vm1821 = vcmask 158848
        %1822 = vst.msk [vmem:[#allocation2] sm:$0xf] %vm1821, %v1732
        %1823 = vst.msk [vmem:[#allocation2 + $0x4] sm:$0xf] %vm1821, %v1734
        %1824 = vst.msk [vmem:[#allocation2 + $0x8] sm:$0xf] %vm1821, %v1736
        %1825 = vst.msk [vmem:[#allocation2 + $0xc] sm:$0xf] %vm1821, %v1738
        %1826 = vst.msk [vmem:[#allocation2 + $0x10] sm:$0xf] %vm1821, %v1740
        %1827 = vst.msk [vmem:[#allocation2 + $0x14] sm:$0xf] %vm1821, %v1742
        %1828 = vst.msk [vmem:[#allocation2 + $0x18] sm:$0xf] %vm1821, %v1744
        %1829 = vst.msk [vmem:[#allocation2 + $0x1c] sm:$0xf] %vm1821, %v1746
        %1830 = vst.msk [vmem:[#allocation2 + $0x20] sm:$0xf] %vm1821, %v1748
        %1831 = vst.msk [vmem:[#allocation2 + $0x24] sm:$0xf] %vm1821, %v1750
        %1832 = vst.msk [vmem:[#allocation2 + $0x28] sm:$0xf] %vm1821, %v1752
        %1833 = vst.msk [vmem:[#allocation2 + $0x2c] sm:$0xf] %vm1821, %v1754
        %1834 = vst.msk [vmem:[#allocation2 + $0x30] sm:$0xf] %vm1821, %v1756
        %1835 = vst.msk [vmem:[#allocation2 + $0x34] sm:$0xf] %vm1821, %v1758
        %1836 = vst.msk [vmem:[#allocation2 + $0x38] sm:$0xf] %vm1821, %v1760
        %1837 = vst.msk [vmem:[#allocation2 + $0x3c] sm:$0xf] %vm1821, %v1762
        %1838 = vst.msk [vmem:[#allocation2 + $0x40] sm:$0xf] %vm1821, %v1764
        %1839 = vst.msk [vmem:[#allocation2 + $0x44] sm:$0xf] %vm1821, %v1766
        %1840 = vst.msk [vmem:[#allocation2 + $0x48] sm:$0xf] %vm1821, %v1768
        %1841 = vst.msk [vmem:[#allocation2 + $0x4c] sm:$0xf] %vm1821, %v1770
        %1842 = vst.msk [vmem:[#allocation2 + $0x50] sm:$0xf] %vm1821, %v1772
        %1843 = vst.msk [vmem:[#allocation2 + $0x54] sm:$0xf] %vm1821, %v1774
        %1844 = vst.msk [vmem:[#allocation2 + $0x58] sm:$0xf] %vm1821, %v1776
        %1845 = vst.msk [vmem:[#allocation2 + $0x5c] sm:$0xf] %vm1821, %v1778
        %1846 = vst.msk [vmem:[#allocation2 + $0x60] sm:$0xf] %vm1821, %v1780
        %1847 = vst.msk [vmem:[#allocation2 + $0x64] sm:$0xf] %vm1821, %v1782
        %1848 = vst.msk [vmem:[#allocation2 + $0x68] sm:$0xf] %vm1821, %v1784
        %1849 = vst.msk [vmem:[#allocation2 + $0x6c] sm:$0xf] %vm1821, %v1786
        %1850 = vst.msk [vmem:[#allocation2 + $0x70] sm:$0xf] %vm1821, %v1788
        %1851 = vst.msk [vmem:[#allocation2 + $0x74] sm:$0xf] %vm1821, %v1790
        %v1852 = vld [vmem:[%s1169] sm:$0xe]
        %v1853 = vld [vmem:[%s1169 + $0x4] sm:$0xf]
        %v1854 = vld [vmem:[%s1169 + $0x8] sm:$0xf]
        %v1855 = vld [vmem:[%s1169 + $0xc] sm:$0x1]
        %v1856 = vld [vmem:[%s1169 + $0x10] sm:$0xe]
        %v1857 = vld [vmem:[%s1169 + $0x14] sm:$0xf]
        %v1858 = vld [vmem:[%s1169 + $0x18] sm:$0xf]
        %v1859 = vld [vmem:[%s1169 + $0x1c] sm:$0x1]
        %v1860 = vld [vmem:[%s1169 + $0x20] sm:$0xe]
        %v1861 = vld [vmem:[%s1169 + $0x24] sm:$0xf]
        %v1862 = vld [vmem:[%s1169 + $0x28] sm:$0xf]
        %v1863 = vld [vmem:[%s1169 + $0x2c] sm:$0x1]
        %v1864 = vld [vmem:[%s1169 + $0x30] sm:$0xe]
        %v1865 = vld [vmem:[%s1169 + $0x34] sm:$0xf]
        %v1866 = vld [vmem:[%s1169 + $0x38] sm:$0xf]
        %v1867 = vld [vmem:[%s1169 + $0x3c] sm:$0x1]
        %v1868 = vld [vmem:[%s1169 + $0x40] sm:$0xe]
        %v1869 = vld [vmem:[%s1169 + $0x44] sm:$0xf]
        %v1870 = vld [vmem:[%s1169 + $0x48] sm:$0xf]
        %v1871 = vld [vmem:[%s1169 + $0x4c] sm:$0x1]
        %v1872 = vld [vmem:[%s1169 + $0x50] sm:$0xe]
        %v1873 = vld [vmem:[%s1169 + $0x54] sm:$0xf]
        %v1874 = vld [vmem:[%s1169 + $0x58] sm:$0xf]
        %v1875 = vld [vmem:[%s1169 + $0x5c] sm:$0x1]
        %v1876 = vld [vmem:[%s1169 + $0x60] sm:$0xe]
        %v1877 = vld [vmem:[%s1169 + $0x64] sm:$0xf]
        %v1878 = vld [vmem:[%s1169 + $0x68] sm:$0xf]
        %v1879 = vld [vmem:[%s1169 + $0x6c] sm:$0x1]
        %v1880 = vld [vmem:[%s1169 + $0x70] sm:$0xe]
        %v1881 = vld [vmem:[%s1169 + $0x74] sm:$0xf]
        %v1882 = vld [vmem:[%s1169 + $0x78] sm:$0xf]
        %v1883 = vld [vmem:[%s1169 + $0x7c] sm:$0x1]
        %v1884 = vld [vmem:[%s1169 + $0x80] sm:$0xe]
        %v1885 = vld [vmem:[%s1169 + $0x84] sm:$0xf]
        %v1886 = vld [vmem:[%s1169 + $0x88] sm:$0xf]
        %v1887 = vld [vmem:[%s1169 + $0x8c] sm:$0x1]
        %v1888 = vld [vmem:[%s1169 + $0x90] sm:$0xe]
        %v1889 = vld [vmem:[%s1169 + $0x94] sm:$0xf]
        %v1890 = vld [vmem:[%s1169 + $0x98] sm:$0xf]
        %v1891 = vld [vmem:[%s1169 + $0x9c] sm:$0x1]
        %v1932 = vrot.slane %v1852, 5
        %v1933 = vrot.slane %v1932, 4
        %v1934 = vrot.slane %v1853, 5
        %v1935 = vsel %vm944, %v1933, %v1934
        %v1936 = vrot.slane %v1934, 4
        %v1937 = vrot.slane %v1854, 5
        %v1938 = vsel %vm944, %v1936, %v1937
        %v1939 = vrot.slane %v1937, 4
        %v1940 = vrot.slane %v1855, 5
        %v1941 = vsel %vm944, %v1939, %v1940
        %v1942 = vrot.slane %v1856, 5
        %v1943 = vrot.slane %v1942, 4
        %v1944 = vrot.slane %v1857, 5
        %v1945 = vsel %vm944, %v1943, %v1944
        %v1946 = vrot.slane %v1944, 4
        %v1947 = vrot.slane %v1858, 5
        %v1948 = vsel %vm944, %v1946, %v1947
        %v1949 = vrot.slane %v1947, 4
        %v1950 = vrot.slane %v1859, 5
        %v1951 = vsel %vm944, %v1949, %v1950
        %v1952 = vrot.slane %v1860, 5
        %v1953 = vrot.slane %v1952, 4
        %v1954 = vrot.slane %v1861, 5
        %v1955 = vsel %vm944, %v1953, %v1954
        %v1956 = vrot.slane %v1954, 4
        %v1957 = vrot.slane %v1862, 5
        %v1958 = vsel %vm944, %v1956, %v1957
        %v1959 = vrot.slane %v1957, 4
        %v1960 = vrot.slane %v1863, 5
        %v1961 = vsel %vm944, %v1959, %v1960
        %v1962 = vrot.slane %v1864, 5
        %v1963 = vrot.slane %v1962, 4
        %v1964 = vrot.slane %v1865, 5
        %v1965 = vsel %vm944, %v1963, %v1964
        %v1966 = vrot.slane %v1964, 4
        %v1967 = vrot.slane %v1866, 5
        %v1968 = vsel %vm944, %v1966, %v1967
        %v1969 = vrot.slane %v1967, 4
        %v1970 = vrot.slane %v1867, 5
        %v1971 = vsel %vm944, %v1969, %v1970
        %v1972 = vrot.slane %v1868, 5
        %v1973 = vrot.slane %v1972, 4
        %v1974 = vrot.slane %v1869, 5
        %v1975 = vsel %vm944, %v1973, %v1974
        %v1976 = vrot.slane %v1974, 4
        %v1977 = vrot.slane %v1870, 5
        %v1978 = vsel %vm944, %v1976, %v1977
        %v1979 = vrot.slane %v1977, 4
        %v1980 = vrot.slane %v1871, 5
        %v1981 = vsel %vm944, %v1979, %v1980
        %v1982 = vrot.slane %v1872, 5
        %v1983 = vrot.slane %v1982, 4
        %v1984 = vrot.slane %v1873, 5
        %v1985 = vsel %vm944, %v1983, %v1984
        %v1986 = vrot.slane %v1984, 4
        %v1987 = vrot.slane %v1874, 5
        %v1988 = vsel %vm944, %v1986, %v1987
        %v1989 = vrot.slane %v1987, 4
        %v1990 = vrot.slane %v1875, 5
        %v1991 = vsel %vm944, %v1989, %v1990
        %v1992 = vrot.slane %v1876, 5
        %v1993 = vrot.slane %v1992, 4
        %v1994 = vrot.slane %v1877, 5
        %v1995 = vsel %vm944, %v1993, %v1994
        %v1996 = vrot.slane %v1994, 4
        %v1997 = vrot.slane %v1878, 5
        %v1998 = vsel %vm944, %v1996, %v1997
        %v1999 = vrot.slane %v1997, 4
        %v2000 = vrot.slane %v1879, 5
        %v2001 = vsel %vm944, %v1999, %v2000
        %v2002 = vrot.slane %v1880, 5
        %v2003 = vrot.slane %v2002, 4
        %v2004 = vrot.slane %v1881, 5
        %v2005 = vsel %vm944, %v2003, %v2004
        %v2006 = vrot.slane %v2004, 4
        %v2007 = vrot.slane %v1882, 5
        %v2008 = vsel %vm944, %v2006, %v2007
        %v2009 = vrot.slane %v2007, 4
        %v2010 = vrot.slane %v1883, 5
        %v2011 = vsel %vm944, %v2009, %v2010
        %v2012 = vrot.slane %v1884, 5
        %v2013 = vrot.slane %v2012, 4
        %v2014 = vrot.slane %v1885, 5
        %v2015 = vsel %vm944, %v2013, %v2014
        %v2016 = vrot.slane %v2014, 4
        %v2017 = vrot.slane %v1886, 5
        %v2018 = vsel %vm944, %v2016, %v2017
        %v2019 = vrot.slane %v2017, 4
        %v2020 = vrot.slane %v1887, 5
        %v2021 = vsel %vm944, %v2019, %v2020
        %v2022 = vrot.slane %v1888, 5
        %v2023 = vrot.slane %v2022, 4
        %v2024 = vrot.slane %v1889, 5
        %v2025 = vsel %vm944, %v2023, %v2024
        %v2026 = vrot.slane %v2024, 4
        %v2027 = vrot.slane %v1890, 5
        %v2028 = vsel %vm944, %v2026, %v2027
        %v2029 = vrot.slane %v2027, 4
        %v2030 = vrot.slane %v1891, 5
        %v2031 = vsel %vm944, %v2029, %v2030
        %2032 = vrot.lane.b32.xlu0 %v1935, 20
        %v2033 = vpop.permute.xlu0 %2032
        %2034 = vrot.lane.b32.xlu0 %v1938, 20
        %v2035 = vpop.permute.xlu0 %2034
        %2036 = vrot.lane.b32.xlu0 %v1941, 20
        %v2037 = vpop.permute.xlu0 %2036
        %2038 = vrot.lane.b32.xlu0 %v1945, 20
        %v2039 = vpop.permute.xlu0 %2038
        %2040 = vrot.lane.b32.xlu0 %v1948, 20
        %v2041 = vpop.permute.xlu0 %2040
        %2042 = vrot.lane.b32.xlu0 %v1951, 20
        %v2043 = vpop.permute.xlu0 %2042
        %2044 = vrot.lane.b32.xlu0 %v1955, 20
        %v2045 = vpop.permute.xlu0 %2044
        %2046 = vrot.lane.b32.xlu0 %v1958, 20
        %v2047 = vpop.permute.xlu0 %2046
        %2048 = vrot.lane.b32.xlu0 %v1961, 20
        %v2049 = vpop.permute.xlu0 %2048
        %2050 = vrot.lane.b32.xlu0 %v1965, 20
        %v2051 = vpop.permute.xlu0 %2050
        %2052 = vrot.lane.b32.xlu0 %v1968, 20
        %v2053 = vpop.permute.xlu0 %2052
        %2054 = vrot.lane.b32.xlu0 %v1971, 20
        %v2055 = vpop.permute.xlu0 %2054
        %2056 = vrot.lane.b32.xlu0 %v1975, 20
        %v2057 = vpop.permute.xlu0 %2056
        %2058 = vrot.lane.b32.xlu0 %v1978, 20
        %v2059 = vpop.permute.xlu0 %2058
        %2060 = vrot.lane.b32.xlu0 %v1981, 20
        %v2061 = vpop.permute.xlu0 %2060
        %2062 = vrot.lane.b32.xlu0 %v1985, 20
        %v2063 = vpop.permute.xlu0 %2062
        %2064 = vrot.lane.b32.xlu0 %v1988, 20
        %v2065 = vpop.permute.xlu0 %2064
        %2066 = vrot.lane.b32.xlu0 %v1991, 20
        %v2067 = vpop.permute.xlu0 %2066
        %2068 = vrot.lane.b32.xlu0 %v1995, 20
        %v2069 = vpop.permute.xlu0 %2068
        %2070 = vrot.lane.b32.xlu0 %v1998, 20
        %v2071 = vpop.permute.xlu0 %2070
        %2072 = vrot.lane.b32.xlu0 %v2001, 20
        %v2073 = vpop.permute.xlu0 %2072
        %2074 = vrot.lane.b32.xlu0 %v2005, 20
        %v2075 = vpop.permute.xlu0 %2074
        %2076 = vrot.lane.b32.xlu0 %v2008, 20
        %v2077 = vpop.permute.xlu0 %2076
        %2078 = vrot.lane.b32.xlu0 %v2011, 20
        %v2079 = vpop.permute.xlu0 %2078
        %2080 = vrot.lane.b32.xlu0 %v2015, 20
        %v2081 = vpop.permute.xlu0 %2080
        %2082 = vrot.lane.b32.xlu0 %v2018, 20
        %v2083 = vpop.permute.xlu0 %2082
        %2084 = vrot.lane.b32.xlu0 %v2021, 20
        %v2085 = vpop.permute.xlu0 %2084
        %2086 = vrot.lane.b32.xlu0 %v2025, 20
        %v2087 = vpop.permute.xlu0 %2086
        %2088 = vrot.lane.b32.xlu0 %v2028, 20
        %v2089 = vpop.permute.xlu0 %2088
        %2090 = vrot.lane.b32.xlu0 %v2031, 20
        %v2091 = vpop.permute.xlu0 %2090
        %vm2122 = vcmask 191648
        %2123 = vst.msk [vmem:[#allocation2] sm:$0xf] %vm2122, %v2033
        %2124 = vst.msk [vmem:[#allocation2 + $0x4] sm:$0xf] %vm2122, %v2035
        %2125 = vst.msk [vmem:[#allocation2 + $0x8] sm:$0xf] %vm2122, %v2037
        %2126 = vst.msk [vmem:[#allocation2 + $0xc] sm:$0xf] %vm2122, %v2039
        %2127 = vst.msk [vmem:[#allocation2 + $0x10] sm:$0xf] %vm2122, %v2041
        %2128 = vst.msk [vmem:[#allocation2 + $0x14] sm:$0xf] %vm2122, %v2043
        %2129 = vst.msk [vmem:[#allocation2 + $0x18] sm:$0xf] %vm2122, %v2045
        %2130 = vst.msk [vmem:[#allocation2 + $0x1c] sm:$0xf] %vm2122, %v2047
        %2131 = vst.msk [vmem:[#allocation2 + $0x20] sm:$0xf] %vm2122, %v2049
        %2132 = vst.msk [vmem:[#allocation2 + $0x24] sm:$0xf] %vm2122, %v2051
        %2133 = vst.msk [vmem:[#allocation2 + $0x28] sm:$0xf] %vm2122, %v2053
        %2134 = vst.msk [vmem:[#allocation2 + $0x2c] sm:$0xf] %vm2122, %v2055
        %2135 = vst.msk [vmem:[#allocation2 + $0x30] sm:$0xf] %vm2122, %v2057
        %2136 = vst.msk [vmem:[#allocation2 + $0x34] sm:$0xf] %vm2122, %v2059
        %2137 = vst.msk [vmem:[#allocation2 + $0x38] sm:$0xf] %vm2122, %v2061
        %2138 = vst.msk [vmem:[#allocation2 + $0x3c] sm:$0xf] %vm2122, %v2063
        %2139 = vst.msk [vmem:[#allocation2 + $0x40] sm:$0xf] %vm2122, %v2065
        %2140 = vst.msk [vmem:[#allocation2 + $0x44] sm:$0xf] %vm2122, %v2067
        %2141 = vst.msk [vmem:[#allocation2 + $0x48] sm:$0xf] %vm2122, %v2069
        %2142 = vst.msk [vmem:[#allocation2 + $0x4c] sm:$0xf] %vm2122, %v2071
        %2143 = vst.msk [vmem:[#allocation2 + $0x50] sm:$0xf] %vm2122, %v2073
        %2144 = vst.msk [vmem:[#allocation2 + $0x54] sm:$0xf] %vm2122, %v2075
        %2145 = vst.msk [vmem:[#allocation2 + $0x58] sm:$0xf] %vm2122, %v2077
        %2146 = vst.msk [vmem:[#allocation2 + $0x5c] sm:$0xf] %vm2122, %v2079
        %2147 = vst.msk [vmem:[#allocation2 + $0x60] sm:$0xf] %vm2122, %v2081
        %2148 = vst.msk [vmem:[#allocation2 + $0x64] sm:$0xf] %vm2122, %v2083
        %2149 = vst.msk [vmem:[#allocation2 + $0x68] sm:$0xf] %vm2122, %v2085
        %2150 = vst.msk [vmem:[#allocation2 + $0x6c] sm:$0xf] %vm2122, %v2087
        %2151 = vst.msk [vmem:[#allocation2 + $0x70] sm:$0xf] %vm2122, %v2089
        %2152 = vst.msk [vmem:[#allocation2 + $0x74] sm:$0xf] %vm2122, %v2091
        %s2153 = sadd.s32 %s293, 2
        %s2154 = smul.u32 %s2153, 4
        %s2155 = smul.addr %s2154, 4
        %s2156 = scalar_lea.vmem %s290, %s2155
        %v2157 = vld [vmem:[%s2156] sm:$0xf]
        %v2158 = vld [vmem:[%s2156 + $0x4] sm:$0xf]
        %v2159 = vld [vmem:[%s2156 + $0x8] sm:$0xf]
        %v2160 = vld [vmem:[%s2156 + $0x10] sm:$0xf]
        %v2161 = vld [vmem:[%s2156 + $0x14] sm:$0xf]
        %v2162 = vld [vmem:[%s2156 + $0x18] sm:$0xf]
        %v2163 = vld [vmem:[%s2156 + $0x20] sm:$0xf]
        %v2164 = vld [vmem:[%s2156 + $0x24] sm:$0xf]
        %v2165 = vld [vmem:[%s2156 + $0x28] sm:$0xf]
        %v2166 = vld [vmem:[%s2156 + $0x30] sm:$0xf]
        %v2167 = vld [vmem:[%s2156 + $0x34] sm:$0xf]
        %v2168 = vld [vmem:[%s2156 + $0x38] sm:$0xf]
        %v2169 = vld [vmem:[%s2156 + $0x40] sm:$0xf]
        %v2170 = vld [vmem:[%s2156 + $0x44] sm:$0xf]
        %v2171 = vld [vmem:[%s2156 + $0x48] sm:$0xf]
        %v2172 = vld [vmem:[%s2156 + $0x50] sm:$0xf]
        %v2173 = vld [vmem:[%s2156 + $0x54] sm:$0xf]
        %v2174 = vld [vmem:[%s2156 + $0x58] sm:$0xf]
        %v2175 = vld [vmem:[%s2156 + $0x60] sm:$0xf]
        %v2176 = vld [vmem:[%s2156 + $0x64] sm:$0xf]
        %v2177 = vld [vmem:[%s2156 + $0x68] sm:$0xf]
        %v2178 = vld [vmem:[%s2156 + $0x70] sm:$0xf]
        %v2179 = vld [vmem:[%s2156 + $0x74] sm:$0xf]
        %v2180 = vld [vmem:[%s2156 + $0x78] sm:$0xf]
        %v2181 = vld [vmem:[%s2156 + $0x80] sm:$0xf]
        %v2182 = vld [vmem:[%s2156 + $0x84] sm:$0xf]
        %v2183 = vld [vmem:[%s2156 + $0x88] sm:$0xf]
        %v2184 = vld [vmem:[%s2156 + $0x90] sm:$0xf]
        %v2185 = vld [vmem:[%s2156 + $0x94] sm:$0xf]
        %v2186 = vld [vmem:[%s2156 + $0x98] sm:$0xf]
        %2217 = vrot.lane.b32.xlu0 %v2157, 24
        %v2218 = vpop.permute.xlu0 %2217
        %2219 = vrot.lane.b32.xlu0 %v2158, 24
        %v2220 = vpop.permute.xlu0 %2219
        %2221 = vrot.lane.b32.xlu0 %v2159, 24
        %v2222 = vpop.permute.xlu0 %2221
        %2223 = vrot.lane.b32.xlu0 %v2160, 24
        %v2224 = vpop.permute.xlu0 %2223
        %2225 = vrot.lane.b32.xlu0 %v2161, 24
        %v2226 = vpop.permute.xlu0 %2225
        %2227 = vrot.lane.b32.xlu0 %v2162, 24
        %v2228 = vpop.permute.xlu0 %2227
        %2229 = vrot.lane.b32.xlu0 %v2163, 24
        %v2230 = vpop.permute.xlu0 %2229
        %2231 = vrot.lane.b32.xlu0 %v2164, 24
        %v2232 = vpop.permute.xlu0 %2231
        %2233 = vrot.lane.b32.xlu0 %v2165, 24
        %v2234 = vpop.permute.xlu0 %2233
        %2235 = vrot.lane.b32.xlu0 %v2166, 24
        %v2236 = vpop.permute.xlu0 %2235
        %2237 = vrot.lane.b32.xlu0 %v2167, 24
        %v2238 = vpop.permute.xlu0 %2237
        %2239 = vrot.lane.b32.xlu0 %v2168, 24
        %v2240 = vpop.permute.xlu0 %2239
        %2241 = vrot.lane.b32.xlu0 %v2169, 24
        %v2242 = vpop.permute.xlu0 %2241
        %2243 = vrot.lane.b32.xlu0 %v2170, 24
        %v2244 = vpop.permute.xlu0 %2243
        %2245 = vrot.lane.b32.xlu0 %v2171, 24
        %v2246 = vpop.permute.xlu0 %2245
        %2247 = vrot.lane.b32.xlu0 %v2172, 24
        %v2248 = vpop.permute.xlu0 %2247
        %2249 = vrot.lane.b32.xlu0 %v2173, 24
        %v2250 = vpop.permute.xlu0 %2249
        %2251 = vrot.lane.b32.xlu0 %v2174, 24
        %v2252 = vpop.permute.xlu0 %2251
        %2253 = vrot.lane.b32.xlu0 %v2175, 24
        %v2254 = vpop.permute.xlu0 %2253
        %2255 = vrot.lane.b32.xlu0 %v2176, 24
        %v2256 = vpop.permute.xlu0 %2255
        %2257 = vrot.lane.b32.xlu0 %v2177, 24
        %v2258 = vpop.permute.xlu0 %2257
        %2259 = vrot.lane.b32.xlu0 %v2178, 24
        %v2260 = vpop.permute.xlu0 %2259
        %2261 = vrot.lane.b32.xlu0 %v2179, 24
        %v2262 = vpop.permute.xlu0 %2261
        %2263 = vrot.lane.b32.xlu0 %v2180, 24
        %v2264 = vpop.permute.xlu0 %2263
        %2265 = vrot.lane.b32.xlu0 %v2181, 24
        %v2266 = vpop.permute.xlu0 %2265
        %2267 = vrot.lane.b32.xlu0 %v2182, 24
        %v2268 = vpop.permute.xlu0 %2267
        %2269 = vrot.lane.b32.xlu0 %v2183, 24
        %v2270 = vpop.permute.xlu0 %2269
        %2271 = vrot.lane.b32.xlu0 %v2184, 24
        %v2272 = vpop.permute.xlu0 %2271
        %2273 = vrot.lane.b32.xlu0 %v2185, 24
        %v2274 = vpop.permute.xlu0 %2273
        %2275 = vrot.lane.b32.xlu0 %v2186, 24
        %v2276 = vpop.permute.xlu0 %2275
        %vm2307 = vcmask 224448
        %2308 = vst.msk [vmem:[#allocation2] sm:$0xf] %vm2307, %v2218
        %2309 = vst.msk [vmem:[#allocation2 + $0x4] sm:$0xf] %vm2307, %v2220
        %2310 = vst.msk [vmem:[#allocation2 + $0x8] sm:$0xf] %vm2307, %v2222
        %2311 = vst.msk [vmem:[#allocation2 + $0xc] sm:$0xf] %vm2307, %v2224
        %2312 = vst.msk [vmem:[#allocation2 + $0x10] sm:$0xf] %vm2307, %v2226
        %2313 = vst.msk [vmem:[#allocation2 + $0x14] sm:$0xf] %vm2307, %v2228
        %2314 = vst.msk [vmem:[#allocation2 + $0x18] sm:$0xf] %vm2307, %v2230
        %2315 = vst.msk [vmem:[#allocation2 + $0x1c] sm:$0xf] %vm2307, %v2232
        %2316 = vst.msk [vmem:[#allocation2 + $0x20] sm:$0xf] %vm2307, %v2234
        %2317 = vst.msk [vmem:[#allocation2 + $0x24] sm:$0xf] %vm2307, %v2236
        %2318 = vst.msk [vmem:[#allocation2 + $0x28] sm:$0xf] %vm2307, %v2238
        %2319 = vst.msk [vmem:[#allocation2 + $0x2c] sm:$0xf] %vm2307, %v2240
        %2320 = vst.msk [vmem:[#allocation2 + $0x30] sm:$0xf] %vm2307, %v2242
        %2321 = vst.msk [vmem:[#allocation2 + $0x34] sm:$0xf] %vm2307, %v2244
        %2322 = vst.msk [vmem:[#allocation2 + $0x38] sm:$0xf] %vm2307, %v2246
        %2323 = vst.msk [vmem:[#allocation2 + $0x3c] sm:$0xf] %vm2307, %v2248
        %2324 = vst.msk [vmem:[#allocation2 + $0x40] sm:$0xf] %vm2307, %v2250
        %2325 = vst.msk [vmem:[#allocation2 + $0x44] sm:$0xf] %vm2307, %v2252
        %2326 = vst.msk [vmem:[#allocation2 + $0x48] sm:$0xf] %vm2307, %v2254
        %2327 = vst.msk [vmem:[#allocation2 + $0x4c] sm:$0xf] %vm2307, %v2256
        %2328 = vst.msk [vmem:[#allocation2 + $0x50] sm:$0xf] %vm2307, %v2258
        %2329 = vst.msk [vmem:[#allocation2 + $0x54] sm:$0xf] %vm2307, %v2260
        %2330 = vst.msk [vmem:[#allocation2 + $0x58] sm:$0xf] %vm2307, %v2262
        %2331 = vst.msk [vmem:[#allocation2 + $0x5c] sm:$0xf] %vm2307, %v2264
        %2332 = vst.msk [vmem:[#allocation2 + $0x60] sm:$0xf] %vm2307, %v2266
        %2333 = vst.msk [vmem:[#allocation2 + $0x64] sm:$0xf] %vm2307, %v2268
        %2334 = vst.msk [vmem:[#allocation2 + $0x68] sm:$0xf] %vm2307, %v2270
        %2335 = vst.msk [vmem:[#allocation2 + $0x6c] sm:$0xf] %vm2307, %v2272
        %2336 = vst.msk [vmem:[#allocation2 + $0x70] sm:$0xf] %vm2307, %v2274
        %2337 = vst.msk [vmem:[#allocation2 + $0x74] sm:$0xf] %vm2307, %v2276
        %v2338 = vld [vmem:[%s2156] sm:$0xf]
        %v2339 = vld [vmem:[%s2156 + $0x4] sm:$0xf]
        %v2340 = vld [vmem:[%s2156 + $0x8] sm:$0xf]
        %v2341 = vld [vmem:[%s2156 + $0xc] sm:$0x1]
        %v2342 = vld [vmem:[%s2156 + $0x10] sm:$0xf]
        %v2343 = vld [vmem:[%s2156 + $0x14] sm:$0xf]
        %v2344 = vld [vmem:[%s2156 + $0x18] sm:$0xf]
        %v2345 = vld [vmem:[%s2156 + $0x1c] sm:$0x1]
        %v2346 = vld [vmem:[%s2156 + $0x20] sm:$0xf]
        %v2347 = vld [vmem:[%s2156 + $0x24] sm:$0xf]
        %v2348 = vld [vmem:[%s2156 + $0x28] sm:$0xf]
        %v2349 = vld [vmem:[%s2156 + $0x2c] sm:$0x1]
        %v2350 = vld [vmem:[%s2156 + $0x30] sm:$0xf]
        %v2351 = vld [vmem:[%s2156 + $0x34] sm:$0xf]
        %v2352 = vld [vmem:[%s2156 + $0x38] sm:$0xf]
        %v2353 = vld [vmem:[%s2156 + $0x3c] sm:$0x1]
        %v2354 = vld [vmem:[%s2156 + $0x40] sm:$0xf]
        %v2355 = vld [vmem:[%s2156 + $0x44] sm:$0xf]
        %v2356 = vld [vmem:[%s2156 + $0x48] sm:$0xf]
        %v2357 = vld [vmem:[%s2156 + $0x4c] sm:$0x1]
        %v2358 = vld [vmem:[%s2156 + $0x50] sm:$0xf]
        %v2359 = vld [vmem:[%s2156 + $0x54] sm:$0xf]
        %v2360 = vld [vmem:[%s2156 + $0x58] sm:$0xf]
        %v2361 = vld [vmem:[%s2156 + $0x5c] sm:$0x1]
        %v2362 = vld [vmem:[%s2156 + $0x60] sm:$0xf]
        %v2363 = vld [vmem:[%s2156 + $0x64] sm:$0xf]
        %v2364 = vld [vmem:[%s2156 + $0x68] sm:$0xf]
        %v2365 = vld [vmem:[%s2156 + $0x6c] sm:$0x1]
        %v2366 = vld [vmem:[%s2156 + $0x70] sm:$0xf]
        %v2367 = vld [vmem:[%s2156 + $0x74] sm:$0xf]
        %v2368 = vld [vmem:[%s2156 + $0x78] sm:$0xf]
        %v2369 = vld [vmem:[%s2156 + $0x7c] sm:$0x1]
        %v2370 = vld [vmem:[%s2156 + $0x80] sm:$0xf]
        %v2371 = vld [vmem:[%s2156 + $0x84] sm:$0xf]
        %v2372 = vld [vmem:[%s2156 + $0x88] sm:$0xf]
        %v2373 = vld [vmem:[%s2156 + $0x8c] sm:$0x1]
        %v2374 = vld [vmem:[%s2156 + $0x90] sm:$0xf]
        %v2375 = vld [vmem:[%s2156 + $0x94] sm:$0xf]
        %v2376 = vld [vmem:[%s2156 + $0x98] sm:$0xf]
        %v2377 = vld [vmem:[%s2156 + $0x9c] sm:$0x1]
        %v2379 = vshrl.u32 %v2338, 16
        %v2381 = vrot.slane %v2379, 4
        %v2382 = vshll.u32 %v2338, 16
        %v2384 = vrot.slane %v2382, 5
        %v2385 = vor.u32 %v2381, %v2384
        %v2386 = vrot.slane %v2385, 4
        %v2388 = vshll.u32 %v2339, 16
        %v2390 = vrot.slane %v2388, 5
        %v2391 = vsel %vm400, %v2386, %v2390
        %v2392 = vshrl.u32 %v2339, 16
        %v2394 = vrot.slane %v2392, 4
        %v2395 = vor.u32 %v2394, %v2390
        %v2396 = vrot.slane %v2395, 4
        %v2398 = vshll.u32 %v2340, 16
        %v2400 = vrot.slane %v2398, 5
        %v2401 = vsel %vm400, %v2396, %v2400
        %v2402 = vshrl.u32 %v2340, 16
        %v2404 = vrot.slane %v2402, 4
        %v2405 = vor.u32 %v2404, %v2400
        %v2406 = vrot.slane %v2405, 4
        %v2408 = vshll.u32 %v2341, 16
        %v2410 = vrot.slane %v2408, 5
        %v2411 = vsel %vm400, %v2406, %v2410
        %v2413 = vshrl.u32 %v2342, 16
        %v2415 = vrot.slane %v2413, 4
        %v2416 = vshll.u32 %v2342, 16
        %v2418 = vrot.slane %v2416, 5
        %v2419 = vor.u32 %v2415, %v2418
        %v2420 = vrot.slane %v2419, 4
        %v2422 = vshll.u32 %v2343, 16
        %v2424 = vrot.slane %v2422, 5
        %v2425 = vsel %vm400, %v2420, %v2424
        %v2426 = vshrl.u32 %v2343, 16
        %v2428 = vrot.slane %v2426, 4
        %v2429 = vor.u32 %v2428, %v2424
        %v2430 = vrot.slane %v2429, 4
        %v2432 = vshll.u32 %v2344, 16
        %v2434 = vrot.slane %v2432, 5
        %v2435 = vsel %vm400, %v2430, %v2434
        %v2436 = vshrl.u32 %v2344, 16
        %v2438 = vrot.slane %v2436, 4
        %v2439 = vor.u32 %v2438, %v2434
        %v2440 = vrot.slane %v2439, 4
        %v2442 = vshll.u32 %v2345, 16
        %v2444 = vrot.slane %v2442, 5
        %v2445 = vsel %vm400, %v2440, %v2444
        %v2447 = vshrl.u32 %v2346, 16
        %v2449 = vrot.slane %v2447, 4
        %v2450 = vshll.u32 %v2346, 16
        %v2452 = vrot.slane %v2450, 5
        %v2453 = vor.u32 %v2449, %v2452
        %v2454 = vrot.slane %v2453, 4
        %v2456 = vshll.u32 %v2347, 16
        %v2458 = vrot.slane %v2456, 5
        %v2459 = vsel %vm400, %v2454, %v2458
        %v2460 = vshrl.u32 %v2347, 16
        %v2462 = vrot.slane %v2460, 4
        %v2463 = vor.u32 %v2462, %v2458
        %v2464 = vrot.slane %v2463, 4
        %v2466 = vshll.u32 %v2348, 16
        %v2468 = vrot.slane %v2466, 5
        %v2469 = vsel %vm400, %v2464, %v2468
        %v2470 = vshrl.u32 %v2348, 16
        %v2472 = vrot.slane %v2470, 4
        %v2473 = vor.u32 %v2472, %v2468
        %v2474 = vrot.slane %v2473, 4
        %v2476 = vshll.u32 %v2349, 16
        %v2478 = vrot.slane %v2476, 5
        %v2479 = vsel %vm400, %v2474, %v2478
        %v2481 = vshrl.u32 %v2350, 16
        %v2483 = vrot.slane %v2481, 4
        %v2484 = vshll.u32 %v2350, 16
        %v2486 = vrot.slane %v2484, 5
        %v2487 = vor.u32 %v2483, %v2486
        %v2488 = vrot.slane %v2487, 4
        %v2490 = vshll.u32 %v2351, 16
        %v2492 = vrot.slane %v2490, 5
        %v2493 = vsel %vm400, %v2488, %v2492
        %v2494 = vshrl.u32 %v2351, 16
        %v2496 = vrot.slane %v2494, 4
        %v2497 = vor.u32 %v2496, %v2492
        %v2498 = vrot.slane %v2497, 4
        %v2500 = vshll.u32 %v2352, 16
        %v2502 = vrot.slane %v2500, 5
        %v2503 = vsel %vm400, %v2498, %v2502
        %v2504 = vshrl.u32 %v2352, 16
        %v2506 = vrot.slane %v2504, 4
        %v2507 = vor.u32 %v2506, %v2502
        %v2508 = vrot.slane %v2507, 4
        %v2510 = vshll.u32 %v2353, 16
        %v2512 = vrot.slane %v2510, 5
        %v2513 = vsel %vm400, %v2508, %v2512
        %v2515 = vshrl.u32 %v2354, 16
        %v2517 = vrot.slane %v2515, 4
        %v2518 = vshll.u32 %v2354, 16
        %v2520 = vrot.slane %v2518, 5
        %v2521 = vor.u32 %v2517, %v2520
        %v2522 = vrot.slane %v2521, 4
        %v2524 = vshll.u32 %v2355, 16
        %v2526 = vrot.slane %v2524, 5
        %v2527 = vsel %vm400, %v2522, %v2526
        %v2528 = vshrl.u32 %v2355, 16
        %v2530 = vrot.slane %v2528, 4
        %v2531 = vor.u32 %v2530, %v2526
        %v2532 = vrot.slane %v2531, 4
        %v2534 = vshll.u32 %v2356, 16
        %v2536 = vrot.slane %v2534, 5
        %v2537 = vsel %vm400, %v2532, %v2536
        %v2538 = vshrl.u32 %v2356, 16
        %v2540 = vrot.slane %v2538, 4
        %v2541 = vor.u32 %v2540, %v2536
        %v2542 = vrot.slane %v2541, 4
        %v2544 = vshll.u32 %v2357, 16
        %v2546 = vrot.slane %v2544, 5
        %v2547 = vsel %vm400, %v2542, %v2546
        %v2549 = vshrl.u32 %v2358, 16
        %v2551 = vrot.slane %v2549, 4
        %v2552 = vshll.u32 %v2358, 16
        %v2554 = vrot.slane %v2552, 5
        %v2555 = vor.u32 %v2551, %v2554
        %v2556 = vrot.slane %v2555, 4
        %v2558 = vshll.u32 %v2359, 16
        %v2560 = vrot.slane %v2558, 5
        %v2561 = vsel %vm400, %v2556, %v2560
        %v2562 = vshrl.u32 %v2359, 16
        %v2564 = vrot.slane %v2562, 4
        %v2565 = vor.u32 %v2564, %v2560
        %v2566 = vrot.slane %v2565, 4
        %v2568 = vshll.u32 %v2360, 16
        %v2570 = vrot.slane %v2568, 5
        %v2571 = vsel %vm400, %v2566, %v2570
        %v2572 = vshrl.u32 %v2360, 16
        %v2574 = vrot.slane %v2572, 4
        %v2575 = vor.u32 %v2574, %v2570
        %v2576 = vrot.slane %v2575, 4
        %v2578 = vshll.u32 %v2361, 16
        %v2580 = vrot.slane %v2578, 5
        %v2581 = vsel %vm400, %v2576, %v2580
        %v2583 = vshrl.u32 %v2362, 16
        %v2585 = vrot.slane %v2583, 4
        %v2586 = vshll.u32 %v2362, 16
        %v2588 = vrot.slane %v2586, 5
        %v2589 = vor.u32 %v2585, %v2588
        %v2590 = vrot.slane %v2589, 4
        %v2592 = vshll.u32 %v2363, 16
        %v2594 = vrot.slane %v2592, 5
        %v2595 = vsel %vm400, %v2590, %v2594
        %v2596 = vshrl.u32 %v2363, 16
        %v2598 = vrot.slane %v2596, 4
        %v2599 = vor.u32 %v2598, %v2594
        %v2600 = vrot.slane %v2599, 4
        %v2602 = vshll.u32 %v2364, 16
        %v2604 = vrot.slane %v2602, 5
        %v2605 = vsel %vm400, %v2600, %v2604
        %v2606 = vshrl.u32 %v2364, 16
        %v2608 = vrot.slane %v2606, 4
        %v2609 = vor.u32 %v2608, %v2604
        %v2610 = vrot.slane %v2609, 4
        %v2612 = vshll.u32 %v2365, 16
        %v2614 = vrot.slane %v2612, 5
        %v2615 = vsel %vm400, %v2610, %v2614
        %v2617 = vshrl.u32 %v2366, 16
        %v2619 = vrot.slane %v2617, 4
        %v2620 = vshll.u32 %v2366, 16
        %v2622 = vrot.slane %v2620, 5
        %v2623 = vor.u32 %v2619, %v2622
        %v2624 = vrot.slane %v2623, 4
        %v2626 = vshll.u32 %v2367, 16
        %v2628 = vrot.slane %v2626, 5
        %v2629 = vsel %vm400, %v2624, %v2628
        %v2630 = vshrl.u32 %v2367, 16
        %v2632 = vrot.slane %v2630, 4
        %v2633 = vor.u32 %v2632, %v2628
        %v2634 = vrot.slane %v2633, 4
        %v2636 = vshll.u32 %v2368, 16
        %v2638 = vrot.slane %v2636, 5
        %v2639 = vsel %vm400, %v2634, %v2638
        %v2640 = vshrl.u32 %v2368, 16
        %v2642 = vrot.slane %v2640, 4
        %v2643 = vor.u32 %v2642, %v2638
        %v2644 = vrot.slane %v2643, 4
        %v2646 = vshll.u32 %v2369, 16
        %v2648 = vrot.slane %v2646, 5
        %v2649 = vsel %vm400, %v2644, %v2648
        %v2651 = vshrl.u32 %v2370, 16
        %v2653 = vrot.slane %v2651, 4
        %v2654 = vshll.u32 %v2370, 16
        %v2656 = vrot.slane %v2654, 5
        %v2657 = vor.u32 %v2653, %v2656
        %v2658 = vrot.slane %v2657, 4
        %v2660 = vshll.u32 %v2371, 16
        %v2662 = vrot.slane %v2660, 5
        %v2663 = vsel %vm400, %v2658, %v2662
        %v2664 = vshrl.u32 %v2371, 16
        %v2666 = vrot.slane %v2664, 4
        %v2667 = vor.u32 %v2666, %v2662
        %v2668 = vrot.slane %v2667, 4
        %v2670 = vshll.u32 %v2372, 16
        %v2672 = vrot.slane %v2670, 5
        %v2673 = vsel %vm400, %v2668, %v2672
        %v2674 = vshrl.u32 %v2372, 16
        %v2676 = vrot.slane %v2674, 4
        %v2677 = vor.u32 %v2676, %v2672
        %v2678 = vrot.slane %v2677, 4
        %v2680 = vshll.u32 %v2373, 16
        %v2682 = vrot.slane %v2680, 5
        %v2683 = vsel %vm400, %v2678, %v2682
        %v2685 = vshrl.u32 %v2374, 16
        %v2687 = vrot.slane %v2685, 4
        %v2688 = vshll.u32 %v2374, 16
        %v2690 = vrot.slane %v2688, 5
        %v2691 = vor.u32 %v2687, %v2690
        %v2692 = vrot.slane %v2691, 4
        %v2694 = vshll.u32 %v2375, 16
        %v2696 = vrot.slane %v2694, 5
        %v2697 = vsel %vm400, %v2692, %v2696
        %v2698 = vshrl.u32 %v2375, 16
        %v2700 = vrot.slane %v2698, 4
        %v2701 = vor.u32 %v2700, %v2696
        %v2702 = vrot.slane %v2701, 4
        %v2704 = vshll.u32 %v2376, 16
        %v2706 = vrot.slane %v2704, 5
        %v2707 = vsel %vm400, %v2702, %v2706
        %v2708 = vshrl.u32 %v2376, 16
        %v2710 = vrot.slane %v2708, 4
        %v2711 = vor.u32 %v2710, %v2706
        %v2712 = vrot.slane %v2711, 4
        %v2714 = vshll.u32 %v2377, 16
        %v2716 = vrot.slane %v2714, 5
        %v2717 = vsel %vm400, %v2712, %v2716
        %2718 = vrot.lane.b32.xlu0 %v2391, 28
        %v2719 = vpop.permute.xlu0 %2718
        %2720 = vrot.lane.b32.xlu0 %v2401, 28
        %v2721 = vpop.permute.xlu0 %2720
        %2722 = vrot.lane.b32.xlu0 %v2411, 28
        %v2723 = vpop.permute.xlu0 %2722
        %2724 = vrot.lane.b32.xlu0 %v2425, 28
        %v2725 = vpop.permute.xlu0 %2724
        %2726 = vrot.lane.b32.xlu0 %v2435, 28
        %v2727 = vpop.permute.xlu0 %2726
        %2728 = vrot.lane.b32.xlu0 %v2445, 28
        %v2729 = vpop.permute.xlu0 %2728
        %2730 = vrot.lane.b32.xlu0 %v2459, 28
        %v2731 = vpop.permute.xlu0 %2730
        %2732 = vrot.lane.b32.xlu0 %v2469, 28
        %v2733 = vpop.permute.xlu0 %2732
        %2734 = vrot.lane.b32.xlu0 %v2479, 28
        %v2735 = vpop.permute.xlu0 %2734
        %2736 = vrot.lane.b32.xlu0 %v2493, 28
        %v2737 = vpop.permute.xlu0 %2736
        %2738 = vrot.lane.b32.xlu0 %v2503, 28
        %v2739 = vpop.permute.xlu0 %2738
        %2740 = vrot.lane.b32.xlu0 %v2513, 28
        %v2741 = vpop.permute.xlu0 %2740
        %2742 = vrot.lane.b32.xlu0 %v2527, 28
        %v2743 = vpop.permute.xlu0 %2742
        %2744 = vrot.lane.b32.xlu0 %v2537, 28
        %v2745 = vpop.permute.xlu0 %2744
        %2746 = vrot.lane.b32.xlu0 %v2547, 28
        %v2747 = vpop.permute.xlu0 %2746
        %2748 = vrot.lane.b32.xlu0 %v2561, 28
        %v2749 = vpop.permute.xlu0 %2748
        %2750 = vrot.lane.b32.xlu0 %v2571, 28
        %v2751 = vpop.permute.xlu0 %2750
        %2752 = vrot.lane.b32.xlu0 %v2581, 28
        %v2753 = vpop.permute.xlu0 %2752
        %2754 = vrot.lane.b32.xlu0 %v2595, 28
        %v2755 = vpop.permute.xlu0 %2754
        %2756 = vrot.lane.b32.xlu0 %v2605, 28
        %v2757 = vpop.permute.xlu0 %2756
        %2758 = vrot.lane.b32.xlu0 %v2615, 28
        %v2759 = vpop.permute.xlu0 %2758
        %2760 = vrot.lane.b32.xlu0 %v2629, 28
        %v2761 = vpop.permute.xlu0 %2760
        %2762 = vrot.lane.b32.xlu0 %v2639, 28
        %v2763 = vpop.permute.xlu0 %2762
        %2764 = vrot.lane.b32.xlu0 %v2649, 28
        %v2765 = vpop.permute.xlu0 %2764
        %2766 = vrot.lane.b32.xlu0 %v2663, 28
        %v2767 = vpop.permute.xlu0 %2766
        %2768 = vrot.lane.b32.xlu0 %v2673, 28
        %v2769 = vpop.permute.xlu0 %2768
        %2770 = vrot.lane.b32.xlu0 %v2683, 28
        %v2771 = vpop.permute.xlu0 %2770
        %2772 = vrot.lane.b32.xlu0 %v2697, 28
        %v2773 = vpop.permute.xlu0 %2772
        %2774 = vrot.lane.b32.xlu0 %v2707, 28
        %v2775 = vpop.permute.xlu0 %2774
        %2776 = vrot.lane.b32.xlu0 %v2717, 28
        %v2777 = vpop.permute.xlu0 %2776
        %vm2808 = vcmask 257248
        %2809 = vst.msk [vmem:[#allocation2] sm:$0xf] %vm2808, %v2719
        %2810 = vst.msk [vmem:[#allocation2 + $0x4] sm:$0xf] %vm2808, %v2721
        %2811 = vst.msk [vmem:[#allocation2 + $0x8] sm:$0xf] %vm2808, %v2723
        %2812 = vst.msk [vmem:[#allocation2 + $0xc] sm:$0xf] %vm2808, %v2725
        %2813 = vst.msk [vmem:[#allocation2 + $0x10] sm:$0xf] %vm2808, %v2727
        %2814 = vst.msk [vmem:[#allocation2 + $0x14] sm:$0xf] %vm2808, %v2729
        %2815 = vst.msk [vmem:[#allocation2 + $0x18] sm:$0xf] %vm2808, %v2731
        %2816 = vst.msk [vmem:[#allocation2 + $0x1c] sm:$0xf] %vm2808, %v2733
        %2817 = vst.msk [vmem:[#allocation2 + $0x20] sm:$0xf] %vm2808, %v2735
        %2818 = vst.msk [vmem:[#allocation2 + $0x24] sm:$0xf] %vm2808, %v2737
        %2819 = vst.msk [vmem:[#allocation2 + $0x28] sm:$0xf] %vm2808, %v2739
        %2820 = vst.msk [vmem:[#allocation2 + $0x2c] sm:$0xf] %vm2808, %v2741
        %2821 = vst.msk [vmem:[#allocation2 + $0x30] sm:$0xf] %vm2808, %v2743
        %2822 = vst.msk [vmem:[#allocation2 + $0x34] sm:$0xf] %vm2808, %v2745
        %2823 = vst.msk [vmem:[#allocation2 + $0x38] sm:$0xf] %vm2808, %v2747
        %2824 = vst.msk [vmem:[#allocation2 + $0x3c] sm:$0xf] %vm2808, %v2749
        %2825 = vst.msk [vmem:[#allocation2 + $0x40] sm:$0xf] %vm2808, %v2751
        %2826 = vst.msk [vmem:[#allocation2 + $0x44] sm:$0xf] %vm2808, %v2753
        %2827 = vst.msk [vmem:[#allocation2 + $0x48] sm:$0xf] %vm2808, %v2755
        %2828 = vst.msk [vmem:[#allocation2 + $0x4c] sm:$0xf] %vm2808, %v2757
        %2829 = vst.msk [vmem:[#allocation2 + $0x50] sm:$0xf] %vm2808, %v2759
        %2830 = vst.msk [vmem:[#allocation2 + $0x54] sm:$0xf] %vm2808, %v2761
        %2831 = vst.msk [vmem:[#allocation2 + $0x58] sm:$0xf] %vm2808, %v2763
        %2832 = vst.msk [vmem:[#allocation2 + $0x5c] sm:$0xf] %vm2808, %v2765
        %2833 = vst.msk [vmem:[#allocation2 + $0x60] sm:$0xf] %vm2808, %v2767
        %2834 = vst.msk [vmem:[#allocation2 + $0x64] sm:$0xf] %vm2808, %v2769
        %2835 = vst.msk [vmem:[#allocation2 + $0x68] sm:$0xf] %vm2808, %v2771
        %2836 = vst.msk [vmem:[#allocation2 + $0x6c] sm:$0xf] %vm2808, %v2773
        %2837 = vst.msk [vmem:[#allocation2 + $0x70] sm:$0xf] %vm2808, %v2775
        %2838 = vst.msk [vmem:[#allocation2 + $0x74] sm:$0xf] %vm2808, %v2777
        %v2839 = vld [vmem:[%s2156] sm:$0xe]
        %v2840 = vld [vmem:[%s2156 + $0x4] sm:$0xf]
        %v2841 = vld [vmem:[%s2156 + $0x8] sm:$0xf]
        %v2842 = vld [vmem:[%s2156 + $0xc] sm:$0x1]
        %v2843 = vld [vmem:[%s2156 + $0x10] sm:$0xe]
        %v2844 = vld [vmem:[%s2156 + $0x14] sm:$0xf]
        %v2845 = vld [vmem:[%s2156 + $0x18] sm:$0xf]
        %v2846 = vld [vmem:[%s2156 + $0x1c] sm:$0x1]
        %v2847 = vld [vmem:[%s2156 + $0x20] sm:$0xe]
        %v2848 = vld [vmem:[%s2156 + $0x24] sm:$0xf]
        %v2849 = vld [vmem:[%s2156 + $0x28] sm:$0xf]
        %v2850 = vld [vmem:[%s2156 + $0x2c] sm:$0x1]
        %v2851 = vld [vmem:[%s2156 + $0x30] sm:$0xe]
        %v2852 = vld [vmem:[%s2156 + $0x34] sm:$0xf]
        %v2853 = vld [vmem:[%s2156 + $0x38] sm:$0xf]
        %v2854 = vld [vmem:[%s2156 + $0x3c] sm:$0x1]
        %v2855 = vld [vmem:[%s2156 + $0x40] sm:$0xe]
        %v2856 = vld [vmem:[%s2156 + $0x44] sm:$0xf]
        %v2857 = vld [vmem:[%s2156 + $0x48] sm:$0xf]
        %v2858 = vld [vmem:[%s2156 + $0x4c] sm:$0x1]
        %v2859 = vld [vmem:[%s2156 + $0x50] sm:$0xe]
        %v2860 = vld [vmem:[%s2156 + $0x54] sm:$0xf]
        %v2861 = vld [vmem:[%s2156 + $0x58] sm:$0xf]
        %v2862 = vld [vmem:[%s2156 + $0x5c] sm:$0x1]
        %v2863 = vld [vmem:[%s2156 + $0x60] sm:$0xe]
        %v2864 = vld [vmem:[%s2156 + $0x64] sm:$0xf]
        %v2865 = vld [vmem:[%s2156 + $0x68] sm:$0xf]
        %v2866 = vld [vmem:[%s2156 + $0x6c] sm:$0x1]
        %v2867 = vld [vmem:[%s2156 + $0x70] sm:$0xe]
        %v2868 = vld [vmem:[%s2156 + $0x74] sm:$0xf]
        %v2869 = vld [vmem:[%s2156 + $0x78] sm:$0xf]
        %v2870 = vld [vmem:[%s2156 + $0x7c] sm:$0x1]
        %v2871 = vld [vmem:[%s2156 + $0x80] sm:$0xe]
        %v2872 = vld [vmem:[%s2156 + $0x84] sm:$0xf]
        %v2873 = vld [vmem:[%s2156 + $0x88] sm:$0xf]
        %v2874 = vld [vmem:[%s2156 + $0x8c] sm:$0x1]
        %v2875 = vld [vmem:[%s2156 + $0x90] sm:$0xe]
        %v2876 = vld [vmem:[%s2156 + $0x94] sm:$0xf]
        %v2877 = vld [vmem:[%s2156 + $0x98] sm:$0xf]
        %v2878 = vld [vmem:[%s2156 + $0x9c] sm:$0x1]
        %v2919 = vrot.slane %v2839, 5
        %v2920 = vrot.slane %v2919, 4
        %v2921 = vrot.slane %v2840, 5
        %v2922 = vsel %vm944, %v2920, %v2921
        %v2923 = vrot.slane %v2921, 4
        %v2924 = vrot.slane %v2841, 5
        %v2925 = vsel %vm944, %v2923, %v2924
        %v2926 = vrot.slane %v2924, 4
        %v2927 = vrot.slane %v2842, 5
        %v2928 = vsel %vm944, %v2926, %v2927
        %v2929 = vrot.slane %v2843, 5
        %v2930 = vrot.slane %v2929, 4
        %v2931 = vrot.slane %v2844, 5
        %v2932 = vsel %vm944, %v2930, %v2931
        %v2933 = vrot.slane %v2931, 4
        %v2934 = vrot.slane %v2845, 5
        %v2935 = vsel %vm944, %v2933, %v2934
        %v2936 = vrot.slane %v2934, 4
        %v2937 = vrot.slane %v2846, 5
        %v2938 = vsel %vm944, %v2936, %v2937
        %v2939 = vrot.slane %v2847, 5
        %v2940 = vrot.slane %v2939, 4
        %v2941 = vrot.slane %v2848, 5
        %v2942 = vsel %vm944, %v2940, %v2941
        %v2943 = vrot.slane %v2941, 4
        %v2944 = vrot.slane %v2849, 5
        %v2945 = vsel %vm944, %v2943, %v2944
        %v2946 = vrot.slane %v2944, 4
        %v2947 = vrot.slane %v2850, 5
        %v2948 = vsel %vm944, %v2946, %v2947
        %v2949 = vrot.slane %v2851, 5
        %v2950 = vrot.slane %v2949, 4
        %v2951 = vrot.slane %v2852, 5
        %v2952 = vsel %vm944, %v2950, %v2951
        %v2953 = vrot.slane %v2951, 4
        %v2954 = vrot.slane %v2853, 5
        %v2955 = vsel %vm944, %v2953, %v2954
        %v2956 = vrot.slane %v2954, 4
        %v2957 = vrot.slane %v2854, 5
        %v2958 = vsel %vm944, %v2956, %v2957
        %v2959 = vrot.slane %v2855, 5
        %v2960 = vrot.slane %v2959, 4
        %v2961 = vrot.slane %v2856, 5
        %v2962 = vsel %vm944, %v2960, %v2961
        %v2963 = vrot.slane %v2961, 4
        %v2964 = vrot.slane %v2857, 5
        %v2965 = vsel %vm944, %v2963, %v2964
        %v2966 = vrot.slane %v2964, 4
        %v2967 = vrot.slane %v2858, 5
        %v2968 = vsel %vm944, %v2966, %v2967
        %v2969 = vrot.slane %v2859, 5
        %v2970 = vrot.slane %v2969, 4
        %v2971 = vrot.slane %v2860, 5
        %v2972 = vsel %vm944, %v2970, %v2971
        %v2973 = vrot.slane %v2971, 4
        %v2974 = vrot.slane %v2861, 5
        %v2975 = vsel %vm944, %v2973, %v2974
        %v2976 = vrot.slane %v2974, 4
        %v2977 = vrot.slane %v2862, 5
        %v2978 = vsel %vm944, %v2976, %v2977
        %v2979 = vrot.slane %v2863, 5
        %v2980 = vrot.slane %v2979, 4
        %v2981 = vrot.slane %v2864, 5
        %v2982 = vsel %vm944, %v2980, %v2981
        %v2983 = vrot.slane %v2981, 4
        %v2984 = vrot.slane %v2865, 5
        %v2985 = vsel %vm944, %v2983, %v2984
        %v2986 = vrot.slane %v2984, 4
        %v2987 = vrot.slane %v2866, 5
        %v2988 = vsel %vm944, %v2986, %v2987
        %v2989 = vrot.slane %v2867, 5
        %v2990 = vrot.slane %v2989, 4
        %v2991 = vrot.slane %v2868, 5
        %v2992 = vsel %vm944, %v2990, %v2991
        %v2993 = vrot.slane %v2991, 4
        %v2994 = vrot.slane %v2869, 5
        %v2995 = vsel %vm944, %v2993, %v2994
        %v2996 = vrot.slane %v2994, 4
        %v2997 = vrot.slane %v2870, 5
        %v2998 = vsel %vm944, %v2996, %v2997
        %v2999 = vrot.slane %v2871, 5
        %v3000 = vrot.slane %v2999, 4
        %v3001 = vrot.slane %v2872, 5
        %v3002 = vsel %vm944, %v3000, %v3001
        %v3003 = vrot.slane %v3001, 4
        %v3004 = vrot.slane %v2873, 5
        %v3005 = vsel %vm944, %v3003, %v3004
        %v3006 = vrot.slane %v3004, 4
        %v3007 = vrot.slane %v2874, 5
        %v3008 = vsel %vm944, %v3006, %v3007
        %v3009 = vrot.slane %v2875, 5
        %v3010 = vrot.slane %v3009, 4
        %v3011 = vrot.slane %v2876, 5
        %v3012 = vsel %vm944, %v3010, %v3011
        %v3013 = vrot.slane %v3011, 4
        %v3014 = vrot.slane %v2877, 5
        %v3015 = vsel %vm944, %v3013, %v3014
        %v3016 = vrot.slane %v3014, 4
        %v3017 = vrot.slane %v2878, 5
        %v3018 = vsel %vm944, %v3016, %v3017
        %3019 = vrot.lane.b32.xlu0 %v2922, 32
        %v3020 = vpop.permute.xlu0 %3019
        %3021 = vrot.lane.b32.xlu0 %v2925, 32
        %v3022 = vpop.permute.xlu0 %3021
        %3023 = vrot.lane.b32.xlu0 %v2928, 32
        %v3024 = vpop.permute.xlu0 %3023
        %3025 = vrot.lane.b32.xlu0 %v2932, 32
        %v3026 = vpop.permute.xlu0 %3025
        %3027 = vrot.lane.b32.xlu0 %v2935, 32
        %v3028 = vpop.permute.xlu0 %3027
        %3029 = vrot.lane.b32.xlu0 %v2938, 32
        %v3030 = vpop.permute.xlu0 %3029
        %3031 = vrot.lane.b32.xlu0 %v2942, 32
        %v3032 = vpop.permute.xlu0 %3031
        %3033 = vrot.lane.b32.xlu0 %v2945, 32
        %v3034 = vpop.permute.xlu0 %3033
        %3035 = vrot.lane.b32.xlu0 %v2948, 32
        %v3036 = vpop.permute.xlu0 %3035
        %3037 = vrot.lane.b32.xlu0 %v2952, 32
        %v3038 = vpop.permute.xlu0 %3037
        %3039 = vrot.lane.b32.xlu0 %v2955, 32
        %v3040 = vpop.permute.xlu0 %3039
        %3041 = vrot.lane.b32.xlu0 %v2958, 32
        %v3042 = vpop.permute.xlu0 %3041
        %3043 = vrot.lane.b32.xlu0 %v2962, 32
        %v3044 = vpop.permute.xlu0 %3043
        %3045 = vrot.lane.b32.xlu0 %v2965, 32
        %v3046 = vpop.permute.xlu0 %3045
        %3047 = vrot.lane.b32.xlu0 %v2968, 32
        %v3048 = vpop.permute.xlu0 %3047
        %3049 = vrot.lane.b32.xlu0 %v2972, 32
        %v3050 = vpop.permute.xlu0 %3049
        %3051 = vrot.lane.b32.xlu0 %v2975, 32
        %v3052 = vpop.permute.xlu0 %3051
        %3053 = vrot.lane.b32.xlu0 %v2978, 32
        %v3054 = vpop.permute.xlu0 %3053
        %3055 = vrot.lane.b32.xlu0 %v2982, 32
        %v3056 = vpop.permute.xlu0 %3055
        %3057 = vrot.lane.b32.xlu0 %v2985, 32
        %v3058 = vpop.permute.xlu0 %3057
        %3059 = vrot.lane.b32.xlu0 %v2988, 32
        %v3060 = vpop.permute.xlu0 %3059
        %3061 = vrot.lane.b32.xlu0 %v2992, 32
        %v3062 = vpop.permute.xlu0 %3061
        %3063 = vrot.lane.b32.xlu0 %v2995, 32
        %v3064 = vpop.permute.xlu0 %3063
        %3065 = vrot.lane.b32.xlu0 %v2998, 32
        %v3066 = vpop.permute.xlu0 %3065
        %3067 = vrot.lane.b32.xlu0 %v3002, 32
        %v3068 = vpop.permute.xlu0 %3067
        %3069 = vrot.lane.b32.xlu0 %v3005, 32
        %v3070 = vpop.permute.xlu0 %3069
        %3071 = vrot.lane.b32.xlu0 %v3008, 32
        %v3072 = vpop.permute.xlu0 %3071
        %3073 = vrot.lane.b32.xlu0 %v3012, 32
        %v3074 = vpop.permute.xlu0 %3073
        %3075 = vrot.lane.b32.xlu0 %v3015, 32
        %v3076 = vpop.permute.xlu0 %3075
        %3077 = vrot.lane.b32.xlu0 %v3018, 32
        %v3078 = vpop.permute.xlu0 %3077
        %vm3109 = vcmask 290048
        %3110 = vst.msk [vmem:[#allocation2] sm:$0xf] %vm3109, %v3020
        %3111 = vst.msk [vmem:[#allocation2 + $0x4] sm:$0xf] %vm3109, %v3022
        %3112 = vst.msk [vmem:[#allocation2 + $0x8] sm:$0xf] %vm3109, %v3024
        %3113 = vst.msk [vmem:[#allocation2 + $0xc] sm:$0xf] %vm3109, %v3026
        %3114 = vst.msk [vmem:[#allocation2 + $0x10] sm:$0xf] %vm3109, %v3028
        %3115 = vst.msk [vmem:[#allocation2 + $0x14] sm:$0xf] %vm3109, %v3030
        %3116 = vst.msk [vmem:[#allocation2 + $0x18] sm:$0xf] %vm3109, %v3032
        %3117 = vst.msk [vmem:[#allocation2 + $0x1c] sm:$0xf] %vm3109, %v3034
        %3118 = vst.msk [vmem:[#allocation2 + $0x20] sm:$0xf] %vm3109, %v3036
        %3119 = vst.msk [vmem:[#allocation2 + $0x24] sm:$0xf] %vm3109, %v3038
        %3120 = vst.msk [vmem:[#allocation2 + $0x28] sm:$0xf] %vm3109, %v3040
        %3121 = vst.msk [vmem:[#allocation2 + $0x2c] sm:$0xf] %vm3109, %v3042
        %3122 = vst.msk [vmem:[#allocation2 + $0x30] sm:$0xf] %vm3109, %v3044
        %3123 = vst.msk [vmem:[#allocation2 + $0x34] sm:$0xf] %vm3109, %v3046
        %3124 = vst.msk [vmem:[#allocation2 + $0x38] sm:$0xf] %vm3109, %v3048
        %3125 = vst.msk [vmem:[#allocation2 + $0x3c] sm:$0xf] %vm3109, %v3050
        %3126 = vst.msk [vmem:[#allocation2 + $0x40] sm:$0xf] %vm3109, %v3052
        %3127 = vst.msk [vmem:[#allocation2 + $0x44] sm:$0xf] %vm3109, %v3054
        %3128 = vst.msk [vmem:[#allocation2 + $0x48] sm:$0xf] %vm3109, %v3056
        %3129 = vst.msk [vmem:[#allocation2 + $0x4c] sm:$0xf] %vm3109, %v3058
        %3130 = vst.msk [vmem:[#allocation2 + $0x50] sm:$0xf] %vm3109, %v3060
        %3131 = vst.msk [vmem:[#allocation2 + $0x54] sm:$0xf] %vm3109, %v3062
        %3132 = vst.msk [vmem:[#allocation2 + $0x58] sm:$0xf] %vm3109, %v3064
        %3133 = vst.msk [vmem:[#allocation2 + $0x5c] sm:$0xf] %vm3109, %v3066
        %3134 = vst.msk [vmem:[#allocation2 + $0x60] sm:$0xf] %vm3109, %v3068
        %3135 = vst.msk [vmem:[#allocation2 + $0x64] sm:$0xf] %vm3109, %v3070
        %3136 = vst.msk [vmem:[#allocation2 + $0x68] sm:$0xf] %vm3109, %v3072
        %3137 = vst.msk [vmem:[#allocation2 + $0x6c] sm:$0xf] %vm3109, %v3074
        %3138 = vst.msk [vmem:[#allocation2 + $0x70] sm:$0xf] %vm3109, %v3076
        %3139 = vst.msk [vmem:[#allocation2 + $0x74] sm:$0xf] %vm3109, %v3078
        %v3140 = vld [vmem:[#allocation2] sm:$0xf]
        %v3141 = vld [vmem:[#allocation2 + $0x4] sm:$0xf]
        %v3142 = vld [vmem:[#allocation2 + $0x8] sm:$0xf]
        %v3143 = vld [vmem:[#allocation2 + $0xc] sm:$0xf]
        %v3144 = vld [vmem:[#allocation2 + $0x10] sm:$0xf]
        %v3145 = vld [vmem:[#allocation2 + $0x14] sm:$0xf]
        %v3146 = vld [vmem:[#allocation2 + $0x18] sm:$0xf]
        %v3147 = vld [vmem:[#allocation2 + $0x1c] sm:$0xf]
        %v3148 = vld [vmem:[#allocation2 + $0x20] sm:$0xf]
        %v3149 = vld [vmem:[#allocation2 + $0x24] sm:$0xf]
        %v3150 = vld [vmem:[#allocation2 + $0x28] sm:$0xf]
        %v3151 = vld [vmem:[#allocation2 + $0x2c] sm:$0xf]
        %v3152 = vld [vmem:[#allocation2 + $0x30] sm:$0xf]
        %v3153 = vld [vmem:[#allocation2 + $0x34] sm:$0xf]
        %v3154 = vld [vmem:[#allocation2 + $0x38] sm:$0xf]
        %v3155 = vld [vmem:[#allocation2 + $0x3c] sm:$0xf]
        %v3156 = vld [vmem:[#allocation2 + $0x40] sm:$0xf]
        %v3157 = vld [vmem:[#allocation2 + $0x44] sm:$0xf]
        %v3158 = vld [vmem:[#allocation2 + $0x48] sm:$0xf]
        %v3159 = vld [vmem:[#allocation2 + $0x4c] sm:$0xf]
        %v3160 = vld [vmem:[#allocation2 + $0x50] sm:$0xf]
        %v3161 = vld [vmem:[#allocation2 + $0x54] sm:$0xf]
        %v3162 = vld [vmem:[#allocation2 + $0x58] sm:$0xf]
        %v3163 = vld [vmem:[#allocation2 + $0x5c] sm:$0xf]
        %v3164 = vld [vmem:[#allocation2 + $0x60] sm:$0xf]
        %v3165 = vld [vmem:[#allocation2 + $0x64] sm:$0xf]
        %v3166 = vld [vmem:[#allocation2 + $0x68] sm:$0xf]
        %v3167 = vld [vmem:[#allocation2 + $0x6c] sm:$0xf]
        %v3168 = vld [vmem:[#allocation2 + $0x70] sm:$0xf]
        %v3169 = vld [vmem:[#allocation2 + $0x74] sm:$0xf]
        %v3170 = vld [vmem:[%s1] sm:$0xf]
        %v3171 = vld [vmem:[%s1 + $0x4] sm:$0xf]
        %v3172 = vld [vmem:[%s1 + $0x8] sm:$0xf]
        %v3173 = vld [vmem:[%s1 + $0xc] sm:$0xf]
        %v3174 = vld [vmem:[%s1 + $0x10] sm:$0x3]
        %v3205 = vunpack.c.l.b16 %v3140
        %v3206 = vunpack.c.l.b16 %v3141
        %v3207 = vunpack.c.l.b16 %v3142
        %v3208 = vunpack.c.l.b16 %v3143
        %v3209 = vunpack.c.l.b16 %v3144
        %v3210 = vunpack.c.l.b16 %v3145
        %v3211 = vunpack.c.l.b16 %v3146
        %v3212 = vunpack.c.l.b16 %v3147
        %v3213 = vunpack.c.l.b16 %v3148
        %v3214 = vunpack.c.l.b16 %v3149
        %v3215 = vunpack.c.l.b16 %v3150
        %v3216 = vunpack.c.l.b16 %v3151
        %v3217 = vunpack.c.l.b16 %v3152
        %v3218 = vunpack.c.l.b16 %v3153
        %v3219 = vunpack.c.l.b16 %v3154
        %v3220 = vunpack.c.l.b16 %v3155
        %v3221 = vunpack.c.l.b16 %v3156
        %v3222 = vunpack.c.l.b16 %v3157
        %v3223 = vunpack.c.l.b16 %v3158
        %v3224 = vunpack.c.l.b16 %v3159
        %v3225 = vunpack.c.l.b16 %v3160
        %v3226 = vunpack.c.l.b16 %v3161
        %v3227 = vunpack.c.l.b16 %v3162
        %v3228 = vunpack.c.l.b16 %v3163
        %v3229 = vunpack.c.l.b16 %v3164
        %v3230 = vunpack.c.l.b16 %v3165
        %v3231 = vunpack.c.l.b16 %v3166
        %v3232 = vunpack.c.l.b16 %v3167
        %v3233 = vunpack.c.l.b16 %v3168
        %v3234 = vunpack.c.l.b16 %v3169
        %v3235 = vpack.c.b16 %v3206, %v3205
        %v3236 = vpack.c.b16 %v3208, %v3207
        %v3237 = vpack.c.b16 %v3210, %v3209
        %v3238 = vpack.c.b16 %v3212, %v3211
        %v3239 = vpack.c.b16 %v3214, %v3213
        %v3240 = vpack.c.b16 %v3216, %v3215
        %v3241 = vpack.c.b16 %v3218, %v3217
        %v3242 = vpack.c.b16 %v3220, %v3219
        %v3243 = vpack.c.b16 %v3222, %v3221
        %v3244 = vpack.c.b16 %v3224, %v3223
        %v3245 = vpack.c.b16 %v3226, %v3225
        %v3246 = vpack.c.b16 %v3228, %v3227
        %v3247 = vpack.c.b16 %v3230, %v3229
        %v3248 = vpack.c.b16 %v3232, %v3231
        %v3249 = vpack.c.b16 %v3234, %v3233
        %v3255 = vunpack.c.l.b16 %v3170
        %v3256 = vunpack.c.l.b16 %v3171
        %v3257 = vunpack.c.l.b16 %v3172
        %v3258 = vunpack.c.l.b16 %v3173
        %v3259 = vunpack.c.l.b16 %v3174
        %v3260 = vpack.c.b16 %v3256, %v3255
        %v3261 = vpack.c.b16 %v3258, %v3257
        %v3262 = vpack.c.b16 %v3259, %v3259
        %vm3265 = vcmask 293888
        %v3267 = vsel %vm3265, %v3235, 0
        %v3270 = vsel %vm3265, %v3236, 0
        %v3273 = vsel %vm3265, %v3237, 0
        %v3276 = vsel %vm3265, %v3238, 0
        %v3279 = vsel %vm3265, %v3239, 0
        %v3282 = vsel %vm3265, %v3240, 0
        %v3285 = vsel %vm3265, %v3241, 0
        %v3288 = vsel %vm3265, %v3242, 0
        %v3291 = vsel %vm3265, %v3243, 0
        %v3294 = vsel %vm3265, %v3244, 0
        %v3297 = vsel %vm3265, %v3245, 0
        %v3300 = vsel %vm3265, %v3246, 0
        %v3303 = vsel %vm3265, %v3247, 0
        %v3306 = vsel %vm3265, %v3248, 0
        %v3309 = vsel %vm3265, %v3249, 0
        %vm3311 = vcmask 1041408
        %v3313 = vsel %vm3311, %v3262, 0
        %3315 = vmatprep.subr.bf16.mxu0 0
        %3316 = vmatpush1.bf16.msra.mxu0 %v3260
        %3317 = vmatprep.subr.bf16.mxu0 0
        %3318 = vmatpush1.bf16.msra.mxu0 %v3261
        %3319 = vmatprep.subr.bf16.mxu0 0
        %3320 = vmatpush1.bf16.msra.mxu0 %v3313
        %3321 = vmatprep.subr.bf16.mxu0 0
        %3322 = vmatpush1.bf16.msra.mxu0 0
        %3323 = vmatprep.subr.bf16.mxu0 0
        %3324 = vmatpush1.bf16.msra.mxu0 0
        %3325 = vmatprep.subr.bf16.mxu0 0
        %3326 = vmatpush1.bf16.msra.mxu0 0
        %3327 = vmatprep.subr.bf16.mxu0 0
        %3328 = vmatpush1.bf16.msra.mxu0 0
        %3329 = vmatprep.subr.bf16.mxu0 0
        %3330 = vmatpush1.bf16.msra.mxu0 0
        %3331 = vmatprep.subr.bf16.mxu0 0
        %3332 = vmatpush1.bf16.msra.mxu0 0
        %3333 = vmatprep.subr.bf16.mxu0 0
        %3334 = vmatpush1.bf16.msra.mxu0 0
        %3335 = vmatprep.subr.bf16.mxu0 0
        %3336 = vmatpush1.bf16.msra.mxu0 0
        %3337 = vmatprep.subr.bf16.mxu0 0
        %3338 = vmatpush1.bf16.msra.mxu0 0
        %3339 = vmatprep.subr.bf16.mxu0 0
        %3340 = vmatpush1.bf16.msra.mxu0 0
        %3341 = vmatprep.subr.bf16.mxu0 0
        %3342 = vmatpush1.bf16.msra.mxu0 0
        %3343 = vmatprep.subr.bf16.mxu0 0
        %3344 = vmatpush1.bf16.msra.mxu0 0
        %3345 = vmatprep.subr.bf16.mxu0 0
        %3346 = vmatpush1.bf16.msra.mxu0 0
        %3347 = vmatprep.mubr.bf16.mxu0 0
        %3348 = vmatmul.mubr.bf16.gmra.mrb[0].mxu0 %v3267
        %v3349 = vpop.f32.mrb[0].mxu0
        %v3350 = vadd.f32 0.0, %v3349
        %v3351 = vpop.f32.mrb[0].mxu0
        %v3352 = vpop.f32.mrb[0].mxu0
        %v3353 = vadd.f32 0.0, %v3352
        %v3354 = vpop.f32.mrb[0].mxu0
        %3355 = vmatprep.mubr.bf16.mxu0 0
        %3356 = vmatmul.mubr.bf16.gmra.mrb[0].mxu0 %v3270
        %v3357 = vpop.f32.mrb[0].mxu0
        %v3358 = vadd.f32 0.0, %v3357
        %v3359 = vpop.f32.mrb[0].mxu0
        %v3360 = vpop.f32.mrb[0].mxu0
        %v3361 = vadd.f32 0.0, %v3360
        %v3362 = vpop.f32.mrb[0].mxu0
        %3363 = vmatprep.mubr.bf16.mxu0 0
        %3364 = vmatmul.mubr.bf16.gmra.mrb[0].mxu0 %v3273
        %v3365 = vpop.f32.mrb[0].mxu0
        %v3366 = vadd.f32 0.0, %v3365
        %v3367 = vpop.f32.mrb[0].mxu0
        %v3368 = vpop.f32.mrb[0].mxu0
        %v3369 = vadd.f32 0.0, %v3368
        %v3370 = vpop.f32.mrb[0].mxu0
        %3371 = vmatprep.mubr.bf16.mxu0 0
        %3372 = vmatmul.mubr.bf16.gmra.mrb[0].mxu0 %v3276
        %v3373 = vpop.f32.mrb[0].mxu0
        %v3374 = vadd.f32 0.0, %v3373
        %v3375 = vpop.f32.mrb[0].mxu0
        %v3376 = vpop.f32.mrb[0].mxu0
        %v3377 = vadd.f32 0.0, %v3376
        %v3378 = vpop.f32.mrb[0].mxu0
        %3379 = vmatprep.mubr.bf16.mxu0 0
        %3380 = vmatmul.mubr.bf16.gmra.mrb[0].mxu0 %v3279
        %v3381 = vpop.f32.mrb[0].mxu0
        %v3382 = vadd.f32 0.0, %v3381
        %v3383 = vpop.f32.mrb[0].mxu0
        %v3384 = vpop.f32.mrb[0].mxu0
        %v3385 = vadd.f32 0.0, %v3384
        %v3386 = vpop.f32.mrb[0].mxu0
        %3387 = vmatprep.mubr.bf16.mxu0 0
        %3388 = vmatmul.mubr.bf16.gmra.mrb[0].mxu0 %v3282
        %v3389 = vpop.f32.mrb[0].mxu0
        %v3390 = vadd.f32 0.0, %v3389
        %v3391 = vpop.f32.mrb[0].mxu0
        %v3392 = vpop.f32.mrb[0].mxu0
        %v3393 = vadd.f32 0.0, %v3392
        %v3394 = vpop.f32.mrb[0].mxu0
        %3395 = vmatprep.mubr.bf16.mxu0 0
        %3396 = vmatmul.mubr.bf16.gmra.mrb[0].mxu0 %v3285
        %v3397 = vpop.f32.mrb[0].mxu0
        %v3398 = vadd.f32 0.0, %v3397
        %v3399 = vpop.f32.mrb[0].mxu0
        %v3400 = vpop.f32.mrb[0].mxu0
        %v3401 = vadd.f32 0.0, %v3400
        %v3402 = vpop.f32.mrb[0].mxu0
        %3403 = vmatprep.mubr.bf16.mxu0 0
        %3404 = vmatmul.mubr.bf16.gmra.mrb[0].mxu0 %v3288
        %v3405 = vpop.f32.mrb[0].mxu0
        %v3406 = vadd.f32 0.0, %v3405
        %v3407 = vpop.f32.mrb[0].mxu0
        %v3408 = vpop.f32.mrb[0].mxu0
        %v3409 = vadd.f32 0.0, %v3408
        %v3410 = vpop.f32.mrb[0].mxu0
        %3411 = vmatprep.mubr.bf16.mxu0 0
        %3412 = vmatmul.mubr.bf16.gmra.mrb[0].mxu0 %v3291
        %v3413 = vpop.f32.mrb[0].mxu0
        %v3414 = vadd.f32 0.0, %v3413
        %v3415 = vpop.f32.mrb[0].mxu0
        %v3416 = vpop.f32.mrb[0].mxu0
        %v3417 = vadd.f32 0.0, %v3416
        %v3418 = vpop.f32.mrb[0].mxu0
        %3419 = vmatprep.mubr.bf16.mxu0 0
        %3420 = vmatmul.mubr.bf16.gmra.mrb[0].mxu0 %v3294
        %v3421 = vpop.f32.mrb[0].mxu0
        %v3422 = vadd.f32 0.0, %v3421
        %v3423 = vpop.f32.mrb[0].mxu0
        %v3424 = vpop.f32.mrb[0].mxu0
        %v3425 = vadd.f32 0.0, %v3424
        %v3426 = vpop.f32.mrb[0].mxu0
        %3427 = vmatprep.mubr.bf16.mxu0 0
        %3428 = vmatmul.mubr.bf16.gmra.mrb[0].mxu0 %v3297
        %v3429 = vpop.f32.mrb[0].mxu0
        %v3430 = vadd.f32 0.0, %v3429
        %v3431 = vpop.f32.mrb[0].mxu0
        %v3432 = vpop.f32.mrb[0].mxu0
        %v3433 = vadd.f32 0.0, %v3432
        %v3434 = vpop.f32.mrb[0].mxu0
        %3435 = vmatprep.mubr.bf16.mxu0 0
        %3436 = vmatmul.mubr.bf16.gmra.mrb[0].mxu0 %v3300
        %v3437 = vpop.f32.mrb[0].mxu0
        %v3438 = vadd.f32 0.0, %v3437
        %v3439 = vpop.f32.mrb[0].mxu0
        %v3440 = vpop.f32.mrb[0].mxu0
        %v3441 = vadd.f32 0.0, %v3440
        %v3442 = vpop.f32.mrb[0].mxu0
        %3443 = vmatprep.mubr.bf16.mxu0 0
        %3444 = vmatmul.mubr.bf16.gmra.mrb[0].mxu0 %v3303
        %v3445 = vpop.f32.mrb[0].mxu0
        %v3446 = vadd.f32 0.0, %v3445
        %v3447 = vpop.f32.mrb[0].mxu0
        %v3448 = vpop.f32.mrb[0].mxu0
        %v3449 = vadd.f32 0.0, %v3448
        %v3450 = vpop.f32.mrb[0].mxu0
        %3451 = vmatprep.mubr.bf16.mxu0 0
        %3452 = vmatmul.mubr.bf16.gmra.mrb[0].mxu0 %v3306
        %v3453 = vpop.f32.mrb[0].mxu0
        %v3454 = vadd.f32 0.0, %v3453
        %v3455 = vpop.f32.mrb[0].mxu0
        %v3456 = vpop.f32.mrb[0].mxu0
        %v3457 = vadd.f32 0.0, %v3456
        %v3458 = vpop.f32.mrb[0].mxu0
        %3459 = vmatprep.mubr.bf16.mxu0 0
        %3460 = vmatmul.mubr.bf16.gmra.mrb[0].mxu0 %v3309
        %v3461 = vpop.f32.mrb[0].mxu0
        %v3462 = vadd.f32 0.0, %v3461
        %v3463 = vpop.f32.mrb[0].mxu0
        %v3464 = vpop.f32.mrb[0].mxu0
        %v3465 = vadd.f32 0.0, %v3464
        %v3466 = vpop.f32.mrb[0].mxu0
        %3467 = vdwg.mxu0
        %v3468 = vld [vmem:[%s2] sm:$0x1]
        %v3469 = vlaneseq
        %v3470 = vshrl.u32 %v3469, 7
        %v3471 = vsub.s32 0, %v3470
        %v3472 = vrot.slane %v3468, %v3471
        %v3473 = vmul.f32 %v3350, %v3472
        %v3474 = vmul.f32 %v3353, %v3472
        %v3475 = vmul.f32 %v3358, %v3472
        %v3476 = vmul.f32 %v3361, %v3472
        %v3477 = vmul.f32 %v3366, %v3472
        %v3478 = vmul.f32 %v3369, %v3472
        %v3479 = vmul.f32 %v3374, %v3472
        %v3480 = vmul.f32 %v3377, %v3472
        %v3481 = vmul.f32 %v3382, %v3472
        %v3482 = vmul.f32 %v3385, %v3472
        %v3483 = vmul.f32 %v3390, %v3472
        %v3484 = vmul.f32 %v3393, %v3472
        %v3485 = vmul.f32 %v3398, %v3472
        %v3486 = vmul.f32 %v3401, %v3472
        %v3487 = vmul.f32 %v3406, %v3472
        %v3488 = vmul.f32 %v3409, %v3472
        %v3489 = vmul.f32 %v3414, %v3472
        %v3490 = vmul.f32 %v3417, %v3472
        %v3491 = vmul.f32 %v3422, %v3472
        %v3492 = vmul.f32 %v3425, %v3472
        %v3493 = vmul.f32 %v3430, %v3472
        %v3494 = vmul.f32 %v3433, %v3472
        %v3495 = vmul.f32 %v3438, %v3472
        %v3496 = vmul.f32 %v3441, %v3472
        %v3497 = vmul.f32 %v3446, %v3472
        %v3498 = vmul.f32 %v3449, %v3472
        %v3499 = vmul.f32 %v3454, %v3472
        %v3500 = vmul.f32 %v3457, %v3472
        %v3501 = vmul.f32 %v3462, %v3472
        %v3502 = vmul.f32 %v3465, %v3472
        %v3503 = vld [vmem:[%s2 + $0x1] sm:$0x1]
        %v3504 = vlaneseq
        %v3505 = vshrl.u32 %v3504, 7
        %v3506 = vsub.s32 0, %v3505
        %v3507 = vrot.slane %v3503, %v3506
        %v3508 = vadd.f32 %v3473, %v3507
        %v3509 = vadd.f32 %v3474, %v3507
        %v3510 = vadd.f32 %v3475, %v3507
        %v3511 = vadd.f32 %v3476, %v3507
        %v3512 = vadd.f32 %v3477, %v3507
        %v3513 = vadd.f32 %v3478, %v3507
        %v3514 = vadd.f32 %v3479, %v3507
        %v3515 = vadd.f32 %v3480, %v3507
        %v3516 = vadd.f32 %v3481, %v3507
        %v3517 = vadd.f32 %v3482, %v3507
        %v3518 = vadd.f32 %v3483, %v3507
        %v3519 = vadd.f32 %v3484, %v3507
        %v3520 = vadd.f32 %v3485, %v3507
        %v3521 = vadd.f32 %v3486, %v3507
        %v3522 = vadd.f32 %v3487, %v3507
        %v3523 = vadd.f32 %v3488, %v3507
        %v3524 = vadd.f32 %v3489, %v3507
        %v3525 = vadd.f32 %v3490, %v3507
        %v3526 = vadd.f32 %v3491, %v3507
        %v3527 = vadd.f32 %v3492, %v3507
        %v3528 = vadd.f32 %v3493, %v3507
        %v3529 = vadd.f32 %v3494, %v3507
        %v3530 = vadd.f32 %v3495, %v3507
        %v3531 = vadd.f32 %v3496, %v3507
        %v3532 = vadd.f32 %v3497, %v3507
        %v3533 = vadd.f32 %v3498, %v3507
        %v3534 = vadd.f32 %v3499, %v3507
        %v3535 = vadd.f32 %v3500, %v3507
        %v3536 = vadd.f32 %v3501, %v3507
        %v3537 = vadd.f32 %v3502, %v3507
        %v3538 = vmax.f32 %v3508, 0.0
        %v3539 = vmax.f32 %v3509, 0.0
        %v3540 = vmax.f32 %v3510, 0.0
        %v3541 = vmax.f32 %v3511, 0.0
        %v3542 = vmax.f32 %v3512, 0.0
        %v3543 = vmax.f32 %v3513, 0.0
        %v3544 = vmax.f32 %v3514, 0.0
        %v3545 = vmax.f32 %v3515, 0.0
        %v3546 = vmax.f32 %v3516, 0.0
        %v3547 = vmax.f32 %v3517, 0.0
        %v3548 = vmax.f32 %v3518, 0.0
        %v3549 = vmax.f32 %v3519, 0.0
        %v3550 = vmax.f32 %v3520, 0.0
        %v3551 = vmax.f32 %v3521, 0.0
        %v3552 = vmax.f32 %v3522, 0.0
        %v3553 = vmax.f32 %v3523, 0.0
        %v3554 = vmax.f32 %v3524, 0.0
        %v3555 = vmax.f32 %v3525, 0.0
        %v3556 = vmax.f32 %v3526, 0.0
        %v3557 = vmax.f32 %v3527, 0.0
        %v3558 = vmax.f32 %v3528, 0.0
        %v3559 = vmax.f32 %v3529, 0.0
        %v3560 = vmax.f32 %v3530, 0.0
        %v3561 = vmax.f32 %v3531, 0.0
        %v3562 = vmax.f32 %v3532, 0.0
        %v3563 = vmax.f32 %v3533, 0.0
        %v3564 = vmax.f32 %v3534, 0.0
        %v3565 = vmax.f32 %v3535, 0.0
        %v3566 = vmax.f32 %v3536, 0.0
        %v3567 = vmax.f32 %v3537, 0.0
        %v3568 = vstv %s293
        %v3569 = vadd.s32 %v3568, 1
        %v3570 = vadd.s32 %v3568, 2
        %v3571 = vadd.s32 %v3568, 3
        %v3572 = vadd.s32 %v3568, 4
        %v3573 = vadd.s32 %v3568, 5
        %v3574 = vadd.s32 %v3568, 6
        %v3575 = vadd.s32 %v3568, 7
        %v3576 = vadd.s32 %v3568, 8
        %v3577 = vadd.s32 %v3568, 9
        %v3578 = vlaneseq
        %v3579 = vshrl.u32 %v3578, 7
        %v3580 = vadd.s32 %v3579, 8
        %v3581 = vadd.s32 %v3579, 16
        %vm3582 = vcmp.ge.s32.totalorder %v3568, 1
        %vm3583 = vcmp.ge.s32.totalorder %v3569, 1
        %vm3584 = vcmp.ge.s32.totalorder %v3570, 1
        %vm3585 = vcmp.ge.s32.totalorder %v3571, 1
        %vm3586 = vcmp.ge.s32.totalorder %v3572, 1
        %vm3587 = vcmp.ge.s32.totalorder %v3573, 1
        %vm3588 = vcmp.ge.s32.totalorder %v3574, 1
        %vm3589 = vcmp.ge.s32.totalorder %v3575, 1
        %vm3590 = vcmp.ge.s32.totalorder %v3576, 1
        %vm3591 = vcmp.ge.s32.totalorder %v3577, 1
        %vm3592 = vcmp.le.s32.totalorder %v3568, 16
        %vm3593 = vcmp.le.s32.totalorder %v3569, 16
        %vm3594 = vcmp.le.s32.totalorder %v3570, 16
        %vm3595 = vcmp.le.s32.totalorder %v3571, 16
        %vm3596 = vcmp.le.s32.totalorder %v3572, 16
        %vm3597 = vcmp.le.s32.totalorder %v3573, 16
        %vm3598 = vcmp.le.s32.totalorder %v3574, 16
        %vm3599 = vcmp.le.s32.totalorder %v3575, 16
        %vm3600 = vcmp.le.s32.totalorder %v3576, 16
        %vm3601 = vcmp.le.s32.totalorder %v3577, 16
        %vm3602 = vmand %vm3582, %vm3592
        %vm3603 = vmand %vm3583, %vm3593
        %vm3604 = vmand %vm3584, %vm3594
        %vm3605 = vmand %vm3585, %vm3595
        %vm3606 = vmand %vm3586, %vm3596
        %vm3607 = vmand %vm3587, %vm3597
        %vm3608 = vmand %vm3588, %vm3598
        %vm3609 = vmand %vm3589, %vm3599
        %vm3610 = vmand %vm3590, %vm3600
        %vm3611 = vmand %vm3591, %vm3601
        %vm3612 = vcmp.ge.s32.totalorder %v3579, 1
        %vm3613 = vcmp.ge.s32.totalorder %v3580, 1
        %vm3614 = vcmp.ge.s32.totalorder %v3581, 1
        %vm3615 = vmand %vm3602, %vm3612
        %vm3616 = vmand %vm3602, %vm3613
        %vm3617 = vmand %vm3602, %vm3614
        %vm3618 = vmand %vm3603, %vm3612
        %vm3619 = vmand %vm3603, %vm3613
        %vm3620 = vmand %vm3603, %vm3614
        %vm3621 = vmand %vm3604, %vm3612
        %vm3622 = vmand %vm3604, %vm3613
        %vm3623 = vmand %vm3604, %vm3614
        %vm3624 = vmand %vm3605, %vm3612
        %vm3625 = vmand %vm3605, %vm3613
        %vm3626 = vmand %vm3605, %vm3614
        %vm3627 = vmand %vm3606, %vm3612
        %vm3628 = vmand %vm3606, %vm3613
        %vm3629 = vmand %vm3606, %vm3614
        %vm3630 = vmand %vm3607, %vm3612
        %vm3631 = vmand %vm3607, %vm3613
        %vm3632 = vmand %vm3607, %vm3614
        %vm3633 = vmand %vm3608, %vm3612
        %vm3634 = vmand %vm3608, %vm3613
        %vm3635 = vmand %vm3608, %vm3614
        %vm3636 = vmand %vm3609, %vm3612
        %vm3637 = vmand %vm3609, %vm3613
        %vm3638 = vmand %vm3609, %vm3614
        %vm3639 = vmand %vm3610, %vm3612
        %vm3640 = vmand %vm3610, %vm3613
        %vm3641 = vmand %vm3610, %vm3614
        %vm3642 = vmand %vm3611, %vm3612
        %vm3643 = vmand %vm3611, %vm3613
        %vm3644 = vmand %vm3611, %vm3614
        %vm3645 = vcmp.le.s32.totalorder %v3579, 16
        %vm3646 = vcmp.le.s32.totalorder %v3580, 16
        %vm3647 = vcmp.le.s32.totalorder %v3581, 16
        %vm3648 = vmand %vm3615, %vm3645
        %vm3649 = vmand %vm3616, %vm3646
        %vm3650 = vmand %vm3617, %vm3647
        %vm3651 = vmand %vm3618, %vm3645
        %vm3652 = vmand %vm3619, %vm3646
        %vm3653 = vmand %vm3620, %vm3647
        %vm3654 = vmand %vm3621, %vm3645
        %vm3655 = vmand %vm3622, %vm3646
        %vm3656 = vmand %vm3623, %vm3647
        %vm3657 = vmand %vm3624, %vm3645
        %vm3658 = vmand %vm3625, %vm3646
        %vm3659 = vmand %vm3626, %vm3647
        %vm3660 = vmand %vm3627, %vm3645
        %vm3661 = vmand %vm3628, %vm3646
        %vm3662 = vmand %vm3629, %vm3647
        %vm3663 = vmand %vm3630, %vm3645
        %vm3664 = vmand %vm3631, %vm3646
        %vm3665 = vmand %vm3632, %vm3647
        %vm3666 = vmand %vm3633, %vm3645
        %vm3667 = vmand %vm3634, %vm3646
        %vm3668 = vmand %vm3635, %vm3647
        %vm3669 = vmand %vm3636, %vm3645
        %vm3670 = vmand %vm3637, %vm3646
        %vm3671 = vmand %vm3638, %vm3647
        %vm3672 = vmand %vm3639, %vm3645
        %vm3673 = vmand %vm3640, %vm3646
        %vm3674 = vmand %vm3641, %vm3647
        %vm3675 = vmand %vm3642, %vm3645
        %vm3676 = vmand %vm3643, %vm3646
        %vm3677 = vmand %vm3644, %vm3647
        %v3678 = vsel %vm3648, %v3538, 0.0
        %v3679 = vsel %vm3649, %v3539, 0.0
        %v3680 = vsel %vm3650, %v3540, 0.0
        %v3681 = vsel %vm3651, %v3541, 0.0
        %v3682 = vsel %vm3652, %v3542, 0.0
        %v3683 = vsel %vm3653, %v3543, 0.0
        %v3684 = vsel %vm3654, %v3544, 0.0
        %v3685 = vsel %vm3655, %v3545, 0.0
        %v3686 = vsel %vm3656, %v3546, 0.0
        %v3687 = vsel %vm3657, %v3547, 0.0
        %v3688 = vsel %vm3658, %v3548, 0.0
        %v3689 = vsel %vm3659, %v3549, 0.0
        %v3690 = vsel %vm3660, %v3550, 0.0
        %v3691 = vsel %vm3661, %v3551, 0.0
        %v3692 = vsel %vm3662, %v3552, 0.0
        %v3693 = vsel %vm3663, %v3553, 0.0
        %v3694 = vsel %vm3664, %v3554, 0.0
        %v3695 = vsel %vm3665, %v3555, 0.0
        %v3696 = vsel %vm3666, %v3556, 0.0
        %v3697 = vsel %vm3667, %v3557, 0.0
        %v3698 = vsel %vm3668, %v3558, 0.0
        %v3699 = vsel %vm3669, %v3559, 0.0
        %v3700 = vsel %vm3670, %v3560, 0.0
        %v3701 = vsel %vm3671, %v3561, 0.0
        %v3702 = vsel %vm3672, %v3562, 0.0
        %v3703 = vsel %vm3673, %v3563, 0.0
        %v3704 = vsel %vm3674, %v3564, 0.0
        %v3705 = vsel %vm3675, %v3565, 0.0
        %v3706 = vsel %vm3676, %v3566, 0.0
        %v3707 = vsel %vm3677, %v3567, 0.0
        %v3708 = vpack.c.bf16 %v3679, %v3678
        %v3709 = vpack.c.bf16 %v3680, %v3680
        %v3710 = vpack.c.bf16 %v3682, %v3681
        %v3711 = vpack.c.bf16 %v3683, %v3683
        %v3712 = vpack.c.bf16 %v3685, %v3684
        %v3713 = vpack.c.bf16 %v3686, %v3686
        %v3714 = vpack.c.bf16 %v3688, %v3687
        %v3715 = vpack.c.bf16 %v3689, %v3689
        %v3716 = vpack.c.bf16 %v3691, %v3690
        %v3717 = vpack.c.bf16 %v3692, %v3692
        %v3718 = vpack.c.bf16 %v3694, %v3693
        %v3719 = vpack.c.bf16 %v3695, %v3695
        %v3720 = vpack.c.bf16 %v3697, %v3696
        %v3721 = vpack.c.bf16 %v3698, %v3698
        %v3722 = vpack.c.bf16 %v3700, %v3699
        %v3723 = vpack.c.bf16 %v3701, %v3701
        %v3724 = vpack.c.bf16 %v3703, %v3702
        %v3725 = vpack.c.bf16 %v3704, %v3704
        %v3726 = vpack.c.bf16 %v3706, %v3705
        %v3727 = vpack.c.bf16 %v3707, %v3707
        %v3748 = vunpack.c.l.b16 %v3708
        %v3749 = vunpack.c.h.b16 %v3708
        %v3750 = vunpack.c.l.b16 %v3709
        %v3751 = vunpack.c.l.b16 %v3710
        %v3752 = vunpack.c.h.b16 %v3710
        %v3753 = vunpack.c.l.b16 %v3711
        %v3754 = vunpack.c.l.b16 %v3712
        %v3755 = vunpack.c.h.b16 %v3712
        %v3756 = vunpack.c.l.b16 %v3713
        %v3757 = vunpack.c.l.b16 %v3714
        %v3758 = vunpack.c.h.b16 %v3714
        %v3759 = vunpack.c.l.b16 %v3715
        %v3760 = vunpack.c.l.b16 %v3716
        %v3761 = vunpack.c.h.b16 %v3716
        %v3762 = vunpack.c.l.b16 %v3717
        %v3763 = vunpack.c.l.b16 %v3718
        %v3764 = vunpack.c.h.b16 %v3718
        %v3765 = vunpack.c.l.b16 %v3719
        %v3766 = vunpack.c.l.b16 %v3720
        %v3767 = vunpack.c.h.b16 %v3720
        %v3768 = vunpack.c.l.b16 %v3721
        %v3769 = vunpack.c.l.b16 %v3722
        %v3770 = vunpack.c.h.b16 %v3722
        %v3771 = vunpack.c.l.b16 %v3723
        %v3772 = vunpack.c.l.b16 %v3724
        %v3773 = vunpack.c.h.b16 %v3724
        %v3774 = vunpack.c.l.b16 %v3725
        %v3775 = vunpack.c.l.b16 %v3726
        %v3776 = vunpack.c.h.b16 %v3726
        %v3777 = vunpack.c.l.b16 %v3727
        %v3778 = vpack.c.b16 %v3748, %v3748
        %v3779 = vpack.c.b16 %v3749, %v3749
        %v3780 = vpack.c.b16 %v3750, %v3750
        %v3781 = vpack.c.b16 %v3751, %v3751
        %v3782 = vpack.c.b16 %v3752, %v3752
        %v3783 = vpack.c.b16 %v3753, %v3753
        %v3784 = vpack.c.b16 %v3754, %v3754
        %v3785 = vpack.c.b16 %v3755, %v3755
        %v3786 = vpack.c.b16 %v3756, %v3756
        %v3787 = vpack.c.b16 %v3757, %v3757
        %v3788 = vpack.c.b16 %v3758, %v3758
        %v3789 = vpack.c.b16 %v3759, %v3759
        %v3790 = vpack.c.b16 %v3760, %v3760
        %v3791 = vpack.c.b16 %v3761, %v3761
        %v3792 = vpack.c.b16 %v3762, %v3762
        %v3793 = vpack.c.b16 %v3763, %v3763
        %v3794 = vpack.c.b16 %v3764, %v3764
        %v3795 = vpack.c.b16 %v3765, %v3765
        %v3796 = vpack.c.b16 %v3766, %v3766
        %v3797 = vpack.c.b16 %v3767, %v3767
        %v3798 = vpack.c.b16 %v3768, %v3768
        %v3799 = vpack.c.b16 %v3769, %v3769
        %v3800 = vpack.c.b16 %v3770, %v3770
        %v3801 = vpack.c.b16 %v3771, %v3771
        %v3802 = vpack.c.b16 %v3772, %v3772
        %v3803 = vpack.c.b16 %v3773, %v3773
        %v3804 = vpack.c.b16 %v3774, %v3774
        %v3805 = vpack.c.b16 %v3775, %v3775
        %v3806 = vpack.c.b16 %v3776, %v3776
        %v3807 = vpack.c.b16 %v3777, %v3777
        %vm3838 = vcmask 60416
        %3839 = vst.msk [vmem:[#allocation3] sm:$0xf] %vm3838, %v3778
        %3840 = vst.msk [vmem:[#allocation3 + $0x4] sm:$0xf] %vm3838, %v3779
        %3841 = vst.msk [vmem:[#allocation3 + $0x8] sm:$0xf] %vm3838, %v3780
        %3842 = vst.msk [vmem:[#allocation3 + $0xc] sm:$0xf] %vm3838, %v3781
        %3843 = vst.msk [vmem:[#allocation3 + $0x10] sm:$0xf] %vm3838, %v3782
        %3844 = vst.msk [vmem:[#allocation3 + $0x14] sm:$0xf] %vm3838, %v3783
        %3845 = vst.msk [vmem:[#allocation3 + $0x18] sm:$0xf] %vm3838, %v3784
        %3846 = vst.msk [vmem:[#allocation3 + $0x1c] sm:$0xf] %vm3838, %v3785
        %3847 = vst.msk [vmem:[#allocation3 + $0x20] sm:$0xf] %vm3838, %v3786
        %3848 = vst.msk [vmem:[#allocation3 + $0x24] sm:$0xf] %vm3838, %v3787
        %3849 = vst.msk [vmem:[#allocation3 + $0x28] sm:$0xf] %vm3838, %v3788
        %3850 = vst.msk [vmem:[#allocation3 + $0x2c] sm:$0xf] %vm3838, %v3789
        %3851 = vst.msk [vmem:[#allocation3 + $0x30] sm:$0xf] %vm3838, %v3790
        %3852 = vst.msk [vmem:[#allocation3 + $0x34] sm:$0xf] %vm3838, %v3791
        %3853 = vst.msk [vmem:[#allocation3 + $0x38] sm:$0xf] %vm3838, %v3792
        %3854 = vst.msk [vmem:[#allocation3 + $0x3c] sm:$0xf] %vm3838, %v3793
        %3855 = vst.msk [vmem:[#allocation3 + $0x40] sm:$0xf] %vm3838, %v3794
        %3856 = vst.msk [vmem:[#allocation3 + $0x44] sm:$0xf] %vm3838, %v3795
        %3857 = vst.msk [vmem:[#allocation3 + $0x48] sm:$0xf] %vm3838, %v3796
        %3858 = vst.msk [vmem:[#allocation3 + $0x4c] sm:$0xf] %vm3838, %v3797
        %3859 = vst.msk [vmem:[#allocation3 + $0x50] sm:$0xf] %vm3838, %v3798
        %3860 = vst.msk [vmem:[#allocation3 + $0x54] sm:$0xf] %vm3838, %v3799
        %3861 = vst.msk [vmem:[#allocation3 + $0x58] sm:$0xf] %vm3838, %v3800
        %3862 = vst.msk [vmem:[#allocation3 + $0x5c] sm:$0xf] %vm3838, %v3801
        %3863 = vst.msk [vmem:[#allocation3 + $0x60] sm:$0xf] %vm3838, %v3802
        %3864 = vst.msk [vmem:[#allocation3 + $0x64] sm:$0xf] %vm3838, %v3803
        %3865 = vst.msk [vmem:[#allocation3 + $0x68] sm:$0xf] %vm3838, %v3804
        %3866 = vst.msk [vmem:[#allocation3 + $0x6c] sm:$0xf] %vm3838, %v3805
        %3867 = vst.msk [vmem:[#allocation3 + $0x70] sm:$0xf] %vm3838, %v3806
        %3868 = vst.msk [vmem:[#allocation3 + $0x74] sm:$0xf] %vm3838, %v3807
        %v3869 = vld [vmem:[#allocation3] sm:$0xf]
        %v3870 = vld [vmem:[#allocation3 + $0x4] sm:$0xf]
        %v3871 = vld [vmem:[#allocation3 + $0xc] sm:$0xf]
        %v3872 = vld [vmem:[#allocation3 + $0x10] sm:$0xf]
        %v3873 = vld [vmem:[#allocation3 + $0x18] sm:$0xf]
        %v3874 = vld [vmem:[#allocation3 + $0x1c] sm:$0xf]
        %v3875 = vld [vmem:[#allocation3 + $0x24] sm:$0xf]
        %v3876 = vld [vmem:[#allocation3 + $0x28] sm:$0xf]
        %v3877 = vld [vmem:[#allocation3 + $0x30] sm:$0xf]
        %v3878 = vld [vmem:[#allocation3 + $0x34] sm:$0xf]
        %v3879 = vld [vmem:[#allocation3 + $0x3c] sm:$0xf]
        %v3880 = vld [vmem:[#allocation3 + $0x40] sm:$0xf]
        %v3881 = vld [vmem:[#allocation3 + $0x48] sm:$0xf]
        %v3882 = vld [vmem:[#allocation3 + $0x4c] sm:$0xf]
        %v3883 = vld [vmem:[#allocation3 + $0x54] sm:$0xf]
        %v3884 = vld [vmem:[#allocation3 + $0x58] sm:$0xf]
        %v3901 = vunpack.c.l.b16 %v3869
        %v3902 = vunpack.c.l.b16 %v3870
        %v3903 = vunpack.c.l.b16 %v3871
        %v3904 = vunpack.c.l.b16 %v3872
        %v3905 = vunpack.c.l.b16 %v3873
        %v3906 = vunpack.c.l.b16 %v3874
        %v3907 = vunpack.c.l.b16 %v3875
        %v3908 = vunpack.c.l.b16 %v3876
        %v3909 = vunpack.c.l.b16 %v3877
        %v3910 = vunpack.c.l.b16 %v3878
        %v3911 = vunpack.c.l.b16 %v3879
        %v3912 = vunpack.c.l.b16 %v3880
        %v3913 = vunpack.c.l.b16 %v3881
        %v3914 = vunpack.c.l.b16 %v3882
        %v3915 = vunpack.c.l.b16 %v3883
        %v3916 = vunpack.c.l.b16 %v3884
        %v3917 = vpack.c.b16 %v3902, %v3901
        %v3918 = vpack.c.b16 %v3904, %v3903
        %v3919 = vpack.c.b16 %v3906, %v3905
        %v3920 = vpack.c.b16 %v3908, %v3907
        %v3921 = vpack.c.b16 %v3910, %v3909
        %v3922 = vpack.c.b16 %v3912, %v3911
        %v3923 = vpack.c.b16 %v3914, %v3913
        %v3924 = vpack.c.b16 %v3916, %v3915
        %vm3933 = vcmask 64512
        %3934 = vst.msk [vmem:[#allocation4] sm:$0xff] %vm3933, %v3917
        %3935 = vst.msk [vmem:[#allocation4 + $0x8] sm:$0xff] %vm3933, %v3918
        %3936 = vst.msk [vmem:[#allocation4 + $0x10] sm:$0xff] %vm3933, %v3919
        %3937 = vst.msk [vmem:[#allocation4 + $0x18] sm:$0xff] %vm3933, %v3920
        %3938 = vst.msk [vmem:[#allocation4 + $0x20] sm:$0xff] %vm3933, %v3921
        %3939 = vst.msk [vmem:[#allocation4 + $0x28] sm:$0xff] %vm3933, %v3922
        %3940 = vst.msk [vmem:[#allocation4 + $0x30] sm:$0xff] %vm3933, %v3923
        %3941 = vst.msk [vmem:[#allocation4 + $0x38] sm:$0xff] %vm3933, %v3924
        %v3942 = vld [vmem:[#allocation3] sm:$0xf]
        %v3943 = vld [vmem:[#allocation3 + $0x4] sm:$0xf]
        %v3944 = vld [vmem:[#allocation3 + $0x8] sm:$0x1]
        %v3945 = vld [vmem:[#allocation3 + $0xc] sm:$0xf]
        %v3946 = vld [vmem:[#allocation3 + $0x10] sm:$0xf]
        %v3947 = vld [vmem:[#allocation3 + $0x14] sm:$0x1]
        %v3948 = vld [vmem:[#allocation3 + $0x18] sm:$0xf]
        %v3949 = vld [vmem:[#allocation3 + $0x1c] sm:$0xf]
        %v3950 = vld [vmem:[#allocation3 + $0x20] sm:$0x1]
        %v3951 = vld [vmem:[#allocation3 + $0x24] sm:$0xf]
        %v3952 = vld [vmem:[#allocation3 + $0x28] sm:$0xf]
        %v3953 = vld [vmem:[#allocation3 + $0x2c] sm:$0x1]
        %v3954 = vld [vmem:[#allocation3 + $0x30] sm:$0xf]
        %v3955 = vld [vmem:[#allocation3 + $0x34] sm:$0xf]
        %v3956 = vld [vmem:[#allocation3 + $0x38] sm:$0x1]
        %v3957 = vld [vmem:[#allocation3 + $0x3c] sm:$0xf]
        %v3958 = vld [vmem:[#allocation3 + $0x40] sm:$0xf]
        %v3959 = vld [vmem:[#allocation3 + $0x44] sm:$0x1]
        %v3960 = vld [vmem:[#allocation3 + $0x48] sm:$0xf]
        %v3961 = vld [vmem:[#allocation3 + $0x4c] sm:$0xf]
        %v3962 = vld [vmem:[#allocation3 + $0x50] sm:$0x1]
        %v3963 = vld [vmem:[#allocation3 + $0x54] sm:$0xf]
        %v3964 = vld [vmem:[#allocation3 + $0x58] sm:$0xf]
        %v3965 = vld [vmem:[#allocation3 + $0x5c] sm:$0x1]
        %v3990 = vunpack.c.l.b16 %v3942
        %v3991 = vunpack.c.l.b16 %v3943
        %v3992 = vunpack.c.l.b16 %v3944
        %v3993 = vunpack.c.l.b16 %v3945
        %v3994 = vunpack.c.l.b16 %v3946
        %v3995 = vunpack.c.l.b16 %v3947
        %v3996 = vunpack.c.l.b16 %v3948
        %v3997 = vunpack.c.l.b16 %v3949
        %v3998 = vunpack.c.l.b16 %v3950
        %v3999 = vunpack.c.l.b16 %v3951
        %v4000 = vunpack.c.l.b16 %v3952
        %v4001 = vunpack.c.l.b16 %v3953
        %v4002 = vunpack.c.l.b16 %v3954
        %v4003 = vunpack.c.l.b16 %v3955
        %v4004 = vunpack.c.l.b16 %v3956
        %v4005 = vunpack.c.l.b16 %v3957
        %v4006 = vunpack.c.l.b16 %v3958
        %v4007 = vunpack.c.l.b16 %v3959
        %v4008 = vunpack.c.l.b16 %v3960
        %v4009 = vunpack.c.l.b16 %v3961
        %v4010 = vunpack.c.l.b16 %v3962
        %v4011 = vunpack.c.l.b16 %v3963
        %v4012 = vunpack.c.l.b16 %v3964
        %v4013 = vunpack.c.l.b16 %v3965
        %v4014 = vpack.c.b16 %v3991, %v3990
        %v4015 = vpack.c.b16 %v3992, %v3992
        %v4016 = vpack.c.b16 %v3994, %v3993
        %v4017 = vpack.c.b16 %v3995, %v3995
        %v4018 = vpack.c.b16 %v3997, %v3996
        %v4019 = vpack.c.b16 %v3998, %v3998
        %v4020 = vpack.c.b16 %v4000, %v3999
        %v4021 = vpack.c.b16 %v4001, %v4001
        %v4022 = vpack.c.b16 %v4003, %v4002
        %v4023 = vpack.c.b16 %v4004, %v4004
        %v4024 = vpack.c.b16 %v4006, %v4005
        %v4025 = vpack.c.b16 %v4007, %v4007
        %v4026 = vpack.c.b16 %v4009, %v4008
        %v4027 = vpack.c.b16 %v4010, %v4010
        %v4028 = vpack.c.b16 %v4012, %v4011
        %v4029 = vpack.c.b16 %v4013, %v4013
        %vm4030 = vsmask.f32 7424
        %v4032 = vshrl.u32 %v4014, 16
        %v4034 = vshll.u32 %v4014, 16
        %v4036 = vrot.slane %v4034, 1
        %v4037 = vor.u32 %v4032, %v4036
        %v4039 = vshll.u32 %v4015, 16
        %v4041 = vrot.slane %v4039, 1
        %v4042 = vsel %vm4030, %v4037, %v4041
        %v4044 = vshrl.u32 %v4016, 16
        %v4046 = vshll.u32 %v4016, 16
        %v4048 = vrot.slane %v4046, 1
        %v4049 = vor.u32 %v4044, %v4048
        %v4051 = vshll.u32 %v4017, 16
        %v4053 = vrot.slane %v4051, 1
        %v4054 = vsel %vm4030, %v4049, %v4053
        %v4056 = vshrl.u32 %v4018, 16
        %v4058 = vshll.u32 %v4018, 16
        %v4060 = vrot.slane %v4058, 1
        %v4061 = vor.u32 %v4056, %v4060
        %v4063 = vshll.u32 %v4019, 16
        %v4065 = vrot.slane %v4063, 1
        %v4066 = vsel %vm4030, %v4061, %v4065
        %v4068 = vshrl.u32 %v4020, 16
        %v4070 = vshll.u32 %v4020, 16
        %v4072 = vrot.slane %v4070, 1
        %v4073 = vor.u32 %v4068, %v4072
        %v4075 = vshll.u32 %v4021, 16
        %v4077 = vrot.slane %v4075, 1
        %v4078 = vsel %vm4030, %v4073, %v4077
        %v4080 = vshrl.u32 %v4022, 16
        %v4082 = vshll.u32 %v4022, 16
        %v4084 = vrot.slane %v4082, 1
        %v4085 = vor.u32 %v4080, %v4084
        %v4087 = vshll.u32 %v4023, 16
        %v4089 = vrot.slane %v4087, 1
        %v4090 = vsel %vm4030, %v4085, %v4089
        %v4092 = vshrl.u32 %v4024, 16
        %v4094 = vshll.u32 %v4024, 16
        %v4096 = vrot.slane %v4094, 1
        %v4097 = vor.u32 %v4092, %v4096
        %v4099 = vshll.u32 %v4025, 16
        %v4101 = vrot.slane %v4099, 1
        %v4102 = vsel %vm4030, %v4097, %v4101
        %v4104 = vshrl.u32 %v4026, 16
        %v4106 = vshll.u32 %v4026, 16
        %v4108 = vrot.slane %v4106, 1
        %v4109 = vor.u32 %v4104, %v4108
        %v4111 = vshll.u32 %v4027, 16
        %v4113 = vrot.slane %v4111, 1
        %v4114 = vsel %vm4030, %v4109, %v4113
        %v4116 = vshrl.u32 %v4028, 16
        %v4118 = vshll.u32 %v4028, 16
        %v4120 = vrot.slane %v4118, 1
        %v4121 = vor.u32 %v4116, %v4120
        %v4123 = vshll.u32 %v4029, 16
        %v4125 = vrot.slane %v4123, 1
        %v4126 = vsel %vm4030, %v4121, %v4125
        %4127 = vrot.lane.b32.xlu0 %v4042, 8
        %v4128 = vpop.permute.xlu0 %4127
        %4129 = vrot.lane.b32.xlu0 %v4054, 8
        %v4130 = vpop.permute.xlu0 %4129
        %4131 = vrot.lane.b32.xlu0 %v4066, 8
        %v4132 = vpop.permute.xlu0 %4131
        %4133 = vrot.lane.b32.xlu0 %v4078, 8
        %v4134 = vpop.permute.xlu0 %4133
        %4135 = vrot.lane.b32.xlu0 %v4090, 8
        %v4136 = vpop.permute.xlu0 %4135
        %4137 = vrot.lane.b32.xlu0 %v4102, 8
        %v4138 = vpop.permute.xlu0 %4137
        %4139 = vrot.lane.b32.xlu0 %v4114, 8
        %v4140 = vpop.permute.xlu0 %4139
        %4141 = vrot.lane.b32.xlu0 %v4126, 8
        %v4142 = vpop.permute.xlu0 %4141
        %vm4151 = vcmask 130112
        %4152 = vst.msk [vmem:[#allocation4] sm:$0xff] %vm4151, %v4128
        %4153 = vst.msk [vmem:[#allocation4 + $0x8] sm:$0xff] %vm4151, %v4130
        %4154 = vst.msk [vmem:[#allocation4 + $0x10] sm:$0xff] %vm4151, %v4132
        %4155 = vst.msk [vmem:[#allocation4 + $0x18] sm:$0xff] %vm4151, %v4134
        %4156 = vst.msk [vmem:[#allocation4 + $0x20] sm:$0xff] %vm4151, %v4136
        %4157 = vst.msk [vmem:[#allocation4 + $0x28] sm:$0xff] %vm4151, %v4138
        %4158 = vst.msk [vmem:[#allocation4 + $0x30] sm:$0xff] %vm4151, %v4140
        %4159 = vst.msk [vmem:[#allocation4 + $0x38] sm:$0xff] %vm4151, %v4142
        %v4160 = vld [vmem:[#allocation3] sm:$0xe]
        %v4161 = vld [vmem:[#allocation3 + $0x4] sm:$0xf]
        %v4162 = vld [vmem:[#allocation3 + $0x8] sm:$0x1]
        %v4163 = vld [vmem:[#allocation3 + $0xc] sm:$0xe]
        %v4164 = vld [vmem:[#allocation3 + $0x10] sm:$0xf]
        %v4165 = vld [vmem:[#allocation3 + $0x14] sm:$0x1]
        %v4166 = vld [vmem:[#allocation3 + $0x18] sm:$0xe]
        %v4167 = vld [vmem:[#allocation3 + $0x1c] sm:$0xf]
        %v4168 = vld [vmem:[#allocation3 + $0x20] sm:$0x1]
        %v4169 = vld [vmem:[#allocation3 + $0x24] sm:$0xe]
        %v4170 = vld [vmem:[#allocation3 + $0x28] sm:$0xf]
        %v4171 = vld [vmem:[#allocation3 + $0x2c] sm:$0x1]
        %v4172 = vld [vmem:[#allocation3 + $0x30] sm:$0xe]
        %v4173 = vld [vmem:[#allocation3 + $0x34] sm:$0xf]
        %v4174 = vld [vmem:[#allocation3 + $0x38] sm:$0x1]
        %v4175 = vld [vmem:[#allocation3 + $0x3c] sm:$0xe]
        %v4176 = vld [vmem:[#allocation3 + $0x40] sm:$0xf]
        %v4177 = vld [vmem:[#allocation3 + $0x44] sm:$0x1]
        %v4178 = vld [vmem:[#allocation3 + $0x48] sm:$0xe]
        %v4179 = vld [vmem:[#allocation3 + $0x4c] sm:$0xf]
        %v4180 = vld [vmem:[#allocation3 + $0x50] sm:$0x1]
        %v4181 = vld [vmem:[#allocation3 + $0x54] sm:$0xe]
        %v4182 = vld [vmem:[#allocation3 + $0x58] sm:$0xf]
        %v4183 = vld [vmem:[#allocation3 + $0x5c] sm:$0x1]
        %v4208 = vunpack.c.l.b16 %v4160
        %v4209 = vunpack.c.l.b16 %v4161
        %v4210 = vunpack.c.l.b16 %v4162
        %v4211 = vunpack.c.l.b16 %v4163
        %v4212 = vunpack.c.l.b16 %v4164
        %v4213 = vunpack.c.l.b16 %v4165
        %v4214 = vunpack.c.l.b16 %v4166
        %v4215 = vunpack.c.l.b16 %v4167
        %v4216 = vunpack.c.l.b16 %v4168
        %v4217 = vunpack.c.l.b16 %v4169
        %v4218 = vunpack.c.l.b16 %v4170
        %v4219 = vunpack.c.l.b16 %v4171
        %v4220 = vunpack.c.l.b16 %v4172
        %v4221 = vunpack.c.l.b16 %v4173
        %v4222 = vunpack.c.l.b16 %v4174
        %v4223 = vunpack.c.l.b16 %v4175
        %v4224 = vunpack.c.l.b16 %v4176
        %v4225 = vunpack.c.l.b16 %v4177
        %v4226 = vunpack.c.l.b16 %v4178
        %v4227 = vunpack.c.l.b16 %v4179
        %v4228 = vunpack.c.l.b16 %v4180
        %v4229 = vunpack.c.l.b16 %v4181
        %v4230 = vunpack.c.l.b16 %v4182
        %v4231 = vunpack.c.l.b16 %v4183
        %v4232 = vpack.c.b16 %v4209, %v4208
        %v4233 = vpack.c.b16 %v4210, %v4210
        %v4234 = vpack.c.b16 %v4212, %v4211
        %v4235 = vpack.c.b16 %v4213, %v4213
        %v4236 = vpack.c.b16 %v4215, %v4214
        %v4237 = vpack.c.b16 %v4216, %v4216
        %v4238 = vpack.c.b16 %v4218, %v4217
        %v4239 = vpack.c.b16 %v4219, %v4219
        %v4240 = vpack.c.b16 %v4221, %v4220
        %v4241 = vpack.c.b16 %v4222, %v4222
        %v4242 = vpack.c.b16 %v4224, %v4223
        %v4243 = vpack.c.b16 %v4225, %v4225
        %v4244 = vpack.c.b16 %v4227, %v4226
        %v4245 = vpack.c.b16 %v4228, %v4228
        %v4246 = vpack.c.b16 %v4230, %v4229
        %v4247 = vpack.c.b16 %v4231, %v4231
        %vm4248 = vcmask 1046528
        %v4249 = vrot.slane %v4232, 1
        %v4250 = vrot.slane %v4233, 1
        %v4251 = vsel %vm4248, %v4249, %v4250
        %v4252 = vrot.slane %v4234, 1
        %v4253 = vrot.slane %v4235, 1
        %v4254 = vsel %vm4248, %v4252, %v4253
        %v4255 = vrot.slane %v4236, 1
        %v4256 = vrot.slane %v4237, 1
        %v4257 = vsel %vm4248, %v4255, %v4256
        %v4258 = vrot.slane %v4238, 1
        %v4259 = vrot.slane %v4239, 1
        %v4260 = vsel %vm4248, %v4258, %v4259
        %v4261 = vrot.slane %v4240, 1
        %v4262 = vrot.slane %v4241, 1
        %v4263 = vsel %vm4248, %v4261, %v4262
        %v4264 = vrot.slane %v4242, 1
        %v4265 = vrot.slane %v4243, 1
        %v4266 = vsel %vm4248, %v4264, %v4265
        %v4267 = vrot.slane %v4244, 1
        %v4268 = vrot.slane %v4245, 1
        %v4269 = vsel %vm4248, %v4267, %v4268
        %v4270 = vrot.slane %v4246, 1
        %v4271 = vrot.slane %v4247, 1
        %v4272 = vsel %vm4248, %v4270, %v4271
        %4273 = vrot.lane.b32.xlu0 %v4251, 16
        %v4274 = vpop.permute.xlu0 %4273
        %4275 = vrot.lane.b32.xlu0 %v4254, 16
        %v4276 = vpop.permute.xlu0 %4275
        %4277 = vrot.lane.b32.xlu0 %v4257, 16
        %v4278 = vpop.permute.xlu0 %4277
        %4279 = vrot.lane.b32.xlu0 %v4260, 16
        %v4280 = vpop.permute.xlu0 %4279
        %4281 = vrot.lane.b32.xlu0 %v4263, 16
        %v4282 = vpop.permute.xlu0 %4281
        %4283 = vrot.lane.b32.xlu0 %v4266, 16
        %v4284 = vpop.permute.xlu0 %4283
        %4285 = vrot.lane.b32.xlu0 %v4269, 16
        %v4286 = vpop.permute.xlu0 %4285
        %4287 = vrot.lane.b32.xlu0 %v4272, 16
        %v4288 = vpop.permute.xlu0 %4287
        %vm4297 = vcmask 195712
        %4298 = vst.msk [vmem:[#allocation4] sm:$0xff] %vm4297, %v4274
        %4299 = vst.msk [vmem:[#allocation4 + $0x8] sm:$0xff] %vm4297, %v4276
        %4300 = vst.msk [vmem:[#allocation4 + $0x10] sm:$0xff] %vm4297, %v4278
        %4301 = vst.msk [vmem:[#allocation4 + $0x18] sm:$0xff] %vm4297, %v4280
        %4302 = vst.msk [vmem:[#allocation4 + $0x20] sm:$0xff] %vm4297, %v4282
        %4303 = vst.msk [vmem:[#allocation4 + $0x28] sm:$0xff] %vm4297, %v4284
        %4304 = vst.msk [vmem:[#allocation4 + $0x30] sm:$0xff] %vm4297, %v4286
        %4305 = vst.msk [vmem:[#allocation4 + $0x38] sm:$0xff] %vm4297, %v4288
        %s4306 = scalar_lea.vmem [#allocation3], 12
        %v4307 = vld [vmem:[%s4306] sm:$0xf]
        %v4308 = vld [vmem:[%s4306 + $0x4] sm:$0xf]
        %v4309 = vld [vmem:[%s4306 + $0xc] sm:$0xf]
        %v4310 = vld [vmem:[%s4306 + $0x10] sm:$0xf]
        %v4311 = vld [vmem:[%s4306 + $0x18] sm:$0xf]
        %v4312 = vld [vmem:[%s4306 + $0x1c] sm:$0xf]
        %v4313 = vld [vmem:[%s4306 + $0x24] sm:$0xf]
        %v4314 = vld [vmem:[%s4306 + $0x28] sm:$0xf]
        %v4315 = vld [vmem:[%s4306 + $0x30] sm:$0xf]
        %v4316 = vld [vmem:[%s4306 + $0x34] sm:$0xf]
        %v4317 = vld [vmem:[%s4306 + $0x3c] sm:$0xf]
        %v4318 = vld [vmem:[%s4306 + $0x40] sm:$0xf]
        %v4319 = vld [vmem:[%s4306 + $0x48] sm:$0xf]
        %v4320 = vld [vmem:[%s4306 + $0x4c] sm:$0xf]
        %v4321 = vld [vmem:[%s4306 + $0x54] sm:$0xf]
        %v4322 = vld [vmem:[%s4306 + $0x58] sm:$0xf]
        %v4339 = vunpack.c.l.b16 %v4307
        %v4340 = vunpack.c.l.b16 %v4308
        %v4341 = vunpack.c.l.b16 %v4309
        %v4342 = vunpack.c.l.b16 %v4310
        %v4343 = vunpack.c.l.b16 %v4311
        %v4344 = vunpack.c.l.b16 %v4312
        %v4345 = vunpack.c.l.b16 %v4313
        %v4346 = vunpack.c.l.b16 %v4314
        %v4347 = vunpack.c.l.b16 %v4315
        %v4348 = vunpack.c.l.b16 %v4316
        %v4349 = vunpack.c.l.b16 %v4317
        %v4350 = vunpack.c.l.b16 %v4318
        %v4351 = vunpack.c.l.b16 %v4319
        %v4352 = vunpack.c.l.b16 %v4320
        %v4353 = vunpack.c.l.b16 %v4321
        %v4354 = vunpack.c.l.b16 %v4322
        %v4355 = vpack.c.b16 %v4340, %v4339
        %v4356 = vpack.c.b16 %v4342, %v4341
        %v4357 = vpack.c.b16 %v4344, %v4343
        %v4358 = vpack.c.b16 %v4346, %v4345
        %v4359 = vpack.c.b16 %v4348, %v4347
        %v4360 = vpack.c.b16 %v4350, %v4349
        %v4361 = vpack.c.b16 %v4352, %v4351
        %v4362 = vpack.c.b16 %v4354, %v4353
        %4363 = vrot.lane.b32.xlu0 %v4355, 24
        %v4364 = vpop.permute.xlu0 %4363
        %4365 = vrot.lane.b32.xlu0 %v4356, 24
        %v4366 = vpop.permute.xlu0 %4365
        %4367 = vrot.lane.b32.xlu0 %v4357, 24
        %v4368 = vpop.permute.xlu0 %4367
        %4369 = vrot.lane.b32.xlu0 %v4358, 24
        %v4370 = vpop.permute.xlu0 %4369
        %4371 = vrot.lane.b32.xlu0 %v4359, 24
        %v4372 = vpop.permute.xlu0 %4371
        %4373 = vrot.lane.b32.xlu0 %v4360, 24
        %v4374 = vpop.permute.xlu0 %4373
        %4375 = vrot.lane.b32.xlu0 %v4361, 24
        %v4376 = vpop.permute.xlu0 %4375
        %4377 = vrot.lane.b32.xlu0 %v4362, 24
        %v4378 = vpop.permute.xlu0 %4377
        %vm4387 = vcmask 261312
        %4388 = vst.msk [vmem:[#allocation4] sm:$0xff] %vm4387, %v4364
        %4389 = vst.msk [vmem:[#allocation4 + $0x8] sm:$0xff] %vm4387, %v4366
        %4390 = vst.msk [vmem:[#allocation4 + $0x10] sm:$0xff] %vm4387, %v4368
        %4391 = vst.msk [vmem:[#allocation4 + $0x18] sm:$0xff] %vm4387, %v4370
        %4392 = vst.msk [vmem:[#allocation4 + $0x20] sm:$0xff] %vm4387, %v4372
        %4393 = vst.msk [vmem:[#allocation4 + $0x28] sm:$0xff] %vm4387, %v4374
        %4394 = vst.msk [vmem:[#allocation4 + $0x30] sm:$0xff] %vm4387, %v4376
        %4395 = vst.msk [vmem:[#allocation4 + $0x38] sm:$0xff] %vm4387, %v4378
        %v4396 = vld [vmem:[%s4306] sm:$0xf]
        %v4397 = vld [vmem:[%s4306 + $0x4] sm:$0xf]
        %v4398 = vld [vmem:[%s4306 + $0x8] sm:$0x1]
        %v4399 = vld [vmem:[%s4306 + $0xc] sm:$0xf]
        %v4400 = vld [vmem:[%s4306 + $0x10] sm:$0xf]
        %v4401 = vld [vmem:[%s4306 + $0x14] sm:$0x1]
        %v4402 = vld [vmem:[%s4306 + $0x18] sm:$0xf]
        %v4403 = vld [vmem:[%s4306 + $0x1c] sm:$0xf]
        %v4404 = vld [vmem:[%s4306 + $0x20] sm:$0x1]
        %v4405 = vld [vmem:[%s4306 + $0x24] sm:$0xf]
        %v4406 = vld [vmem:[%s4306 + $0x28] sm:$0xf]
        %v4407 = vld [vmem:[%s4306 + $0x2c] sm:$0x1]
        %v4408 = vld [vmem:[%s4306 + $0x30] sm:$0xf]
        %v4409 = vld [vmem:[%s4306 + $0x34] sm:$0xf]
        %v4410 = vld [vmem:[%s4306 + $0x38] sm:$0x1]
        %v4411 = vld [vmem:[%s4306 + $0x3c] sm:$0xf]
        %v4412 = vld [vmem:[%s4306 + $0x40] sm:$0xf]
        %v4413 = vld [vmem:[%s4306 + $0x44] sm:$0x1]
        %v4414 = vld [vmem:[%s4306 + $0x48] sm:$0xf]
        %v4415 = vld [vmem:[%s4306 + $0x4c] sm:$0xf]
        %v4416 = vld [vmem:[%s4306 + $0x50] sm:$0x1]
        %v4417 = vld [vmem:[%s4306 + $0x54] sm:$0xf]
        %v4418 = vld [vmem:[%s4306 + $0x58] sm:$0xf]
        %v4419 = vld [vmem:[%s4306 + $0x5c] sm:$0x1]
        %v4444 = vunpack.c.l.b16 %v4396
        %v4445 = vunpack.c.l.b16 %v4397
        %v4446 = vunpack.c.l.b16 %v4398
        %v4447 = vunpack.c.l.b16 %v4399
        %v4448 = vunpack.c.l.b16 %v4400
        %v4449 = vunpack.c.l.b16 %v4401
        %v4450 = vunpack.c.l.b16 %v4402
        %v4451 = vunpack.c.l.b16 %v4403
        %v4452 = vunpack.c.l.b16 %v4404
        %v4453 = vunpack.c.l.b16 %v4405
        %v4454 = vunpack.c.l.b16 %v4406
        %v4455 = vunpack.c.l.b16 %v4407
        %v4456 = vunpack.c.l.b16 %v4408
        %v4457 = vunpack.c.l.b16 %v4409
        %v4458 = vunpack.c.l.b16 %v4410
        %v4459 = vunpack.c.l.b16 %v4411
        %v4460 = vunpack.c.l.b16 %v4412
        %v4461 = vunpack.c.l.b16 %v4413
        %v4462 = vunpack.c.l.b16 %v4414
        %v4463 = vunpack.c.l.b16 %v4415
        %v4464 = vunpack.c.l.b16 %v4416
        %v4465 = vunpack.c.l.b16 %v4417
        %v4466 = vunpack.c.l.b16 %v4418
        %v4467 = vunpack.c.l.b16 %v4419
        %v4468 = vpack.c.b16 %v4445, %v4444
        %v4469 = vpack.c.b16 %v4446, %v4446
        %v4470 = vpack.c.b16 %v4448, %v4447
        %v4471 = vpack.c.b16 %v4449, %v4449
        %v4472 = vpack.c.b16 %v4451, %v4450
        %v4473 = vpack.c.b16 %v4452, %v4452
        %v4474 = vpack.c.b16 %v4454, %v4453
        %v4475 = vpack.c.b16 %v4455, %v4455
        %v4476 = vpack.c.b16 %v4457, %v4456
        %v4477 = vpack.c.b16 %v4458, %v4458
        %v4478 = vpack.c.b16 %v4460, %v4459
        %v4479 = vpack.c.b16 %v4461, %v4461
        %v4480 = vpack.c.b16 %v4463, %v4462
        %v4481 = vpack.c.b16 %v4464, %v4464
        %v4482 = vpack.c.b16 %v4466, %v4465
        %v4483 = vpack.c.b16 %v4467, %v4467
        %v4485 = vshrl.u32 %v4468, 16
        %v4487 = vshll.u32 %v4468, 16
        %v4489 = vrot.slane %v4487, 1
        %v4490 = vor.u32 %v4485, %v4489
        %v4492 = vshll.u32 %v4469, 16
        %v4494 = vrot.slane %v4492, 1
        %v4495 = vsel %vm4030, %v4490, %v4494
        %v4497 = vshrl.u32 %v4470, 16
        %v4499 = vshll.u32 %v4470, 16
        %v4501 = vrot.slane %v4499, 1
        %v4502 = vor.u32 %v4497, %v4501
        %v4504 = vshll.u32 %v4471, 16
        %v4506 = vrot.slane %v4504, 1
        %v4507 = vsel %vm4030, %v4502, %v4506
        %v4509 = vshrl.u32 %v4472, 16
        %v4511 = vshll.u32 %v4472, 16
        %v4513 = vrot.slane %v4511, 1
        %v4514 = vor.u32 %v4509, %v4513
        %v4516 = vshll.u32 %v4473, 16
        %v4518 = vrot.slane %v4516, 1
        %v4519 = vsel %vm4030, %v4514, %v4518
        %v4521 = vshrl.u32 %v4474, 16
        %v4523 = vshll.u32 %v4474, 16
        %v4525 = vrot.slane %v4523, 1
        %v4526 = vor.u32 %v4521, %v4525
        %v4528 = vshll.u32 %v4475, 16
        %v4530 = vrot.slane %v4528, 1
        %v4531 = vsel %vm4030, %v4526, %v4530
        %v4533 = vshrl.u32 %v4476, 16
        %v4535 = vshll.u32 %v4476, 16
        %v4537 = vrot.slane %v4535, 1
        %v4538 = vor.u32 %v4533, %v4537
        %v4540 = vshll.u32 %v4477, 16
        %v4542 = vrot.slane %v4540, 1
        %v4543 = vsel %vm4030, %v4538, %v4542
        %v4545 = vshrl.u32 %v4478, 16
        %v4547 = vshll.u32 %v4478, 16
        %v4549 = vrot.slane %v4547, 1
        %v4550 = vor.u32 %v4545, %v4549
        %v4552 = vshll.u32 %v4479, 16
        %v4554 = vrot.slane %v4552, 1
        %v4555 = vsel %vm4030, %v4550, %v4554
        %v4557 = vshrl.u32 %v4480, 16
        %v4559 = vshll.u32 %v4480, 16
        %v4561 = vrot.slane %v4559, 1
        %v4562 = vor.u32 %v4557, %v4561
        %v4564 = vshll.u32 %v4481, 16
        %v4566 = vrot.slane %v4564, 1
        %v4567 = vsel %vm4030, %v4562, %v4566
        %v4569 = vshrl.u32 %v4482, 16
        %v4571 = vshll.u32 %v4482, 16
        %v4573 = vrot.slane %v4571, 1
        %v4574 = vor.u32 %v4569, %v4573
        %v4576 = vshll.u32 %v4483, 16
        %v4578 = vrot.slane %v4576, 1
        %v4579 = vsel %vm4030, %v4574, %v4578
        %4580 = vrot.lane.b32.xlu0 %v4495, 32
        %v4581 = vpop.permute.xlu0 %4580
        %4582 = vrot.lane.b32.xlu0 %v4507, 32
        %v4583 = vpop.permute.xlu0 %4582
        %4584 = vrot.lane.b32.xlu0 %v4519, 32
        %v4585 = vpop.permute.xlu0 %4584
        %4586 = vrot.lane.b32.xlu0 %v4531, 32
        %v4587 = vpop.permute.xlu0 %4586
        %4588 = vrot.lane.b32.xlu0 %v4543, 32
        %v4589 = vpop.permute.xlu0 %4588
        %4590 = vrot.lane.b32.xlu0 %v4555, 32
        %v4591 = vpop.permute.xlu0 %4590
        %4592 = vrot.lane.b32.xlu0 %v4567, 32
        %v4593 = vpop.permute.xlu0 %4592
        %4594 = vrot.lane.b32.xlu0 %v4579, 32
        %v4595 = vpop.permute.xlu0 %4594
        %vm4604 = vcmask 326912
        %4605 = vst.msk [vmem:[#allocation4] sm:$0xff] %vm4604, %v4581
        %4606 = vst.msk [vmem:[#allocation4 + $0x8] sm:$0xff] %vm4604, %v4583
        %4607 = vst.msk [vmem:[#allocation4 + $0x10] sm:$0xff] %vm4604, %v4585
        %4608 = vst.msk [vmem:[#allocation4 + $0x18] sm:$0xff] %vm4604, %v4587
        %4609 = vst.msk [vmem:[#allocation4 + $0x20] sm:$0xff] %vm4604, %v4589
        %4610 = vst.msk [vmem:[#allocation4 + $0x28] sm:$0xff] %vm4604, %v4591
        %4611 = vst.msk [vmem:[#allocation4 + $0x30] sm:$0xff] %vm4604, %v4593
        %4612 = vst.msk [vmem:[#allocation4 + $0x38] sm:$0xff] %vm4604, %v4595
        %v4613 = vld [vmem:[%s4306] sm:$0xe]
        %v4614 = vld [vmem:[%s4306 + $0x4] sm:$0xf]
        %v4615 = vld [vmem:[%s4306 + $0x8] sm:$0x1]
        %v4616 = vld [vmem:[%s4306 + $0xc] sm:$0xe]
        %v4617 = vld [vmem:[%s4306 + $0x10] sm:$0xf]
        %v4618 = vld [vmem:[%s4306 + $0x14] sm:$0x1]
        %v4619 = vld [vmem:[%s4306 + $0x18] sm:$0xe]
        %v4620 = vld [vmem:[%s4306 + $0x1c] sm:$0xf]
        %v4621 = vld [vmem:[%s4306 + $0x20] sm:$0x1]
        %v4622 = vld [vmem:[%s4306 + $0x24] sm:$0xe]
        %v4623 = vld [vmem:[%s4306 + $0x28] sm:$0xf]
        %v4624 = vld [vmem:[%s4306 + $0x2c] sm:$0x1]
        %v4625 = vld [vmem:[%s4306 + $0x30] sm:$0xe]
        %v4626 = vld [vmem:[%s4306 + $0x34] sm:$0xf]
        %v4627 = vld [vmem:[%s4306 + $0x38] sm:$0x1]
        %v4628 = vld [vmem:[%s4306 + $0x3c] sm:$0xe]
        %v4629 = vld [vmem:[%s4306 + $0x40] sm:$0xf]
        %v4630 = vld [vmem:[%s4306 + $0x44] sm:$0x1]
        %v4631 = vld [vmem:[%s4306 + $0x48] sm:$0xe]
        %v4632 = vld [vmem:[%s4306 + $0x4c] sm:$0xf]
        %v4633 = vld [vmem:[%s4306 + $0x50] sm:$0x1]
        %v4634 = vld [vmem:[%s4306 + $0x54] sm:$0xe]
        %v4635 = vld [vmem:[%s4306 + $0x58] sm:$0xf]
        %v4636 = vld [vmem:[%s4306 + $0x5c] sm:$0x1]
        %v4661 = vunpack.c.l.b16 %v4613
        %v4662 = vunpack.c.l.b16 %v4614
        %v4663 = vunpack.c.l.b16 %v4615
        %v4664 = vunpack.c.l.b16 %v4616
        %v4665 = vunpack.c.l.b16 %v4617
        %v4666 = vunpack.c.l.b16 %v4618
        %v4667 = vunpack.c.l.b16 %v4619
        %v4668 = vunpack.c.l.b16 %v4620
        %v4669 = vunpack.c.l.b16 %v4621
        %v4670 = vunpack.c.l.b16 %v4622
        %v4671 = vunpack.c.l.b16 %v4623
        %v4672 = vunpack.c.l.b16 %v4624
        %v4673 = vunpack.c.l.b16 %v4625
        %v4674 = vunpack.c.l.b16 %v4626
        %v4675 = vunpack.c.l.b16 %v4627
        %v4676 = vunpack.c.l.b16 %v4628
        %v4677 = vunpack.c.l.b16 %v4629
        %v4678 = vunpack.c.l.b16 %v4630
        %v4679 = vunpack.c.l.b16 %v4631
        %v4680 = vunpack.c.l.b16 %v4632
        %v4681 = vunpack.c.l.b16 %v4633
        %v4682 = vunpack.c.l.b16 %v4634
        %v4683 = vunpack.c.l.b16 %v4635
        %v4684 = vunpack.c.l.b16 %v4636
        %v4685 = vpack.c.b16 %v4662, %v4661
        %v4686 = vpack.c.b16 %v4663, %v4663
        %v4687 = vpack.c.b16 %v4665, %v4664
        %v4688 = vpack.c.b16 %v4666, %v4666
        %v4689 = vpack.c.b16 %v4668, %v4667
        %v4690 = vpack.c.b16 %v4669, %v4669
        %v4691 = vpack.c.b16 %v4671, %v4670
        %v4692 = vpack.c.b16 %v4672, %v4672
        %v4693 = vpack.c.b16 %v4674, %v4673
        %v4694 = vpack.c.b16 %v4675, %v4675
        %v4695 = vpack.c.b16 %v4677, %v4676
        %v4696 = vpack.c.b16 %v4678, %v4678
        %v4697 = vpack.c.b16 %v4680, %v4679
        %v4698 = vpack.c.b16 %v4681, %v4681
        %v4699 = vpack.c.b16 %v4683, %v4682
        %v4700 = vpack.c.b16 %v4684, %v4684
        %v4701 = vrot.slane %v4685, 1
        %v4702 = vrot.slane %v4686, 1
        %v4703 = vsel %vm4248, %v4701, %v4702
        %v4704 = vrot.slane %v4687, 1
        %v4705 = vrot.slane %v4688, 1
        %v4706 = vsel %vm4248, %v4704, %v4705
        %v4707 = vrot.slane %v4689, 1
        %v4708 = vrot.slane %v4690, 1
        %v4709 = vsel %vm4248, %v4707, %v4708
        %v4710 = vrot.slane %v4691, 1
        %v4711 = vrot.slane %v4692, 1
        %v4712 = vsel %vm4248, %v4710, %v4711
        %v4713 = vrot.slane %v4693, 1
        %v4714 = vrot.slane %v4694, 1
        %v4715 = vsel %vm4248, %v4713, %v4714
        %v4716 = vrot.slane %v4695, 1
        %v4717 = vrot.slane %v4696, 1
        %v4718 = vsel %vm4248, %v4716, %v4717
        %v4719 = vrot.slane %v4697, 1
        %v4720 = vrot.slane %v4698, 1
        %v4721 = vsel %vm4248, %v4719, %v4720
        %v4722 = vrot.slane %v4699, 1
        %v4723 = vrot.slane %v4700, 1
        %v4724 = vsel %vm4248, %v4722, %v4723
        %4725 = vrot.lane.b32.xlu0 %v4703, 40
        %v4726 = vpop.permute.xlu0 %4725
        %4727 = vrot.lane.b32.xlu0 %v4706, 40
        %v4728 = vpop.permute.xlu0 %4727
        %4729 = vrot.lane.b32.xlu0 %v4709, 40
        %v4730 = vpop.permute.xlu0 %4729
        %4731 = vrot.lane.b32.xlu0 %v4712, 40
        %v4732 = vpop.permute.xlu0 %4731
        %4733 = vrot.lane.b32.xlu0 %v4715, 40
        %v4734 = vpop.permute.xlu0 %4733
        %4735 = vrot.lane.b32.xlu0 %v4718, 40
        %v4736 = vpop.permute.xlu0 %4735
        %4737 = vrot.lane.b32.xlu0 %v4721, 40
        %v4738 = vpop.permute.xlu0 %4737
        %4739 = vrot.lane.b32.xlu0 %v4724, 40
        %v4740 = vpop.permute.xlu0 %4739
        %vm4749 = vcmask 392512
        %4750 = vst.msk [vmem:[#allocation4] sm:$0xff] %vm4749, %v4726
        %4751 = vst.msk [vmem:[#allocation4 + $0x8] sm:$0xff] %vm4749, %v4728
        %4752 = vst.msk [vmem:[#allocation4 + $0x10] sm:$0xff] %vm4749, %v4730
        %4753 = vst.msk [vmem:[#allocation4 + $0x18] sm:$0xff] %vm4749, %v4732
        %4754 = vst.msk [vmem:[#allocation4 + $0x20] sm:$0xff] %vm4749, %v4734
        %4755 = vst.msk [vmem:[#allocation4 + $0x28] sm:$0xff] %vm4749, %v4736
        %4756 = vst.msk [vmem:[#allocation4 + $0x30] sm:$0xff] %vm4749, %v4738
        %4757 = vst.msk [vmem:[#allocation4 + $0x38] sm:$0xff] %vm4749, %v4740
        %s4758 = scalar_lea.vmem [#allocation3], 24
        %v4759 = vld [vmem:[%s4758] sm:$0xf]
        %v4760 = vld [vmem:[%s4758 + $0x4] sm:$0xf]
        %v4761 = vld [vmem:[%s4758 + $0xc] sm:$0xf]
        %v4762 = vld [vmem:[%s4758 + $0x10] sm:$0xf]
        %v4763 = vld [vmem:[%s4758 + $0x18] sm:$0xf]
        %v4764 = vld [vmem:[%s4758 + $0x1c] sm:$0xf]
        %v4765 = vld [vmem:[%s4758 + $0x24] sm:$0xf]
        %v4766 = vld [vmem:[%s4758 + $0x28] sm:$0xf]
        %v4767 = vld [vmem:[%s4758 + $0x30] sm:$0xf]
        %v4768 = vld [vmem:[%s4758 + $0x34] sm:$0xf]
        %v4769 = vld [vmem:[%s4758 + $0x3c] sm:$0xf]
        %v4770 = vld [vmem:[%s4758 + $0x40] sm:$0xf]
        %v4771 = vld [vmem:[%s4758 + $0x48] sm:$0xf]
        %v4772 = vld [vmem:[%s4758 + $0x4c] sm:$0xf]
        %v4773 = vld [vmem:[%s4758 + $0x54] sm:$0xf]
        %v4774 = vld [vmem:[%s4758 + $0x58] sm:$0xf]
        %v4791 = vunpack.c.l.b16 %v4759
        %v4792 = vunpack.c.l.b16 %v4760
        %v4793 = vunpack.c.l.b16 %v4761
        %v4794 = vunpack.c.l.b16 %v4762
        %v4795 = vunpack.c.l.b16 %v4763
        %v4796 = vunpack.c.l.b16 %v4764
        %v4797 = vunpack.c.l.b16 %v4765
        %v4798 = vunpack.c.l.b16 %v4766
        %v4799 = vunpack.c.l.b16 %v4767
        %v4800 = vunpack.c.l.b16 %v4768
        %v4801 = vunpack.c.l.b16 %v4769
        %v4802 = vunpack.c.l.b16 %v4770
        %v4803 = vunpack.c.l.b16 %v4771
        %v4804 = vunpack.c.l.b16 %v4772
        %v4805 = vunpack.c.l.b16 %v4773
        %v4806 = vunpack.c.l.b16 %v4774
        %v4807 = vpack.c.b16 %v4792, %v4791
        %v4808 = vpack.c.b16 %v4794, %v4793
        %v4809 = vpack.c.b16 %v4796, %v4795
        %v4810 = vpack.c.b16 %v4798, %v4797
        %v4811 = vpack.c.b16 %v4800, %v4799
        %v4812 = vpack.c.b16 %v4802, %v4801
        %v4813 = vpack.c.b16 %v4804, %v4803
        %v4814 = vpack.c.b16 %v4806, %v4805
        %4815 = vrot.lane.b32.xlu0 %v4807, 48
        %v4816 = vpop.permute.xlu0 %4815
        %4817 = vrot.lane.b32.xlu0 %v4808, 48
        %v4818 = vpop.permute.xlu0 %4817
        %4819 = vrot.lane.b32.xlu0 %v4809, 48
        %v4820 = vpop.permute.xlu0 %4819
        %4821 = vrot.lane.b32.xlu0 %v4810, 48
        %v4822 = vpop.permute.xlu0 %4821
        %4823 = vrot.lane.b32.xlu0 %v4811, 48
        %v4824 = vpop.permute.xlu0 %4823
        %4825 = vrot.lane.b32.xlu0 %v4812, 48
        %v4826 = vpop.permute.xlu0 %4825
        %4827 = vrot.lane.b32.xlu0 %v4813, 48
        %v4828 = vpop.permute.xlu0 %4827
        %4829 = vrot.lane.b32.xlu0 %v4814, 48
        %v4830 = vpop.permute.xlu0 %4829
        %vm4839 = vcmask 458112
        %4840 = vst.msk [vmem:[#allocation4] sm:$0xff] %vm4839, %v4816
        %4841 = vst.msk [vmem:[#allocation4 + $0x8] sm:$0xff] %vm4839, %v4818
        %4842 = vst.msk [vmem:[#allocation4 + $0x10] sm:$0xff] %vm4839, %v4820
        %4843 = vst.msk [vmem:[#allocation4 + $0x18] sm:$0xff] %vm4839, %v4822
        %4844 = vst.msk [vmem:[#allocation4 + $0x20] sm:$0xff] %vm4839, %v4824
        %4845 = vst.msk [vmem:[#allocation4 + $0x28] sm:$0xff] %vm4839, %v4826
        %4846 = vst.msk [vmem:[#allocation4 + $0x30] sm:$0xff] %vm4839, %v4828
        %4847 = vst.msk [vmem:[#allocation4 + $0x38] sm:$0xff] %vm4839, %v4830
        %v4848 = vld [vmem:[%s4758] sm:$0xf]
        %v4849 = vld [vmem:[%s4758 + $0x4] sm:$0xf]
        %v4850 = vld [vmem:[%s4758 + $0x8] sm:$0x1]
        %v4851 = vld [vmem:[%s4758 + $0xc] sm:$0xf]
        %v4852 = vld [vmem:[%s4758 + $0x10] sm:$0xf]
        %v4853 = vld [vmem:[%s4758 + $0x14] sm:$0x1]
        %v4854 = vld [vmem:[%s4758 + $0x18] sm:$0xf]
        %v4855 = vld [vmem:[%s4758 + $0x1c] sm:$0xf]
        %v4856 = vld [vmem:[%s4758 + $0x20] sm:$0x1]
        %v4857 = vld [vmem:[%s4758 + $0x24] sm:$0xf]
        %v4858 = vld [vmem:[%s4758 + $0x28] sm:$0xf]
        %v4859 = vld [vmem:[%s4758 + $0x2c] sm:$0x1]
        %v4860 = vld [vmem:[%s4758 + $0x30] sm:$0xf]
        %v4861 = vld [vmem:[%s4758 + $0x34] sm:$0xf]
        %v4862 = vld [vmem:[%s4758 + $0x38] sm:$0x1]
        %v4863 = vld [vmem:[%s4758 + $0x3c] sm:$0xf]
        %v4864 = vld [vmem:[%s4758 + $0x40] sm:$0xf]
        %v4865 = vld [vmem:[%s4758 + $0x44] sm:$0x1]
        %v4866 = vld [vmem:[%s4758 + $0x48] sm:$0xf]
        %v4867 = vld [vmem:[%s4758 + $0x4c] sm:$0xf]
        %v4868 = vld [vmem:[%s4758 + $0x50] sm:$0x1]
        %v4869 = vld [vmem:[%s4758 + $0x54] sm:$0xf]
        %v4870 = vld [vmem:[%s4758 + $0x58] sm:$0xf]
        %v4871 = vld [vmem:[%s4758 + $0x5c] sm:$0x1]
        %v4896 = vunpack.c.l.b16 %v4848
        %v4897 = vunpack.c.l.b16 %v4849
        %v4898 = vunpack.c.l.b16 %v4850
        %v4899 = vunpack.c.l.b16 %v4851
        %v4900 = vunpack.c.l.b16 %v4852
        %v4901 = vunpack.c.l.b16 %v4853
        %v4902 = vunpack.c.l.b16 %v4854
        %v4903 = vunpack.c.l.b16 %v4855
        %v4904 = vunpack.c.l.b16 %v4856
        %v4905 = vunpack.c.l.b16 %v4857
        %v4906 = vunpack.c.l.b16 %v4858
        %v4907 = vunpack.c.l.b16 %v4859
        %v4908 = vunpack.c.l.b16 %v4860
        %v4909 = vunpack.c.l.b16 %v4861
        %v4910 = vunpack.c.l.b16 %v4862
        %v4911 = vunpack.c.l.b16 %v4863
        %v4912 = vunpack.c.l.b16 %v4864
        %v4913 = vunpack.c.l.b16 %v4865
        %v4914 = vunpack.c.l.b16 %v4866
        %v4915 = vunpack.c.l.b16 %v4867
        %v4916 = vunpack.c.l.b16 %v4868
        %v4917 = vunpack.c.l.b16 %v4869
        %v4918 = vunpack.c.l.b16 %v4870
        %v4919 = vunpack.c.l.b16 %v4871
        %v4920 = vpack.c.b16 %v4897, %v4896
        %v4921 = vpack.c.b16 %v4898, %v4898
        %v4922 = vpack.c.b16 %v4900, %v4899
        %v4923 = vpack.c.b16 %v4901, %v4901
        %v4924 = vpack.c.b16 %v4903, %v4902
        %v4925 = vpack.c.b16 %v4904, %v4904
        %v4926 = vpack.c.b16 %v4906, %v4905
        %v4927 = vpack.c.b16 %v4907, %v4907
        %v4928 = vpack.c.b16 %v4909, %v4908
        %v4929 = vpack.c.b16 %v4910, %v4910
        %v4930 = vpack.c.b16 %v4912, %v4911
        %v4931 = vpack.c.b16 %v4913, %v4913
        %v4932 = vpack.c.b16 %v4915, %v4914
        %v4933 = vpack.c.b16 %v4916, %v4916
        %v4934 = vpack.c.b16 %v4918, %v4917
        %v4935 = vpack.c.b16 %v4919, %v4919
        %v4937 = vshrl.u32 %v4920, 16
        %v4939 = vshll.u32 %v4920, 16
        %v4941 = vrot.slane %v4939, 1
        %v4942 = vor.u32 %v4937, %v4941
        %v4944 = vshll.u32 %v4921, 16
        %v4946 = vrot.slane %v4944, 1
        %v4947 = vsel %vm4030, %v4942, %v4946
        %v4949 = vshrl.u32 %v4922, 16
        %v4951 = vshll.u32 %v4922, 16
        %v4953 = vrot.slane %v4951, 1
        %v4954 = vor.u32 %v4949, %v4953
        %v4956 = vshll.u32 %v4923, 16
        %v4958 = vrot.slane %v4956, 1
        %v4959 = vsel %vm4030, %v4954, %v4958
        %v4961 = vshrl.u32 %v4924, 16
        %v4963 = vshll.u32 %v4924, 16
        %v4965 = vrot.slane %v4963, 1
        %v4966 = vor.u32 %v4961, %v4965
        %v4968 = vshll.u32 %v4925, 16
        %v4970 = vrot.slane %v4968, 1
        %v4971 = vsel %vm4030, %v4966, %v4970
        %v4973 = vshrl.u32 %v4926, 16
        %v4975 = vshll.u32 %v4926, 16
        %v4977 = vrot.slane %v4975, 1
        %v4978 = vor.u32 %v4973, %v4977
        %v4980 = vshll.u32 %v4927, 16
        %v4982 = vrot.slane %v4980, 1
        %v4983 = vsel %vm4030, %v4978, %v4982
        %v4985 = vshrl.u32 %v4928, 16
        %v4987 = vshll.u32 %v4928, 16
        %v4989 = vrot.slane %v4987, 1
        %v4990 = vor.u32 %v4985, %v4989
        %v4992 = vshll.u32 %v4929, 16
        %v4994 = vrot.slane %v4992, 1
        %v4995 = vsel %vm4030, %v4990, %v4994
        %v4997 = vshrl.u32 %v4930, 16
        %v4999 = vshll.u32 %v4930, 16
        %v5001 = vrot.slane %v4999, 1
        %v5002 = vor.u32 %v4997, %v5001
        %v5004 = vshll.u32 %v4931, 16
        %v5006 = vrot.slane %v5004, 1
        %v5007 = vsel %vm4030, %v5002, %v5006
        %v5009 = vshrl.u32 %v4932, 16
        %v5011 = vshll.u32 %v4932, 16
        %v5013 = vrot.slane %v5011, 1
        %v5014 = vor.u32 %v5009, %v5013
        %v5016 = vshll.u32 %v4933, 16
        %v5018 = vrot.slane %v5016, 1
        %v5019 = vsel %vm4030, %v5014, %v5018
        %v5021 = vshrl.u32 %v4934, 16
        %v5023 = vshll.u32 %v4934, 16
        %v5025 = vrot.slane %v5023, 1
        %v5026 = vor.u32 %v5021, %v5025
        %v5028 = vshll.u32 %v4935, 16
        %v5030 = vrot.slane %v5028, 1
        %v5031 = vsel %vm4030, %v5026, %v5030
        %5032 = vrot.lane.b32.xlu0 %v4947, 56
        %v5033 = vpop.permute.xlu0 %5032
        %5034 = vrot.lane.b32.xlu0 %v4959, 56
        %v5035 = vpop.permute.xlu0 %5034
        %5036 = vrot.lane.b32.xlu0 %v4971, 56
        %v5037 = vpop.permute.xlu0 %5036
        %5038 = vrot.lane.b32.xlu0 %v4983, 56
        %v5039 = vpop.permute.xlu0 %5038
        %5040 = vrot.lane.b32.xlu0 %v4995, 56
        %v5041 = vpop.permute.xlu0 %5040
        %5042 = vrot.lane.b32.xlu0 %v5007, 56
        %v5043 = vpop.permute.xlu0 %5042
        %5044 = vrot.lane.b32.xlu0 %v5019, 56
        %v5045 = vpop.permute.xlu0 %5044
        %5046 = vrot.lane.b32.xlu0 %v5031, 56
        %v5047 = vpop.permute.xlu0 %5046
        %vm5056 = vcmask 523712
        %5057 = vst.msk [vmem:[#allocation4] sm:$0xff] %vm5056, %v5033
        %5058 = vst.msk [vmem:[#allocation4 + $0x8] sm:$0xff] %vm5056, %v5035
        %5059 = vst.msk [vmem:[#allocation4 + $0x10] sm:$0xff] %vm5056, %v5037
        %5060 = vst.msk [vmem:[#allocation4 + $0x18] sm:$0xff] %vm5056, %v5039
        %5061 = vst.msk [vmem:[#allocation4 + $0x20] sm:$0xff] %vm5056, %v5041
        %5062 = vst.msk [vmem:[#allocation4 + $0x28] sm:$0xff] %vm5056, %v5043
        %5063 = vst.msk [vmem:[#allocation4 + $0x30] sm:$0xff] %vm5056, %v5045
        %5064 = vst.msk [vmem:[#allocation4 + $0x38] sm:$0xff] %vm5056, %v5047
        %v5065 = vld [vmem:[%s4758] sm:$0xe]
        %v5066 = vld [vmem:[%s4758 + $0x4] sm:$0xf]
        %v5067 = vld [vmem:[%s4758 + $0x8] sm:$0x1]
        %v5068 = vld [vmem:[%s4758 + $0xc] sm:$0xe]
        %v5069 = vld [vmem:[%s4758 + $0x10] sm:$0xf]
        %v5070 = vld [vmem:[%s4758 + $0x14] sm:$0x1]
        %v5071 = vld [vmem:[%s4758 + $0x18] sm:$0xe]
        %v5072 = vld [vmem:[%s4758 + $0x1c] sm:$0xf]
        %v5073 = vld [vmem:[%s4758 + $0x20] sm:$0x1]
        %v5074 = vld [vmem:[%s4758 + $0x24] sm:$0xe]
        %v5075 = vld [vmem:[%s4758 + $0x28] sm:$0xf]
        %v5076 = vld [vmem:[%s4758 + $0x2c] sm:$0x1]
        %v5077 = vld [vmem:[%s4758 + $0x30] sm:$0xe]
        %v5078 = vld [vmem:[%s4758 + $0x34] sm:$0xf]
        %v5079 = vld [vmem:[%s4758 + $0x38] sm:$0x1]
        %v5080 = vld [vmem:[%s4758 + $0x3c] sm:$0xe]
        %v5081 = vld [vmem:[%s4758 + $0x40] sm:$0xf]
        %v5082 = vld [vmem:[%s4758 + $0x44] sm:$0x1]
        %v5083 = vld [vmem:[%s4758 + $0x48] sm:$0xe]
        %v5084 = vld [vmem:[%s4758 + $0x4c] sm:$0xf]
        %v5085 = vld [vmem:[%s4758 + $0x50] sm:$0x1]
        %v5086 = vld [vmem:[%s4758 + $0x54] sm:$0xe]
        %v5087 = vld [vmem:[%s4758 + $0x58] sm:$0xf]
        %v5088 = vld [vmem:[%s4758 + $0x5c] sm:$0x1]
        %v5113 = vunpack.c.l.b16 %v5065
        %v5114 = vunpack.c.l.b16 %v5066
        %v5115 = vunpack.c.l.b16 %v5067
        %v5116 = vunpack.c.l.b16 %v5068
        %v5117 = vunpack.c.l.b16 %v5069
        %v5118 = vunpack.c.l.b16 %v5070
        %v5119 = vunpack.c.l.b16 %v5071
        %v5120 = vunpack.c.l.b16 %v5072
        %v5121 = vunpack.c.l.b16 %v5073
        %v5122 = vunpack.c.l.b16 %v5074
        %v5123 = vunpack.c.l.b16 %v5075
        %v5124 = vunpack.c.l.b16 %v5076
        %v5125 = vunpack.c.l.b16 %v5077
        %v5126 = vunpack.c.l.b16 %v5078
        %v5127 = vunpack.c.l.b16 %v5079
        %v5128 = vunpack.c.l.b16 %v5080
        %v5129 = vunpack.c.l.b16 %v5081
        %v5130 = vunpack.c.l.b16 %v5082
        %v5131 = vunpack.c.l.b16 %v5083
        %v5132 = vunpack.c.l.b16 %v5084
        %v5133 = vunpack.c.l.b16 %v5085
        %v5134 = vunpack.c.l.b16 %v5086
        %v5135 = vunpack.c.l.b16 %v5087
        %v5136 = vunpack.c.l.b16 %v5088
        %v5137 = vpack.c.b16 %v5114, %v5113
        %v5138 = vpack.c.b16 %v5115, %v5115
        %v5139 = vpack.c.b16 %v5117, %v5116
        %v5140 = vpack.c.b16 %v5118, %v5118
        %v5141 = vpack.c.b16 %v5120, %v5119
        %v5142 = vpack.c.b16 %v5121, %v5121
        %v5143 = vpack.c.b16 %v5123, %v5122
        %v5144 = vpack.c.b16 %v5124, %v5124
        %v5145 = vpack.c.b16 %v5126, %v5125
        %v5146 = vpack.c.b16 %v5127, %v5127
        %v5147 = vpack.c.b16 %v5129, %v5128
        %v5148 = vpack.c.b16 %v5130, %v5130
        %v5149 = vpack.c.b16 %v5132, %v5131
        %v5150 = vpack.c.b16 %v5133, %v5133
        %v5151 = vpack.c.b16 %v5135, %v5134
        %v5152 = vpack.c.b16 %v5136, %v5136
        %v5153 = vrot.slane %v5137, 1
        %v5154 = vrot.slane %v5138, 1
        %v5155 = vsel %vm4248, %v5153, %v5154
        %v5156 = vrot.slane %v5139, 1
        %v5157 = vrot.slane %v5140, 1
        %v5158 = vsel %vm4248, %v5156, %v5157
        %v5159 = vrot.slane %v5141, 1
        %v5160 = vrot.slane %v5142, 1
        %v5161 = vsel %vm4248, %v5159, %v5160
        %v5162 = vrot.slane %v5143, 1
        %v5163 = vrot.slane %v5144, 1
        %v5164 = vsel %vm4248, %v5162, %v5163
        %v5165 = vrot.slane %v5145, 1
        %v5166 = vrot.slane %v5146, 1
        %v5167 = vsel %vm4248, %v5165, %v5166
        %v5168 = vrot.slane %v5147, 1
        %v5169 = vrot.slane %v5148, 1
        %v5170 = vsel %vm4248, %v5168, %v5169
        %v5171 = vrot.slane %v5149, 1
        %v5172 = vrot.slane %v5150, 1
        %v5173 = vsel %vm4248, %v5171, %v5172
        %v5174 = vrot.slane %v5151, 1
        %v5175 = vrot.slane %v5152, 1
        %v5176 = vsel %vm4248, %v5174, %v5175
        %5177 = vrot.lane.b32.xlu0 %v5155, 64
        %v5178 = vpop.permute.xlu0 %5177
        %5179 = vrot.lane.b32.xlu0 %v5158, 64
        %v5180 = vpop.permute.xlu0 %5179
        %5181 = vrot.lane.b32.xlu0 %v5161, 64
        %v5182 = vpop.permute.xlu0 %5181
        %5183 = vrot.lane.b32.xlu0 %v5164, 64
        %v5184 = vpop.permute.xlu0 %5183
        %5185 = vrot.lane.b32.xlu0 %v5167, 64
        %v5186 = vpop.permute.xlu0 %5185
        %5187 = vrot.lane.b32.xlu0 %v5170, 64
        %v5188 = vpop.permute.xlu0 %5187
        %5189 = vrot.lane.b32.xlu0 %v5173, 64
        %v5190 = vpop.permute.xlu0 %5189
        %5191 = vrot.lane.b32.xlu0 %v5176, 64
        %v5192 = vpop.permute.xlu0 %5191
        %vm5201 = vcmask 589312
        %5202 = vst.msk [vmem:[#allocation4] sm:$0xff] %vm5201, %v5178
        %5203 = vst.msk [vmem:[#allocation4 + $0x8] sm:$0xff] %vm5201, %v5180
        %5204 = vst.msk [vmem:[#allocation4 + $0x10] sm:$0xff] %vm5201, %v5182
        %5205 = vst.msk [vmem:[#allocation4 + $0x18] sm:$0xff] %vm5201, %v5184
        %5206 = vst.msk [vmem:[#allocation4 + $0x20] sm:$0xff] %vm5201, %v5186
        %5207 = vst.msk [vmem:[#allocation4 + $0x28] sm:$0xff] %vm5201, %v5188
        %5208 = vst.msk [vmem:[#allocation4 + $0x30] sm:$0xff] %vm5201, %v5190
        %5209 = vst.msk [vmem:[#allocation4 + $0x38] sm:$0xff] %vm5201, %v5192
        %v5210 = vld [vmem:[#allocation4] sm:$0xff]
        %v5211 = vld [vmem:[#allocation4 + $0x8] sm:$0xff]
        %v5212 = vld [vmem:[#allocation4 + $0x10] sm:$0xff]
        %v5213 = vld [vmem:[#allocation4 + $0x18] sm:$0xff]
        %v5214 = vld [vmem:[#allocation4 + $0x20] sm:$0xff]
        %v5215 = vld [vmem:[#allocation4 + $0x28] sm:$0xff]
        %v5216 = vld [vmem:[#allocation4 + $0x30] sm:$0xff]
        %v5217 = vld [vmem:[#allocation4 + $0x38] sm:$0xff]
        %v5218 = vld [vmem:[%s3] sm:$0xf]
        %v5219 = vld [vmem:[%s3 + $0x4] sm:$0xf]
        %v5220 = vld [vmem:[%s3 + $0x8] sm:$0xf]
        %v5221 = vld [vmem:[%s3 + $0xc] sm:$0xf]
        %v5222 = vld [vmem:[%s3 + $0x10] sm:$0xf]
        %v5223 = vld [vmem:[%s3 + $0x14] sm:$0xf]
        %v5224 = vld [vmem:[%s3 + $0x18] sm:$0xf]
        %v5225 = vld [vmem:[%s3 + $0x1c] sm:$0xf]
        %v5226 = vld [vmem:[%s3 + $0x20] sm:$0xf]
        %v5236 = vunpack.c.l.b16 %v5218
        %v5237 = vunpack.c.l.b16 %v5219
        %v5238 = vunpack.c.l.b16 %v5220
        %v5239 = vunpack.c.l.b16 %v5221
        %v5240 = vunpack.c.l.b16 %v5222
        %v5241 = vunpack.c.l.b16 %v5223
        %v5242 = vunpack.c.l.b16 %v5224
        %v5243 = vunpack.c.l.b16 %v5225
        %v5244 = vunpack.c.l.b16 %v5226
        %v5245 = vpack.c.b16 %v5237, %v5236
        %v5246 = vpack.c.b16 %v5239, %v5238
        %v5247 = vpack.c.b16 %v5241, %v5240
        %v5248 = vpack.c.b16 %v5243, %v5242
        %v5249 = vpack.c.b16 %v5244, %v5244
        %vm5254 = vcmask 588800
        %v5256 = vsel %vm5254, %v5210, 0
        %v5259 = vsel %vm5254, %v5211, 0
        %v5262 = vsel %vm5254, %v5212, 0
        %v5265 = vsel %vm5254, %v5213, 0
        %v5268 = vsel %vm5254, %v5214, 0
        %v5271 = vsel %vm5254, %v5215, 0
        %v5274 = vsel %vm5254, %v5216, 0
        %v5277 = vsel %vm5254, %v5217, 0
        %vm5279 = vcmask 1043456
        %v5281 = vsel %vm5279, %v5249, 0
        %5283 = vmatprep.subr.bf16.mxu0 0
        %5284 = vmatpush1.bf16.msra.mxu0 %v5245
        %5285 = vmatprep.subr.bf16.mxu0 0
        %5286 = vmatpush1.bf16.msra.mxu0 %v5246
        %5287 = vmatprep.subr.bf16.mxu0 0
        %5288 = vmatpush1.bf16.msra.mxu0 %v5247
        %5289 = vmatprep.subr.bf16.mxu0 0
        %5290 = vmatpush1.bf16.msra.mxu0 %v5248
        %5291 = vmatprep.subr.bf16.mxu0 0
        %5292 = vmatpush1.bf16.msra.mxu0 %v5281
        %5293 = vmatprep.subr.bf16.mxu0 0
        %5294 = vmatpush1.bf16.msra.mxu0 0
        %5295 = vmatprep.subr.bf16.mxu0 0
        %5296 = vmatpush1.bf16.msra.mxu0 0
        %5297 = vmatprep.subr.bf16.mxu0 0
        %5298 = vmatpush1.bf16.msra.mxu0 0
        %5299 = vmatprep.subr.bf16.mxu0 0
        %5300 = vmatpush1.bf16.msra.mxu0 0
        %5301 = vmatprep.subr.bf16.mxu0 0
        %5302 = vmatpush1.bf16.msra.mxu0 0
        %5303 = vmatprep.subr.bf16.mxu0 0
        %5304 = vmatpush1.bf16.msra.mxu0 0
        %5305 = vmatprep.subr.bf16.mxu0 0
        %5306 = vmatpush1.bf16.msra.mxu0 0
        %5307 = vmatprep.subr.bf16.mxu0 0
        %5308 = vmatpush1.bf16.msra.mxu0 0
        %5309 = vmatprep.subr.bf16.mxu0 0
        %5310 = vmatpush1.bf16.msra.mxu0 0
        %5311 = vmatprep.subr.bf16.mxu0 0
        %5312 = vmatpush1.bf16.msra.mxu0 0
        %5313 = vmatprep.subr.bf16.mxu0 0
        %5314 = vmatpush1.bf16.msra.mxu0 0
        %5315 = vmatprep.mubr.bf16.mxu0 0
        %5316 = vmatmul.mubr.bf16.gmra.mrb[0].mxu0 %v5256
        %v5317 = vpop.f32.mrb[0].mxu0
        %v5318 = vadd.f32 0.0, %v5317
        %v5319 = vpop.f32.mrb[0].mxu0
        %v5320 = vpop.f32.mrb[0].mxu0
        %v5321 = vadd.f32 0.0, %v5320
        %v5322 = vpop.f32.mrb[0].mxu0
        %5323 = vmatprep.mubr.bf16.mxu0 0
        %5324 = vmatmul.mubr.bf16.gmra.mrb[0].mxu0 %v5259
        %v5325 = vpop.f32.mrb[0].mxu0
        %v5326 = vadd.f32 0.0, %v5325
        %v5327 = vpop.f32.mrb[0].mxu0
        %v5328 = vpop.f32.mrb[0].mxu0
        %v5329 = vadd.f32 0.0, %v5328
        %v5330 = vpop.f32.mrb[0].mxu0
        %5331 = vmatprep.mubr.bf16.mxu0 0
        %5332 = vmatmul.mubr.bf16.gmra.mrb[0].mxu0 %v5262
        %v5333 = vpop.f32.mrb[0].mxu0
        %v5334 = vadd.f32 0.0, %v5333
        %v5335 = vpop.f32.mrb[0].mxu0
        %v5336 = vpop.f32.mrb[0].mxu0
        %v5337 = vadd.f32 0.0, %v5336
        %v5338 = vpop.f32.mrb[0].mxu0
        %5339 = vmatprep.mubr.bf16.mxu0 0
        %5340 = vmatmul.mubr.bf16.gmra.mrb[0].mxu0 %v5265
        %v5341 = vpop.f32.mrb[0].mxu0
        %v5342 = vadd.f32 0.0, %v5341
        %v5343 = vpop.f32.mrb[0].mxu0
        %v5344 = vpop.f32.mrb[0].mxu0
        %v5345 = vadd.f32 0.0, %v5344
        %v5346 = vpop.f32.mrb[0].mxu0
        %5347 = vmatprep.mubr.bf16.mxu0 0
        %5348 = vmatmul.mubr.bf16.gmra.mrb[0].mxu0 %v5268
        %v5349 = vpop.f32.mrb[0].mxu0
        %v5350 = vadd.f32 0.0, %v5349
        %v5351 = vpop.f32.mrb[0].mxu0
        %v5352 = vpop.f32.mrb[0].mxu0
        %v5353 = vadd.f32 0.0, %v5352
        %v5354 = vpop.f32.mrb[0].mxu0
        %5355 = vmatprep.mubr.bf16.mxu0 0
        %5356 = vmatmul.mubr.bf16.gmra.mrb[0].mxu0 %v5271
        %v5357 = vpop.f32.mrb[0].mxu0
        %v5358 = vadd.f32 0.0, %v5357
        %v5359 = vpop.f32.mrb[0].mxu0
        %v5360 = vpop.f32.mrb[0].mxu0
        %v5361 = vadd.f32 0.0, %v5360
        %v5362 = vpop.f32.mrb[0].mxu0
        %5363 = vmatprep.mubr.bf16.mxu0 0
        %5364 = vmatmul.mubr.bf16.gmra.mrb[0].mxu0 %v5274
        %v5365 = vpop.f32.mrb[0].mxu0
        %v5366 = vadd.f32 0.0, %v5365
        %v5367 = vpop.f32.mrb[0].mxu0
        %v5368 = vpop.f32.mrb[0].mxu0
        %v5369 = vadd.f32 0.0, %v5368
        %v5370 = vpop.f32.mrb[0].mxu0
        %5371 = vmatprep.mubr.bf16.mxu0 0
        %5372 = vmatmul.mubr.bf16.gmra.mrb[0].mxu0 %v5277
        %v5373 = vpop.f32.mrb[0].mxu0
        %v5374 = vadd.f32 0.0, %v5373
        %v5375 = vpop.f32.mrb[0].mxu0
        %v5376 = vpop.f32.mrb[0].mxu0
        %v5377 = vadd.f32 0.0, %v5376
        %v5378 = vpop.f32.mrb[0].mxu0
        %5379 = vdwg.mxu0
        %v5380 = vld [vmem:[%s4] sm:$0x1]
        %v5381 = vlaneseq
        %v5382 = vshrl.u32 %v5381, 7
        %v5383 = vsub.s32 0, %v5382
        %v5384 = vrot.slane %v5380, %v5383
        %v5385 = vmul.f32 %v5318, %v5384
        %v5386 = vmul.f32 %v5321, %v5384
        %v5387 = vmul.f32 %v5326, %v5384
        %v5388 = vmul.f32 %v5329, %v5384
        %v5389 = vmul.f32 %v5334, %v5384
        %v5390 = vmul.f32 %v5337, %v5384
        %v5391 = vmul.f32 %v5342, %v5384
        %v5392 = vmul.f32 %v5345, %v5384
        %v5393 = vmul.f32 %v5350, %v5384
        %v5394 = vmul.f32 %v5353, %v5384
        %v5395 = vmul.f32 %v5358, %v5384
        %v5396 = vmul.f32 %v5361, %v5384
        %v5397 = vmul.f32 %v5366, %v5384
        %v5398 = vmul.f32 %v5369, %v5384
        %v5399 = vmul.f32 %v5374, %v5384
        %v5400 = vmul.f32 %v5377, %v5384
        %v5401 = vld [vmem:[%s4 + $0x1] sm:$0x1]
        %v5402 = vlaneseq
        %v5403 = vshrl.u32 %v5402, 7
        %v5404 = vsub.s32 0, %v5403
        %v5405 = vrot.slane %v5401, %v5404
        %v5406 = vadd.f32 %v5385, %v5405
        %v5407 = vadd.f32 %v5386, %v5405
        %v5408 = vadd.f32 %v5387, %v5405
        %v5409 = vadd.f32 %v5388, %v5405
        %v5410 = vadd.f32 %v5389, %v5405
        %v5411 = vadd.f32 %v5390, %v5405
        %v5412 = vadd.f32 %v5391, %v5405
        %v5413 = vadd.f32 %v5392, %v5405
        %v5414 = vadd.f32 %v5393, %v5405
        %v5415 = vadd.f32 %v5394, %v5405
        %v5416 = vadd.f32 %v5395, %v5405
        %v5417 = vadd.f32 %v5396, %v5405
        %v5418 = vadd.f32 %v5397, %v5405
        %v5419 = vadd.f32 %v5398, %v5405
        %v5420 = vadd.f32 %v5399, %v5405
        %v5421 = vadd.f32 %v5400, %v5405
        %v5422 = vmax.f32 %v5406, 0.0
        %v5423 = vmax.f32 %v5407, 0.0
        %v5424 = vmax.f32 %v5408, 0.0
        %v5425 = vmax.f32 %v5409, 0.0
        %v5426 = vmax.f32 %v5410, 0.0
        %v5427 = vmax.f32 %v5411, 0.0
        %v5428 = vmax.f32 %v5412, 0.0
        %v5429 = vmax.f32 %v5413, 0.0
        %v5430 = vmax.f32 %v5414, 0.0
        %v5431 = vmax.f32 %v5415, 0.0
        %v5432 = vmax.f32 %v5416, 0.0
        %v5433 = vmax.f32 %v5417, 0.0
        %v5434 = vmax.f32 %v5418, 0.0
        %v5435 = vmax.f32 %v5419, 0.0
        %v5436 = vmax.f32 %v5420, 0.0
        %v5437 = vmax.f32 %v5421, 0.0
        %v5438 = vpack.c.bf16 %v5423, %v5422
        %v5439 = vpack.c.bf16 %v5425, %v5424
        %v5440 = vpack.c.bf16 %v5427, %v5426
        %v5441 = vpack.c.bf16 %v5429, %v5428
        %v5442 = vpack.c.bf16 %v5431, %v5430
        %v5443 = vpack.c.bf16 %v5433, %v5432
        %v5444 = vpack.c.bf16 %v5435, %v5434
        %v5445 = vpack.c.bf16 %v5437, %v5436
        %v5446 = vld [vmem:[%s5] sm:$0xf]
        %v5447 = vld [vmem:[%s6] sm:$0x1]
        %v5449 = vlaneseq
        %v5450 = vshrl.u32 %v5449, 7
        %v5451 = vsub.s32 0, %v5450
        %v5452 = vrot.slane %v5447, %v5451
        %v5455 = vsel %vm3933, %v5438, 0
        %v5458 = vsel %vm3933, %v5439, 0
        %v5461 = vsel %vm3933, %v5440, 0
        %v5464 = vsel %vm3933, %v5441, 0
        %v5467 = vsel %vm3933, %v5442, 0
        %v5470 = vsel %vm3933, %v5443, 0
        %v5473 = vsel %vm3933, %v5444, 0
        %v5476 = vsel %vm3933, %v5445, 0
        %v5479 = vsel %vm5279, %v5446, 0
        %5481 = vmatprep.subr.bf16.mxu0 0
        %5482 = vmatpush1.bf16.msra.mxu0 %v5479
        %5483 = vmatprep.subr.bf16.mxu0 0
        %5484 = vmatpush1.bf16.msra.mxu0 0
        %5485 = vmatprep.subr.bf16.mxu0 0
        %5486 = vmatpush1.bf16.msra.mxu0 0
        %5487 = vmatprep.subr.bf16.mxu0 0
        %5488 = vmatpush1.bf16.msra.mxu0 0
        %5489 = vmatprep.subr.bf16.mxu0 0
        %5490 = vmatpush1.bf16.msra.mxu0 0
        %5491 = vmatprep.subr.bf16.mxu0 0
        %5492 = vmatpush1.bf16.msra.mxu0 0
        %5493 = vmatprep.subr.bf16.mxu0 0
        %5494 = vmatpush1.bf16.msra.mxu0 0
        %5495 = vmatprep.subr.bf16.mxu0 0
        %5496 = vmatpush1.bf16.msra.mxu0 0
        %5497 = vmatprep.subr.bf16.mxu0 0
        %5498 = vmatpush1.bf16.msra.mxu0 0
        %5499 = vmatprep.subr.bf16.mxu0 0
        %5500 = vmatpush1.bf16.msra.mxu0 0
        %5501 = vmatprep.subr.bf16.mxu0 0
        %5502 = vmatpush1.bf16.msra.mxu0 0
        %5503 = vmatprep.subr.bf16.mxu0 0
        %5504 = vmatpush1.bf16.msra.mxu0 0
        %5505 = vmatprep.subr.bf16.mxu0 0
        %5506 = vmatpush1.bf16.msra.mxu0 0
        %5507 = vmatprep.subr.bf16.mxu0 0
        %5508 = vmatpush1.bf16.msra.mxu0 0
        %5509 = vmatprep.subr.bf16.mxu0 0
        %5510 = vmatpush1.bf16.msra.mxu0 0
        %5511 = vmatprep.subr.bf16.mxu0 0
        %5512 = vmatpush1.bf16.msra.mxu0 0
        %5513 = vmatprep.mubr.bf16.mxu0 0
        %5514 = vmatmul.mubr.bf16.gmra.mrb[0].mxu0 %v5455
        %v5515 = vpop.f32.mrb[0].mxu0
        %v5516 = vadd.f32 %v5452, %v5515
        %v5517 = vpop.f32.mrb[0].mxu0
        %v5518 = vpop.f32.mrb[0].mxu0
        %v5519 = vadd.f32 %v5452, %v5518
        %v5520 = vpop.f32.mrb[0].mxu0
        %5521 = vmatprep.mubr.bf16.mxu0 0
        %5522 = vmatmul.mubr.bf16.gmra.mrb[0].mxu0 %v5458
        %v5523 = vpop.f32.mrb[0].mxu0
        %v5524 = vadd.f32 %v5452, %v5523
        %v5525 = vpop.f32.mrb[0].mxu0
        %v5526 = vpop.f32.mrb[0].mxu0
        %v5527 = vadd.f32 %v5452, %v5526
        %v5528 = vpop.f32.mrb[0].mxu0
        %5529 = vmatprep.mubr.bf16.mxu0 0
        %5530 = vmatmul.mubr.bf16.gmra.mrb[0].mxu0 %v5461
        %v5531 = vpop.f32.mrb[0].mxu0
        %v5532 = vadd.f32 %v5452, %v5531
        %v5533 = vpop.f32.mrb[0].mxu0
        %v5534 = vpop.f32.mrb[0].mxu0
        %v5535 = vadd.f32 %v5452, %v5534
        %v5536 = vpop.f32.mrb[0].mxu0
        %5537 = vmatprep.mubr.bf16.mxu0 0
        %5538 = vmatmul.mubr.bf16.gmra.mrb[0].mxu0 %v5464
        %v5539 = vpop.f32.mrb[0].mxu0
        %v5540 = vadd.f32 %v5452, %v5539
        %v5541 = vpop.f32.mrb[0].mxu0
        %v5542 = vpop.f32.mrb[0].mxu0
        %v5543 = vadd.f32 %v5452, %v5542
        %v5544 = vpop.f32.mrb[0].mxu0
        %5545 = vmatprep.mubr.bf16.mxu0 0
        %5546 = vmatmul.mubr.bf16.gmra.mrb[0].mxu0 %v5467
        %v5547 = vpop.f32.mrb[0].mxu0
        %v5548 = vadd.f32 %v5452, %v5547
        %v5549 = vpop.f32.mrb[0].mxu0
        %v5550 = vpop.f32.mrb[0].mxu0
        %v5551 = vadd.f32 %v5452, %v5550
        %v5552 = vpop.f32.mrb[0].mxu0
        %5553 = vmatprep.mubr.bf16.mxu0 0
        %5554 = vmatmul.mubr.bf16.gmra.mrb[0].mxu0 %v5470
        %v5555 = vpop.f32.mrb[0].mxu0
        %v5556 = vadd.f32 %v5452, %v5555
        %v5557 = vpop.f32.mrb[0].mxu0
        %v5558 = vpop.f32.mrb[0].mxu0
        %v5559 = vadd.f32 %v5452, %v5558
        %v5560 = vpop.f32.mrb[0].mxu0
        %5561 = vmatprep.mubr.bf16.mxu0 0
        %5562 = vmatmul.mubr.bf16.gmra.mrb[0].mxu0 %v5473
        %v5563 = vpop.f32.mrb[0].mxu0
        %v5564 = vadd.f32 %v5452, %v5563
        %v5565 = vpop.f32.mrb[0].mxu0
        %v5566 = vpop.f32.mrb[0].mxu0
        %v5567 = vadd.f32 %v5452, %v5566
        %v5568 = vpop.f32.mrb[0].mxu0
        %5569 = vmatprep.mubr.bf16.mxu0 0
        %5570 = vmatmul.mubr.bf16.gmra.mrb[0].mxu0 %v5476
        %v5571 = vpop.f32.mrb[0].mxu0
        %v5572 = vadd.f32 %v5452, %v5571
        %v5573 = vpop.f32.mrb[0].mxu0
        %v5574 = vpop.f32.mrb[0].mxu0
        %v5575 = vadd.f32 %v5452, %v5574
        %v5576 = vpop.f32.mrb[0].mxu0
        %5577 = vdwg.mxu0
        %v5578 = vpack.c.bf16 %v5519, %v5516
        %v5579 = vpack.c.bf16 %v5527, %v5524
        %v5580 = vpack.c.bf16 %v5535, %v5532
        %v5581 = vpack.c.bf16 %v5543, %v5540
        %v5582 = vpack.c.bf16 %v5551, %v5548
        %v5583 = vpack.c.bf16 %v5559, %v5556
        %v5584 = vpack.c.bf16 %v5567, %v5564
        %v5585 = vpack.c.bf16 %v5575, %v5572
        %v5594 = vunpack.c.l.b16 %v5578
        %v5595 = vunpack.c.h.b16 %v5578
        %v5596 = vunpack.c.l.b16 %v5579
        %v5597 = vunpack.c.h.b16 %v5579
        %v5598 = vunpack.c.l.b16 %v5580
        %v5599 = vunpack.c.h.b16 %v5580
        %v5600 = vunpack.c.l.b16 %v5581
        %v5601 = vunpack.c.h.b16 %v5581
        %v5602 = vunpack.c.l.b16 %v5582
        %v5603 = vunpack.c.h.b16 %v5582
        %v5604 = vunpack.c.l.b16 %v5583
        %v5605 = vunpack.c.h.b16 %v5583
        %v5606 = vunpack.c.l.b16 %v5584
        %v5607 = vunpack.c.h.b16 %v5584
        %v5608 = vunpack.c.l.b16 %v5585
        %v5609 = vunpack.c.h.b16 %v5585
        %v5610 = vpack.c.b16 %v5594, %v5594
        %v5611 = vpack.c.b16 %v5595, %v5595
        %v5612 = vpack.c.b16 %v5596, %v5596
        %v5613 = vpack.c.b16 %v5597, %v5597
        %v5614 = vpack.c.b16 %v5598, %v5598
        %v5615 = vpack.c.b16 %v5599, %v5599
        %v5616 = vpack.c.b16 %v5600, %v5600
        %v5617 = vpack.c.b16 %v5601, %v5601
        %v5618 = vpack.c.b16 %v5602, %v5602
        %v5619 = vpack.c.b16 %v5603, %v5603
        %v5620 = vpack.c.b16 %v5604, %v5604
        %v5621 = vpack.c.b16 %v5605, %v5605
        %v5622 = vpack.c.b16 %v5606, %v5606
        %v5623 = vpack.c.b16 %v5607, %v5607
        %v5624 = vpack.c.b16 %v5608, %v5608
        %v5625 = vpack.c.b16 %v5609, %v5609
        %vm5642 = vcmask 125952
        %5643 = vst.msk [vmem:[%s285] sm:$0xf] %vm5642, %v5610
        %5644 = vst.msk [vmem:[%s285 + $0x4] sm:$0xf] %vm5642, %v5611
        %5645 = vst.msk [vmem:[%s285 + $0x10] sm:$0xf] %vm5642, %v5612
        %5646 = vst.msk [vmem:[%s285 + $0x14] sm:$0xf] %vm5642, %v5613
        %5647 = vst.msk [vmem:[%s285 + $0x20] sm:$0xf] %vm5642, %v5614
        %5648 = vst.msk [vmem:[%s285 + $0x24] sm:$0xf] %vm5642, %v5615
        %5649 = vst.msk [vmem:[%s285 + $0x30] sm:$0xf] %vm5642, %v5616
        %5650 = vst.msk [vmem:[%s285 + $0x34] sm:$0xf] %vm5642, %v5617
        %5651 = vst.msk [vmem:[%s285 + $0x40] sm:$0xf] %vm5642, %v5618
        %5652 = vst.msk [vmem:[%s285 + $0x44] sm:$0xf] %vm5642, %v5619
        %5653 = vst.msk [vmem:[%s285 + $0x50] sm:$0xf] %vm5642, %v5620
        %5654 = vst.msk [vmem:[%s285 + $0x54] sm:$0xf] %vm5642, %v5621
        %5655 = vst.msk [vmem:[%s285 + $0x60] sm:$0xf] %vm5642, %v5622
        %5656 = vst.msk [vmem:[%s285 + $0x64] sm:$0xf] %vm5642, %v5623
        %5657 = vst.msk [vmem:[%s285 + $0x70] sm:$0xf] %vm5642, %v5624
        %5658 = vst.msk [vmem:[%s285 + $0x74] sm:$0xf] %vm5642, %v5625
        %5659 = vrot.lane.b32.xlu0 %v5610, 112
        %v5660 = vpop.permute.xlu0 %5659
        %5661 = vrot.lane.b32.xlu0 %v5611, 112
        %v5662 = vpop.permute.xlu0 %5661
        %5663 = vrot.lane.b32.xlu0 %v5612, 112
        %v5664 = vpop.permute.xlu0 %5663
        %5665 = vrot.lane.b32.xlu0 %v5613, 112
        %v5666 = vpop.permute.xlu0 %5665
        %5667 = vrot.lane.b32.xlu0 %v5614, 112
        %v5668 = vpop.permute.xlu0 %5667
        %5669 = vrot.lane.b32.xlu0 %v5615, 112
        %v5670 = vpop.permute.xlu0 %5669
        %5671 = vrot.lane.b32.xlu0 %v5616, 112
        %v5672 = vpop.permute.xlu0 %5671
        %5673 = vrot.lane.b32.xlu0 %v5617, 112
        %v5674 = vpop.permute.xlu0 %5673
        %5675 = vrot.lane.b32.xlu0 %v5618, 112
        %v5676 = vpop.permute.xlu0 %5675
        %5677 = vrot.lane.b32.xlu0 %v5619, 112
        %v5678 = vpop.permute.xlu0 %5677
        %5679 = vrot.lane.b32.xlu0 %v5620, 112
        %v5680 = vpop.permute.xlu0 %5679
        %5681 = vrot.lane.b32.xlu0 %v5621, 112
        %v5682 = vpop.permute.xlu0 %5681
        %5683 = vrot.lane.b32.xlu0 %v5622, 112
        %v5684 = vpop.permute.xlu0 %5683
        %5685 = vrot.lane.b32.xlu0 %v5623, 112
        %v5686 = vpop.permute.xlu0 %5685
        %5687 = vrot.lane.b32.xlu0 %v5624, 112
        %v5688 = vpop.permute.xlu0 %5687
        %5689 = vrot.lane.b32.xlu0 %v5625, 112
        %v5690 = vpop.permute.xlu0 %5689
        %s5707 = scalar_lea.vmem %s285, 8 [#allocation5]
        %5708 = vst.msk [vmem:[%s5707] sm:$0xf] %vm5642, %v5660
        %5709 = vst.msk [vmem:[%s5707 + $0x4] sm:$0xf] %vm5642, %v5662
        %5710 = vst.msk [vmem:[%s5707 + $0x10] sm:$0xf] %vm5642, %v5664
        %5711 = vst.msk [vmem:[%s5707 + $0x14] sm:$0xf] %vm5642, %v5666
        %5712 = vst.msk [vmem:[%s5707 + $0x20] sm:$0xf] %vm5642, %v5668
        %5713 = vst.msk [vmem:[%s5707 + $0x24] sm:$0xf] %vm5642, %v5670
        %5714 = vst.msk [vmem:[%s5707 + $0x30] sm:$0xf] %vm5642, %v5672
        %5715 = vst.msk [vmem:[%s5707 + $0x34] sm:$0xf] %vm5642, %v5674
        %5716 = vst.msk [vmem:[%s5707 + $0x40] sm:$0xf] %vm5642, %v5676
        %5717 = vst.msk [vmem:[%s5707 + $0x44] sm:$0xf] %vm5642, %v5678
        %5718 = vst.msk [vmem:[%s5707 + $0x50] sm:$0xf] %vm5642, %v5680
        %5719 = vst.msk [vmem:[%s5707 + $0x54] sm:$0xf] %vm5642, %v5682
        %5720 = vst.msk [vmem:[%s5707 + $0x60] sm:$0xf] %vm5642, %v5684
        %5721 = vst.msk [vmem:[%s5707 + $0x64] sm:$0xf] %vm5642, %v5686
        %5722 = vst.msk [vmem:[%s5707 + $0x70] sm:$0xf] %vm5642, %v5688
        %5723 = vst.msk [vmem:[%s5707 + $0x74] sm:$0xf] %vm5642, %v5690
        %s5724 = sand.u32 %s195, 1
        %s5725 = scalar_lea.sflag [#allocation6], %s5724
        %s5726 = sand.u32 %s195, 1
        %s5727 = smul.addr %s5726, 128
        %s5728 = scalar_lea.vmem [#allocation5], %s5727
        // Predicated region
        $region49: #{tpu_custom_call.1} parent=47 // pred_check
          %p5729 = pneg %p205
        $region50: #{tpu_custom_call.1} parent=47 // pred_check_branch
          %5731 = sbr.rel (%p5729) target = $region52
        $region51: #{tpu_custom_call.1} parent=47 // pred_region
          %s5732 = smul.u32 8, %s26
          %s5734 = ssub.s32 2048, 2048
          %5735 = vsyncadd %s5725, %s5734
          %s5736 = smul.addr %s5732, 4
          %s5737 = smul.addr %s25, 64
          %s5738 = sadd.s32 %s5736, %s5737
          %s5739 = smul.addr %s5738, 64
          %s5740 = scalar_lea.hbm %s7, %s5739
          %s5741 = sshll.u32 %s5728, 4
          %s5742 = int_to_ptr.vmem [resolvable:$true] %s5741
          %5747 = dma.vmem_to_hbm [thread:$0]  %s5742, 2048, %s5740, %s5725, 64, 64, 4
        $region52: #{tpu_custom_call.1} parent=47 // pred_fallthru
          _
      $region48: #{tpu_custom_call.1} parent=5 // pred_fallthru
        _
      %p5748 = scmp.le.s32.totalorder 2, %s16
      // Predicated region
      $region53: #{tpu_custom_call.1} parent=5 // pred_check
        %p5749 = pneg %p5748
      $region54: #{tpu_custom_call.1} parent=5 // pred_check_branch
        %5751 = sbr.rel (%p5749) target = $region56
      $region55: #{tpu_custom_call.1} parent=5 // pred_region
        %s5752 = ssub.s32 %s16, 2
        // Predicated region
        $region57: #{tpu_custom_call.1} parent=55 // pred_check
          %p5753 = pneg %p211
        $region58: #{tpu_custom_call.1} parent=55 // pred_check_branch
          %5755 = sbr.rel (%p5753) target = $region60
        $region59: #{tpu_custom_call.1} parent=55 // pred_region
          %s5756 = sand.u32 %s196, 1
          %s5757 = scalar_lea.sflag [#allocation6], %s5756
          %s5758 = sand.u32 %s196, 1
          %s5759 = smul.addr %s5758, 128
          %s5760 = scalar_lea.vmem [#allocation5], %s5759
          %5761 = dma.done %s5757, 2048
        $region60: #{tpu_custom_call.1} parent=55 // pred_fallthru
          _
      $region56: #{tpu_custom_call.1} parent=5 // pred_fallthru
        _
    $region6: #{tpu_custom_call.1} parent=1 // loop_footer
      %s20 = sadd.s32 1, %s16
    $region7: #{tpu_custom_call.1} parent=1 // loop_footer_branch
      %15 = sbr.rel target = $region3
    $region8: #{tpu_custom_call.1} parent=1 // loop_exit
      _
    %5762 = vsyncpa [#allocation6], 1
    %s5763 = scalar_lea.sflag [#allocation6], 1
    %5764 = vsyncpa %s5763, 1

</llo_original>
